<compile_context>
chip_gen: v7x
topology: tpu7x:2x2x1
jax: 0.10.0
libtpu: 0.0.40
codegen_flags: <defaults>
</compile_context>

<pallas_src>
import functools

import jax
import jax.numpy as jnp
import numpy as np
from jax.experimental import pallas as pl
from jax.experimental.pallas import tpu as pltpu


_LANES = 128
_VMEM_TILE_BUDGET = 24 << 20      # target per-instance working set
_VMEM_CEILING = 48 << 20          # stays below v7x's 64 MiB physical per-TC


# ------------------------- VMEM estimates & tiling --------------------------

def _attn_vmem_bytes(C, N, tq):
    """Estimated VMEM for one self-attention kernel instance (double-buffered
    inputs/outputs + scratch + live f32 (tq, N) intermediates)."""
    c_pad = max(C, _LANES)
    est = 2 * tq * c_pad * 2          # f(z)^T query tiles (bf16)
    est += 2 * C * N * 2              # full g(z) keys (bf16), once per batch
    est += 2 * 8 * N * 4              # (1, N) output block (sublane padded)
    est += 8 * N * 4                  # (1, N) accumulator scratch
    est += 3 * tq * N * 4             # energy / exp / prob f32 slabs
    return est


def _fused_vmem_bytes(C, N, tq, tk):
    """Estimated VMEM for one fused-correlation kernel instance."""
    c_pad = max(C, _LANES)
    est = 2 * C * tq * 2              # f tile (bf16)
    est += 2 * tk * c_pad * 2         # g^T tile (bf16)
    est += 2 * C * tk * 2             # h tile (bf16)
    est += 2 * C * tq * 4             # x skip tile (f32)
    est += 2 * C * tq * 4             # out tile (f32)
    est += 2 * (8 * tq * 4 + tk * _LANES * 4)        # masks (padded)
    est += 2 * (C * c_pad * 2 + C * _LANES * 4)      # wo, bo
    est += C * tq * 4 + 2 * 8 * tq * 4               # acc / m / l scratch
    est += 3 * tk * tq * 4            # energy_t / e_t / cmask slabs
    return est


def _pick_attn_tile(C, N):
    # TODO(synk): for very large N the full (C, N) key block may not fit; the
    # self-attention kernel would need a two-pass / key-tiled structure
    # (column sums of softmax need the final per-row denominators).
    for tq in (512, 256, 128):
        if N % tq == 0 and _attn_vmem_bytes(C, N, tq) <= _VMEM_TILE_BUDGET:
            return tq
    if N % _LANES == 0:
        return _LANES
    return N                          # tiny feature maps: single full tile


def _pick_fused_tiles(C, N):
    cands = [t for t in (512, 256, 128) if N % t == 0]
    if not cands:
        return N, N                   # tiny feature maps: single full tile
    for tq in cands:                  # prefer large tq (amortize grid-step cost)
        for tk in cands:
            if _fused_vmem_bytes(C, N, tq, tk) <= _VMEM_TILE_BUDGET:
                return tq, tk
    return cands[-1], cands[-1]


def _vmem_limit(estimate):
    """Real estimate + headroom for compiler-internal scratch, capped so we
    never request more scoped VMEM than every generation can physically hold."""
    return int(min(_VMEM_CEILING, max(estimate * 3 // 2 + (2 << 20), 16 << 20)))


# ------------------------------ Pallas kernels ------------------------------

def _self_attn_kernel(fzT_ref, gz_ref, attn_ref, acc_sc):
    """Correlation-style self-attention; only the (1, N) attention row is
    produced (the (N, N) correlation never leaves VMEM).

    Per grid step (b, q):
      fzT_ref : (tq, C) bf16  f(z)^T query tile (precomputed 1x1 conv)
      gz_ref  : (C, N)  bf16  g(z) full keys (block index changes only with b,
                              so it is DMA'd once per batch element)
      attn_ref: (1, N)  f32   attention[j] = mean_i softmax(energy)[i, j]
      acc_sc  : (1, N)  f32   running column sum over query tiles
    """
    q = pl.program_id(1)

    @pl.when(q == 0)
    def _():
        acc_sc[...] = jnp.zeros_like(acc_sc)

    # canonical (tq, C) @ (C, N) MXU matmul; f32 accumulation
    energy = jnp.dot(fzT_ref[...], gz_ref[...],
                     preferred_element_type=jnp.float32)            # (tq, N)
    m = jnp.max(energy, axis=-1, keepdims=True)
    e = jnp.exp(energy - m)
    # Exact divide (not pl.reciprocal(approx=True)): this attention feeds an
    # argsort-based top-7.5% mask, so borderline ranks must not flip.
    p = e / jnp.sum(e, axis=-1, keepdims=True)
    acc_sc[...] += jnp.sum(p, axis=0, keepdims=True)                # (1, N)

    @pl.when(q == pl.num_programs(1) - 1)
    def _():
        attn_ref[...] = acc_sc[...] * (1.0 / gz_ref.shape[1])


def _fused_corr_kernel(f_ref, gT_ref, h_ref, mx_ref, myT_ref, x_ref,
                       wo_ref, bo_ref, out_ref, m_sc, l_sc, acc_sc):
    """feat_corr + corr_mask + L1-normalize + residual + out_conv + skip-add,
    key-tiled flash-attention style.  Keys sit on sublanes / queries on lanes
    so every matmul is canonical and the per-query statistics come out as
    (1, tq) rows that broadcast over the (C, tq) accumulator with no relayout.

    Per grid step (b, q, k):
      f_ref  : (C, tq) bf16  f(AdaIN(x)) query tile
      gT_ref : (tk, C) bf16  g(AdaIN(y))^T key tile
      h_ref  : (C, tk) bf16  h(y) key tile
      mx_ref : (1, tq) f32   attn-mask(x) for these queries (exact 0/1)
      myT_ref: (tk, 1) f32   attn-mask(y) for these keys    (exact 0/1)
      x_ref  : (C, tq) f32   skip connection
      wo/bo  : (C, C) bf16 / (C, 1) f32  out_conv
      out_ref: (C, tq) f32   x + out_conv(h(y) @ corr^T)
      m_sc   : (1, tq) f32   running max of energy over keys
      l_sc   : (1, tq) f32   running sum of masked exp (= L1 denominator)
      acc_sc : (C, tq) f32   running un-normalized residual
    """
    k = pl.program_id(2)

    @pl.when(k == 0)
    def _():
        m_sc[...] = jnp.full_like(m_sc, -jnp.inf)
        l_sc[...] = jnp.zeros_like(l_sc)
        acc_sc[...] = jnp.zeros_like(acc_sc)

    # energy^T[j, i] = <g(AdaIN(y))[:, j], f(AdaIN(x))[:, i]>   (canonical MXU)
    energy_t = jnp.dot(gT_ref[...], f_ref[...],
                       preferred_element_type=jnp.float32)          # (tk, tq)
    m_new = jnp.maximum(m_sc[...], jnp.max(energy_t, axis=0, keepdims=True))
    alpha = jnp.exp(m_sc[...] - m_new)                              # (1, tq)

    # corr_mask folded multiplicatively into the exp numerator.  The plain
    # softmax denominator cancels in F.normalize(p=1), so this equals
    # softmax -> mask -> L1-normalize exactly, including the
    # all-keys-masked query -> all-zero row case.
    cmask = myT_ref[...] == mx_ref[...]                             # (tk, tq)
    e_t = jnp.where(cmask, jnp.exp(energy_t - m_new), 0.0)          # (tk, tq)

    l_sc[...] = alpha * l_sc[...] + jnp.sum(e_t, axis=0, keepdims=True)
    acc_sc[...] = alpha * acc_sc[...] + jnp.dot(
        h_ref[...], e_t.astype(jnp.bfloat16),
        preferred_element_type=jnp.float32)                         # (C, tq)
    m_sc[...] = m_new

    @pl.when(k == pl.num_programs(2) - 1)
    def _():
        # F.normalize(p=1, dim=-1, eps=1e-12): fully-masked queries -> 0 row.
        inv_l = pl.reciprocal(jnp.maximum(l_sc[...], 1e-12), approx=True)
        resid = (acc_sc[...] * inv_l).astype(jnp.bfloat16)          # (C, tq)
        # out could be emitted bf16 if downstream tolerates it (halves
        # writeback traffic); kept f32 here for fidelity.
        out_ref[...] = (x_ref[...]
                        + jnp.dot(wo_ref[...], resid,
                                  preferred_element_type=jnp.float32)
                        + bo_ref[...])


# ------------------------------ Pallas wrappers ------------------------------

def self_attention_pallas(fzT, gz, *, block_q=None):
    """fzT: (B2, N, C) bf16, gz: (B2, C, N) bf16 -> attention (B2, 1, N) f32."""
    B2, N, C = fzT.shape
    tq = block_q if block_q is not None else _pick_attn_tile(C, N)
    assert N % tq == 0, (N, tq)
    return pl.pallas_call(
        _self_attn_kernel,
        out_shape=jax.ShapeDtypeStruct((B2, 1, N), jnp.float32),
        grid=(B2, N // tq),
        in_specs=[
            pl.BlockSpec((None, tq, C), lambda b, q: (b, q, 0)),   # f(z)^T tile
            # Full keys: block index only changes with b, so fetched once per
            # batch.  (pipeline_mode=pl.Buffered(1) would reclaim the second
            # buffer on VMEM-tight chips at the cost of an exposed per-batch
            # DMA.)
            pl.BlockSpec((None, C, N), lambda b, q: (b, 0, 0)),
        ],
        out_specs=pl.BlockSpec((None, 1, N), lambda b, q: (b, 0, 0)),
        scratch_shapes=[pltpu.VMEM((1, N), jnp.float32)],
        compiler_params=pltpu.CompilerParams(
            # q is a genuine reduction here (mean over query rows) so it stays
            # "arbitrary"; the merged x/y batch axis (2B) is parallel and
            # feeds both v7x TensorCores.
            dimension_semantics=("parallel", "arbitrary"),
            vmem_limit_bytes=_vmem_limit(_attn_vmem_bytes(C, N, tq))),
    )(fzT, gz)


def fused_corr_residual_pallas(x_cn, f_cn, gT_nc, h_cn, mask_x, mask_y_col,
                               wo, bo, *, block_q=None, block_k=None):
    """Returns x + out_conv(h(y) @ masked_normalized_corr^T) as (B, C, N) f32."""
    B, C, N = x_cn.shape
    tq0, tk0 = _pick_fused_tiles(C, N)
    tq = block_q if block_q is not None else tq0
    tk = block_k if block_k is not None else tk0
    assert N % tq == 0 and N % tk == 0, (N, tq, tk)
    return pl.pallas_call(
        _fused_corr_kernel,
        out_shape=jax.ShapeDtypeStruct((B, C, N), jnp.float32),
        grid=(B, N // tq, N // tk),
        in_specs=[
            pl.BlockSpec((None, C, tq), lambda b, q, k: (b, 0, q)),   # f
            pl.BlockSpec((None, tk, C), lambda b, q, k: (b, k, 0)),   # g^T
            pl.BlockSpec((None, C, tk), lambda b, q, k: (b, 0, k)),   # h
            pl.BlockSpec((None, 1, tq), lambda b, q, k: (b, 0, q)),   # mask_x
            pl.BlockSpec((None, tk, 1), lambda b, q, k: (b, k, 0)),   # mask_y
            pl.BlockSpec((None, C, tq), lambda b, q, k: (b, 0, q)),   # x skip
            pl.BlockSpec((C, C), lambda b, q, k: (0, 0)),             # wo
            pl.BlockSpec((C, 1), lambda b, q, k: (0, 0)),             # bo
        ],
        out_specs=pl.BlockSpec((None, C, tq), lambda b, q, k: (b, 0, q)),
        scratch_shapes=[pltpu.VMEM((1, tq), jnp.float32),   # running max
                        pltpu.VMEM((1, tq), jnp.float32),   # L1 denominator
                        pltpu.VMEM((C, tq), jnp.float32)],  # residual acc
        compiler_params=pltpu.CompilerParams(
            # batch and query axes are data independent (convs precomputed) ->
            # parallel (v7x megacore); key axis is the online reduction.
            dimension_semantics=("parallel", "parallel", "arbitrary"),
            vmem_limit_bytes=_vmem_limit(_fused_vmem_bytes(C, N, tq, tk))),
    )(f_cn, gT_nc, h_cn, mask_x, mask_y_col, x_cn,
      wo.astype(jnp.bfloat16), bo)


# ------------------------------ plain-JAX glue ------------------------------

def adain_normalize(x, eps=1e-5):
    """utils.project_features(x, 'AdaIN'): per-sample per-channel instance norm."""
    mean = jnp.mean(x, axis=(2, 3), keepdims=True)
    var = jnp.var(x, axis=(2, 3), keepdims=True)
    return (x - mean) / jnp.sqrt(var + eps)


def zca_normalize(x, eps=1e-5):
    """utils.project_features(x, 'ZCA'): per-sample ZCA whitening over channels."""
    # TODO(synk): eigendecomposition (eigh) has no Pallas equivalent; kept in JAX.
    B, C, H, W = x.shape
    f = x.reshape(B, C, H * W)
    mean = jnp.mean(f, axis=2, keepdims=True)
    fc = f - mean
    cov = jnp.matmul(fc, jnp.swapaxes(fc, 1, 2)) / (H * W - 1)
    cov = cov + eps * jnp.eye(C, dtype=x.dtype)[None]
    w, v = jnp.linalg.eigh(cov)
    inv_sqrt = jnp.matmul(v * (1.0 / jnp.sqrt(jnp.maximum(w, 1e-8)))[:, None, :],
                          jnp.swapaxes(v, 1, 2))
    return jnp.matmul(inv_sqrt, fc).reshape(B, C, H, W)


def attn_mask(atten):
    """Reproduces SAVANet.attn_mask including the PyTorch advanced-indexing
    quirk of `attn[:, :, indices] = 0`: a position is zeroed for ALL batch
    elements if it appears in the bottom-92.5% index set of ANY batch element.
    Mask values are exact 0.0/1.0 f32 (required by the == in corr_mask)."""
    # TODO(synk): topk/scatter kept in plain JAX (no clean Pallas sort on TPU).
    B, C1, N = atten.shape
    k = int(N * 0.925)
    idx = jnp.argsort(atten, axis=2)[:, :, :k]               # k smallest
    zeroed = jnp.zeros((N,), dtype=bool).at[idx.reshape(-1)].set(True)
    mask = jnp.where(zeroed[None, None, :], 0.0, 1.0).astype(jnp.float32)
    return jnp.broadcast_to(mask, (B, C1, N))


def _conv1x1_cn(w, b, x_cn):
    """1x1 conv (W (out,in), b (out,1)) on channels-first (B, C, N) -> bf16."""
    return (jnp.einsum('oc,bcn->bon', w, x_cn) + b[None]).astype(jnp.bfloat16)


def _conv1x1_nc(w, b, x_cn):
    """Same conv, emitted transposed as (B, N, C) bf16 (keys on sublanes)."""
    return (jnp.einsum('bcn,oc->bno', x_cn, w)
            + b[:, 0][None, None, :]).astype(jnp.bfloat16)


# ------------------------------ parameters ------------------------------

def _init_conv1x1(key, c_in, c_out):
    kw, kb = jax.random.split(key)
    bound = 1.0 / (c_in ** 0.5)
    # Conv2d(k=1) weight stored as (out, in); bias as (out, 1).
    w = jax.random.uniform(kw, (c_out, c_in), jnp.float32, -bound, bound)
    b = jax.random.uniform(kb, (c_out, 1), jnp.float32, -bound, bound)
    return w, b


def init_savanet_params(key, in_channel):
    keys = jax.random.split(key, 6)
    return {
        'corr_f': _init_conv1x1(keys[0], in_channel, in_channel),  # feat_corr.f
        'corr_g': _init_conv1x1(keys[1], in_channel, in_channel),  # feat_corr.g
        'sa_f':   _init_conv1x1(keys[2], in_channel, in_channel),  # self_attn.f
        'sa_g':   _init_conv1x1(keys[3], in_channel, in_channel),  # self_attn.g
        'h':      _init_conv1x1(keys[4], in_channel, in_channel),  # SAVANet.h
        'out':    _init_conv1x1(keys[5], in_channel, in_channel),  # SAVANet.out_conv
    }


# ------------------------------ forward ------------------------------

@functools.partial(jax.jit, static_argnames=("block_q", "block_k"))
def savanet_forward(params, x, y, *, block_q=None, block_k=None):
    """x, y: (B, C, H, W).  Returns (output (B,C,H,W), atten_x, atten_y (B,1,N))."""
    B, C, H, W = x.shape
    N = H * W
    flat = lambda t: t.reshape(B, C, N)     # channels-first flatten: no transpose

    x_adain, y_adain = adain_normalize(x), adain_normalize(y)
    x_zca, y_zca = zca_normalize(x), zca_normalize(y)

    # --- self-attention maps; x and y stacked into a single pallas_call -----
    z = jnp.concatenate([flat(x_zca), flat(y_zca)], axis=0)        # (2B, C, N)
    fzT = _conv1x1_nc(*params['sa_f'], z)                          # (2B, N, C)
    gz = _conv1x1_cn(*params['sa_g'], z)                           # (2B, C, N)
    attn = self_attention_pallas(fzT, gz, block_q=block_q)         # (2B, 1, N)
    atten_x, atten_y = attn[:B], attn[B:]

    # filter=False default path (attention_filter skipped)
    atten_x_mask = attn_mask(atten_x)                              # (B,1,N) 0/1
    atten_y_mask = attn_mask(atten_y)

    # --- fused correlation / residual path (convs precomputed in bf16) ------
    f_cn = _conv1x1_cn(*params['corr_f'], flat(x_adain))           # (B, C, N)
    gT_nc = _conv1x1_nc(*params['corr_g'], flat(y_adain))          # (B, N, C)
    h_cn = _conv1x1_cn(*params['h'], flat(y))                      # (B, C, N)
    # (B,1,N) -> (B,N,1) is a pure-metadata reshape (same linear layout).
    mask_y_col = jnp.reshape(atten_y_mask, (B, N, 1))

    out_cn = fused_corr_residual_pallas(
        flat(x), f_cn, gT_nc, h_cn, atten_x_mask, mask_y_col,
        *params['out'], block_q=block_q, block_k=block_k)

    return out_cn.reshape(B, C, H, W), atten_x, atten_y


# ------------------------------ pure-JAX reference ------------------------------

def _reference_attention(params, x, y):
    """f32 reference on the same bf16-quantized conv activations the kernels see."""
    B, C, H, W = x.shape
    N = H * W
    z = jnp.concatenate([zca_normalize(x).reshape(B, C, N),
                         zca_normalize(y).reshape(B, C, N)], axis=0)
    fzT = _conv1x1_nc(*params['sa_f'], z).astype(jnp.float32)
    gz = _conv1x1_cn(*params['sa_g'], z).astype(jnp.float32)
    energy = jnp.einsum('bnc,bcm->bnm', fzT, gz)
    p = jax.nn.softmax(energy, axis=-1)
    attn = jnp.mean(p, axis=1, keepdims=True)
    return attn[:B], attn[B:]


def _reference_output(params, x, y, atten_x, atten_y):
    """Reference for the fused stage, consuming the kernel-produced attention
    so the top-7.5% masks are identical on both paths."""
    B, C, H, W = x.shape
    N = H * W
    f = _conv1x1_cn(*params['corr_f'],
                    adain_normalize(x).reshape(B, C, N)).astype(jnp.float32)
    gT = _conv1x1_nc(*params['corr_g'],
                     adain_normalize(y).reshape(B, C, N)).astype(jnp.float32)
    h = _conv1x1_cn(*params['h'], y.reshape(B, C, N)).astype(jnp.float32)
    mx = attn_mask(atten_x)[:, 0, :]
    my = attn_mask(atten_y)[:, 0, :]
    energy = jnp.einsum('bci,bjc->bij', f, gT)
    corr = jax.nn.softmax(energy, axis=-1)
    cmask = (mx[:, :, None] == my[:, None, :]).astype(jnp.float32)
    corr = cmask * corr
    corr = corr / jnp.maximum(jnp.sum(corr, axis=-1, keepdims=True), 1e-12)
    resid = jnp.einsum('bcj,bij->bci', h, corr)
    wo, bo = params['out']
    out = x.reshape(B, C, N) + jnp.einsum('oc,bci->boi', wo, resid) + bo[None]
    return out.reshape(B, C, H, W)


# ------------------------------ main ------------------------------

if __name__ == "__main__":
    key = jax.random.PRNGKey(0)
    kx, ky, kp = jax.random.split(key, 3)
    B, C, H, W = 2, 32, 16, 16          # N = 256 -> 2 query tiles x 2 key tiles
    x = jax.random.normal(kx, (B, C, H, W), dtype=jnp.float32)
    y = jax.random.normal(ky, (B, C, H, W), dtype=jnp.float32)
    params = init_savanet_params(kp, C)

    output, atten_x, atten_y = savanet_forward(params, x, y,
                                               block_q=128, block_k=128)
    jax.block_until_ready((output, atten_x, atten_y))

    assert output.shape == (B, C, H, W)
    assert atten_x.shape == (B, 1, H * W)
    assert atten_y.shape == (B, 1, H * W)
    assert bool(jnp.all(jnp.isfinite(output)))
    assert bool(jnp.all(jnp.isfinite(atten_x)))
    assert bool(jnp.all(jnp.isfinite(atten_y)))

    # Correctness vs. a pure-JAX reference that uses the same bf16 activations.
    ax_ref, ay_ref = _reference_attention(params, x, y)
    out_ref = _reference_output(params, x, y, atten_x, atten_y)
    np.testing.assert_allclose(np.asarray(atten_x), np.asarray(ax_ref),
                               atol=1e-4, rtol=2e-2)
    np.testing.assert_allclose(np.asarray(atten_y), np.asarray(ay_ref),
                               atol=1e-4, rtol=2e-2)
    np.testing.assert_allclose(np.asarray(output), np.asarray(out_ref),
                               atol=5e-2, rtol=5e-2)

    print("KERNEL_OK")
</pallas_src>

<mosaic_0001>
module attributes {stable_mosaic.version = 11 : i64} {
  func.func @_self_attn_kernel(%arg0: i32, %arg1: i32, %arg2: memref<1x128x32xbf16, #tpu.memory_space<vmem>>, %arg3: memref<1x32x256xbf16, #tpu.memory_space<vmem>>, %arg4: memref<1x1x256xf32, #tpu.memory_space<vmem>>, %arg5: memref<1x256xf32, #tpu.memory_space<vmem>>) attributes {dimension_semantics = [#tpu.dimension_semantics<parallel>, #tpu.dimension_semantics<arbitrary>], iteration_bounds = array<i64: 4, 2>, scalar_prefetch = 0 : i64, scratch_operands = 1 : i64, tpu.core_type = #tpu.core_type<tc>, window_params = [{transform_indices = @transform_0, window_bounds = array<i64: 1, 128, 32>}, {transform_indices = @transform_1, window_bounds = array<i64: 1, 32, 256>}, {transform_indices = @transform_2, window_bounds = array<i64: 1, 1, 256>}]} {
    %c0_i32 = arith.constant 0 : i32
    %0 = arith.cmpi eq, %arg1, %c0_i32 : i32
    %1 = arith.extui %0 : i1 to i32
    %c0_i32_0 = arith.constant 0 : i32
    %2 = arith.cmpi ne, %1, %c0_i32_0 : i32
    scf.if %2 {
      %cst_14 = arith.constant 0.000000e+00 : f32
      %25 = vector.broadcast %cst_14 : f32 to vector<1x256xf32>
      %c0_15 = arith.constant 0 : index
      %c0_16 = arith.constant 0 : index
      %26 = vector.load %arg5[%c0_15, %c0_16] : memref<1x256xf32, #tpu.memory_space<vmem>>, vector<1x256xf32>
      tpu.vector_store %arg5[%c0_15, %c0_16], %25 {strides = array<i32>} : memref<1x256xf32, #tpu.memory_space<vmem>>, vector<1x256xf32>,
    } else {
    }
    %c0 = arith.constant 0 : index
    %c0_1 = arith.constant 0 : index
    %c0_2 = arith.constant 0 : index
    %3 = vector.load %arg2[%c0, %c0_1, %c0_2] : memref<1x128x32xbf16, #tpu.memory_space<vmem>>, vector<1x128x32xbf16>
    %4 = vector.shape_cast %3 : vector<1x128x32xbf16> to vector<128x32xbf16>
    %c0_3 = arith.constant 0 : index
    %c0_4 = arith.constant 0 : index
    %c0_5 = arith.constant 0 : index
    %5 = vector.load %arg3[%c0_3, %c0_4, %c0_5] : memref<1x32x256xbf16, #tpu.memory_space<vmem>>, vector<1x32x256xbf16>
    %6 = vector.shape_cast %5 : vector<1x32x256xbf16> to vector<32x256xbf16>
    %cst = arith.constant dense<0.000000e+00> : vector<128x256xf32>
    %7 = tpu.matmul %4, %6, %cst {dimension_numbers = #tpu.dot_dimension_numbers<[1], [0], [0], [1], [0, 0, 1, 1], [], []>} : vector<128x32xbf16>, vector<32x256xbf16>, vector<128x256xf32> -> vector<128x256xf32>
    %cst_6 = arith.constant dense<0xFF800000> : vector<128xf32>
    %8 = vector.multi_reduction <maximumf>, %7, %cst_6 [1] : vector<128x256xf32> to vector<128xf32>
    %9 = vector.shape_cast %8 : vector<128xf32> to vector<128x1xf32>
    %10 = vector.broadcast %9 : vector<128x1xf32> to vector<128x256xf32>
    %11 = arith.subf %7, %10 : vector<128x256xf32>
    %12 = math.exp %11 : vector<128x256xf32>
    %cst_7 = arith.constant dense<0.000000e+00> : vector<128xf32>
    %13 = vector.multi_reduction <add>, %12, %cst_7 [1] : vector<128x256xf32> to vector<128xf32>
    %14 = vector.shape_cast %13 : vector<128xf32> to vector<128x1xf32>
    %15 = vector.broadcast %14 : vector<128x1xf32> to vector<128x256xf32>
    %16 = arith.divf %12, %15 : vector<128x256xf32>
    %c0_8 = arith.constant 0 : index
    %c0_9 = arith.constant 0 : index
    %17 = vector.load %arg5[%c0_8, %c0_9] : memref<1x256xf32, #tpu.memory_space<vmem>>, vector<1x256xf32>
    %cst_10 = arith.constant dense<0.000000e+00> : vector<256xf32>
    %18 = vector.multi_reduction <add>, %16, %cst_10 [0] : vector<128x256xf32> to vector<256xf32>
    %19 = vector.shape_cast %18 : vector<256xf32> to vector<1x256xf32>
    %20 = arith.addf %17, %19 : vector<1x256xf32>
    %c0_11 = arith.constant 0 : index
    %c0_12 = arith.constant 0 : index
    %21 = vector.load %arg5[%c0_11, %c0_12] : memref<1x256xf32, #tpu.memory_space<vmem>>, vector<1x256xf32>
    tpu.vector_store %arg5[%c0_11, %c0_12], %20 {strides = array<i32>} : memref<1x256xf32, #tpu.memory_space<vmem>>, vector<1x256xf32>,
    %c1_i32 = arith.constant 1 : i32
    %22 = arith.cmpi eq, %arg1, %c1_i32 : i32
    %23 = arith.extui %22 : i1 to i32
    %c0_i32_13 = arith.constant 0 : i32
    %24 = arith.cmpi ne, %23, %c0_i32_13 : i32
    scf.if %24 {
      %c0_14 = arith.constant 0 : index
      %c0_15 = arith.constant 0 : index
      %25 = vector.load %arg5[%c0_14, %c0_15] : memref<1x256xf32, #tpu.memory_space<vmem>>, vector<1x256xf32>
      %cst_16 = arith.constant 3.906250e-03 : f32
      %26 = vector.broadcast %cst_16 : f32 to vector<1x256xf32>
      %27 = arith.mulf %25, %26 : vector<1x256xf32>
      %c0_17 = arith.constant 0 : index
      %c0_18 = arith.constant 0 : index
      %c0_19 = arith.constant 0 : index
      %28 = vector.load %arg4[%c0_17, %c0_18, %c0_19] : memref<1x1x256xf32, #tpu.memory_space<vmem>>, vector<1x1x256xf32>
      %29 = vector.shape_cast %28 : vector<1x1x256xf32> to vector<1x256xf32>
      %30 = vector.shape_cast %27 : vector<1x256xf32> to vector<1x1x256xf32>
      tpu.vector_store %arg4[%c0_17, %c0_18, %c0_19], %30 {strides = array<i32>} : memref<1x1x256xf32, #tpu.memory_space<vmem>>, vector<1x1x256xf32>,
    } else {
    }
    return
  }
  func.func @transform_0(%arg0: i32, %arg1: i32) -> (i32, i32, i32) {
    %c0_i32 = arith.constant 0 : i32
    %c0_i32_0 = arith.constant 0 : i32
    return %arg0, %arg1, %c0_i32 : i32, i32, i32
  }
  func.func @transform_1(%arg0: i32, %arg1: i32) -> (i32, i32, i32) {
    %c0_i32 = arith.constant 0 : i32
    %c0_i32_0 = arith.constant 0 : i32
    %c0_i32_1 = arith.constant 0 : i32
    return %arg0, %c0_i32, %c0_i32_0 : i32, i32, i32
  }
  func.func @transform_2(%arg0: i32, %arg1: i32) -> (i32, i32, i32) {
    %c0_i32 = arith.constant 0 : i32
    %c0_i32_0 = arith.constant 0 : i32
    %c0_i32_1 = arith.constant 0 : i32
    return %arg0, %c0_i32, %c0_i32_0 : i32, i32, i32
  }
}

module attributes {stable_mosaic.version = 11 : i64} {
  func.func @_fused_corr_kernel(%arg0: i32, %arg1: i32, %arg2: i32, %arg3: memref<1x32x128xbf16, #tpu.memory_space<vmem>>, %arg4: memref<1x128x32xbf16, #tpu.memory_space<vmem>>, %arg5: memref<1x32x128xbf16, #tpu.memory_space<vmem>>, %arg6: memref<1x1x128xf32, #tpu.memory_space<vmem>>, %arg7: memref<1x128x1xf32, #tpu.memory_space<vmem>>, %arg8: memref<1x32x128xf32, #tpu.memory_space<vmem>>, %arg9: memref<32x32xbf16, #tpu.memory_space<vmem>>, %arg10: memref<32x1xf32, #tpu.memory_space<vmem>>, %arg11: memref<1x32x128xf32, #tpu.memory_space<vmem>>, %arg12: memref<1x128xf32, #tpu.memory_space<vmem>>, %arg13: memref<1x128xf32, #tpu.memory_space<vmem>>, %arg14: memref<32x128xf32, #tpu.memory_space<vmem>>) attributes {dimension_semantics = [#tpu.dimension_semantics<parallel>, #tpu.dimension_semantics<parallel>, #tpu.dimension_semantics<arbitrary>], iteration_bounds = array<i64: 2, 2, 2>, scalar_prefetch = 0 : i64, scratch_operands = 3 : i64, tpu.core_type = #tpu.core_type<tc>, window_params = [{transform_indices = @transform_0, window_bounds = array<i64: 1, 32, 128>}, {transform_indices = @transform_1, window_bounds = array<i64: 1, 128, 32>}, {transform_indices = @transform_2, window_bounds = array<i64: 1, 32, 128>}, {transform_indices = @transform_3, window_bounds = array<i64: 1, 1, 128>}, {transform_indices = @transform_4, window_bounds = array<i64: 1, 128, 1>}, {transform_indices = @transform_5, window_bounds = array<i64: 1, 32, 128>}, {pipeline_mode = #tpu.pipeline_mode<synchronous>, transform_indices = @transform_6, window_bounds = array<i64: 32, 32>}, {pipeline_mode = #tpu.pipeline_mode<synchronous>, transform_indices = @transform_7, window_bounds = array<i64: 32, 1>}, {transform_indices = @transform_8, window_bounds = array<i64: 1, 32, 128>}]} {
    %c0_i32 = arith.constant 0 : i32
    %0 = arith.cmpi eq, %arg2, %c0_i32 : i32
    %1 = arith.extui %0 : i1 to i32
    %c0_i32_0 = arith.constant 0 : i32
    %2 = arith.cmpi ne, %1, %c0_i32_0 : i32
    scf.if %2 {
      %cst_34 = arith.constant 0xFF800000 : f32
      %46 = vector.broadcast %cst_34 : f32 to vector<1x128xf32>
      %c0_35 = arith.constant 0 : index
      %c0_36 = arith.constant 0 : index
      %47 = vector.load %arg12[%c0_35, %c0_36] : memref<1x128xf32, #tpu.memory_space<vmem>>, vector<1x128xf32>
      tpu.vector_store %arg12[%c0_35, %c0_36], %46 {strides = array<i32>} : memref<1x128xf32, #tpu.memory_space<vmem>>, vector<1x128xf32>,
      %cst_37 = arith.constant 0.000000e+00 : f32
      %48 = vector.broadcast %cst_37 : f32 to vector<1x128xf32>
      %c0_38 = arith.constant 0 : index
      %c0_39 = arith.constant 0 : index
      %49 = vector.load %arg13[%c0_38, %c0_39] : memref<1x128xf32, #tpu.memory_space<vmem>>, vector<1x128xf32>
      tpu.vector_store %arg13[%c0_38, %c0_39], %48 {strides = array<i32>} : memref<1x128xf32, #tpu.memory_space<vmem>>, vector<1x128xf32>,
      %cst_40 = arith.constant 0.000000e+00 : f32
      %50 = vector.broadcast %cst_40 : f32 to vector<32x128xf32>
      %c0_41 = arith.constant 0 : index
      %c0_42 = arith.constant 0 : index
      %51 = vector.load %arg14[%c0_41, %c0_42] : memref<32x128xf32, #tpu.memory_space<vmem>>, vector<32x128xf32>
      tpu.vector_store %arg14[%c0_41, %c0_42], %50 {strides = array<i32>} : memref<32x128xf32, #tpu.memory_space<vmem>>, vector<32x128xf32>,
    } else {
    }
    %c0 = arith.constant 0 : index
    %c0_1 = arith.constant 0 : index
    %c0_2 = arith.constant 0 : index
    %3 = vector.load %arg4[%c0, %c0_1, %c0_2] : memref<1x128x32xbf16, #tpu.memory_space<vmem>>, vector<1x128x32xbf16>
    %4 = vector.shape_cast %3 : vector<1x128x32xbf16> to vector<128x32xbf16>
    %c0_3 = arith.constant 0 : index
    %c0_4 = arith.constant 0 : index
    %c0_5 = arith.constant 0 : index
    %5 = vector.load %arg3[%c0_3, %c0_4, %c0_5] : memref<1x32x128xbf16, #tpu.memory_space<vmem>>, vector<1x32x128xbf16>
    %6 = vector.shape_cast %5 : vector<1x32x128xbf16> to vector<32x128xbf16>
    %cst = arith.constant dense<0.000000e+00> : vector<128x128xf32>
    %7 = tpu.matmul %4, %6, %cst {dimension_numbers = #tpu.dot_dimension_numbers<[1], [0], [0], [1], [0, 0, 1, 1], [], []>} : vector<128x32xbf16>, vector<32x128xbf16>, vector<128x128xf32> -> vector<128x128xf32>
    %c0_6 = arith.constant 0 : index
    %c0_7 = arith.constant 0 : index
    %8 = vector.load %arg12[%c0_6, %c0_7] : memref<1x128xf32, #tpu.memory_space<vmem>>, vector<1x128xf32>
    %cst_8 = arith.constant dense<0xFF800000> : vector<128xf32>
    %9 = vector.multi_reduction <maximumf>, %7, %cst_8 [0] : vector<128x128xf32> to vector<128xf32>
    %10 = vector.shape_cast %9 : vector<128xf32> to vector<1x128xf32>
    %11 = arith.maximumf %8, %10 : vector<1x128xf32>
    %c0_9 = arith.constant 0 : index
    %c0_10 = arith.constant 0 : index
    %12 = vector.load %arg12[%c0_9, %c0_10] : memref<1x128xf32, #tpu.memory_space<vmem>>, vector<1x128xf32>
    %13 = arith.subf %12, %11 : vector<1x128xf32>
    %14 = math.exp %13 : vector<1x128xf32>
    %c0_11 = arith.constant 0 : index
    %c0_12 = arith.constant 0 : index
    %c0_13 = arith.constant 0 : index
    %15 = vector.load %arg7[%c0_11, %c0_12, %c0_13] : memref<1x128x1xf32, #tpu.memory_space<vmem>>, vector<1x128x1xf32>
    %16 = vector.shape_cast %15 : vector<1x128x1xf32> to vector<128x1xf32>
    %c0_14 = arith.constant 0 : index
    %c0_15 = arith.constant 0 : index
    %c0_16 = arith.constant 0 : index
    %17 = vector.load %arg6[%c0_14, %c0_15, %c0_16] : memref<1x1x128xf32, #tpu.memory_space<vmem>>, vector<1x1x128xf32>
    %18 = vector.shape_cast %17 : vector<1x1x128xf32> to vector<1x128xf32>
    %19 = vector.broadcast %16 : vector<128x1xf32> to vector<128x128xf32>
    %20 = vector.broadcast %18 : vector<1x128xf32> to vector<128x128xf32>
    %21 = arith.cmpf oeq, %19, %20 : vector<128x128xf32>
    %22 = vector.broadcast %11 : vector<1x128xf32> to vector<128x128xf32>
    %23 = arith.subf %7, %22 : vector<128x128xf32>
    %24 = math.exp %23 : vector<128x128xf32>
    %cst_17 = arith.constant 0.000000e+00 : f32
    %25 = vector.broadcast %cst_17 : f32 to vector<128x128xf32>
    %26 = arith.select %21, %24, %25 : vector<128x128xi1>, vector<128x128xf32>
    %c0_18 = arith.constant 0 : index
    %c0_19 = arith.constant 0 : index
    %27 = vector.load %arg13[%c0_18, %c0_19] : memref<1x128xf32, #tpu.memory_space<vmem>>, vector<1x128xf32>
    %28 = arith.mulf %14, %27 : vector<1x128xf32>
    %cst_20 = arith.constant dense<0.000000e+00> : vector<128xf32>
    %29 = vector.multi_reduction <add>, %26, %cst_20 [0] : vector<128x128xf32> to vector<128xf32>
    %30 = vector.shape_cast %29 : vector<128xf32> to vector<1x128xf32>
    %31 = arith.addf %28, %30 : vector<1x128xf32>
    %c0_21 = arith.constant 0 : index
    %c0_22 = arith.constant 0 : index
    %32 = vector.load %arg13[%c0_21, %c0_22] : memref<1x128xf32, #tpu.memory_space<vmem>>, vector<1x128xf32>
    tpu.vector_store %arg13[%c0_21, %c0_22], %31 {strides = array<i32>} : memref<1x128xf32, #tpu.memory_space<vmem>>, vector<1x128xf32>,
    %c0_23 = arith.constant 0 : index
    %c0_24 = arith.constant 0 : index
    %33 = vector.load %arg14[%c0_23, %c0_24] : memref<32x128xf32, #tpu.memory_space<vmem>>, vector<32x128xf32>
    %34 = vector.broadcast %14 : vector<1x128xf32> to vector<32x128xf32>
    %35 = arith.mulf %34, %33 : vector<32x128xf32>
    %c0_25 = arith.constant 0 : index
    %c0_26 = arith.constant 0 : index
    %c0_27 = arith.constant 0 : index
    %36 = vector.load %arg5[%c0_25, %c0_26, %c0_27] : memref<1x32x128xbf16, #tpu.memory_space<vmem>>, vector<1x32x128xbf16>
    %37 = vector.shape_cast %36 : vector<1x32x128xbf16> to vector<32x128xbf16>
    %38 = arith.truncf %26 : vector<128x128xf32> to vector<128x128xbf16>
    %cst_28 = arith.constant dense<0.000000e+00> : vector<32x128xf32>
    %39 = tpu.matmul %37, %38, %cst_28 {dimension_numbers = #tpu.dot_dimension_numbers<[1], [0], [0], [1], [0, 0, 1, 1], [], []>} : vector<32x128xbf16>, vector<128x128xbf16>, vector<32x128xf32> -> vector<32x128xf32>
    %40 = arith.addf %35, %39 : vector<32x128xf32>
    %c0_29 = arith.constant 0 : index
    %c0_30 = arith.constant 0 : index
    %41 = vector.load %arg14[%c0_29, %c0_30] : memref<32x128xf32, #tpu.memory_space<vmem>>, vector<32x128xf32>
    tpu.vector_store %arg14[%c0_29, %c0_30], %40 {strides = array<i32>} : memref<32x128xf32, #tpu.memory_space<vmem>>, vector<32x128xf32>,
    %c0_31 = arith.constant 0 : index
    %c0_32 = arith.constant 0 : index
    %42 = vector.load %arg12[%c0_31, %c0_32] : memref<1x128xf32, #tpu.memory_space<vmem>>, vector<1x128xf32>
    tpu.vector_store %arg12[%c0_31, %c0_32], %11 {strides = array<i32>} : memref<1x128xf32, #tpu.memory_space<vmem>>, vector<1x128xf32>,
    %c1_i32 = arith.constant 1 : i32
    %43 = arith.cmpi eq, %arg2, %c1_i32 : i32
    %44 = arith.extui %43 : i1 to i32
    %c0_i32_33 = arith.constant 0 : i32
    %45 = arith.cmpi ne, %44, %c0_i32_33 : i32
    scf.if %45 {
      %c0_34 = arith.constant 0 : index
      %c0_35 = arith.constant 0 : index
      %46 = vector.load %arg13[%c0_34, %c0_35] : memref<1x128xf32, #tpu.memory_space<vmem>>, vector<1x128xf32>
      %cst_36 = arith.constant 9.99999996E-13 : f32
      %47 = vector.broadcast %cst_36 : f32 to vector<1x128xf32>
      %48 = arith.maximumf %46, %47 : vector<1x128xf32>
      %49 = tpu.reciprocal %48 {approx = true} : vector<1x128xf32> -> vector<1x128xf32>
      %c0_37 = arith.constant 0 : index
      %c0_38 = arith.constant 0 : index
      %50 = vector.load %arg14[%c0_37, %c0_38] : memref<32x128xf32, #tpu.memory_space<vmem>>, vector<32x128xf32>
      %51 = vector.broadcast %49 : vector<1x128xf32> to vector<32x128xf32>
      %52 = arith.mulf %50, %51 : vector<32x128xf32>
      %53 = arith.truncf %52 : vector<32x128xf32> to vector<32x128xbf16>
      %c0_39 = arith.constant 0 : index
      %c0_40 = arith.constant 0 : index
      %c0_41 = arith.constant 0 : index
      %54 = vector.load %arg8[%c0_39, %c0_40, %c0_41] : memref<1x32x128xf32, #tpu.memory_space<vmem>>, vector<1x32x128xf32>
      %55 = vector.shape_cast %54 : vector<1x32x128xf32> to vector<32x128xf32>
      %c0_42 = arith.constant 0 : index
      %c0_43 = arith.constant 0 : index
      %56 = vector.load %arg9[%c0_42, %c0_43] : memref<32x32xbf16, #tpu.memory_space<vmem>>, vector<32x32xbf16>
      %cst_44 = arith.constant dense<0.000000e+00> : vector<32x128xf32>
      %57 = tpu.matmul %56, %53, %cst_44 {dimension_numbers = #tpu.dot_dimension_numbers<[1], [0], [0], [1], [0, 0, 1, 1], [], []>} : vector<32x32xbf16>, vector<32x128xbf16>, vector<32x128xf32> -> vector<32x128xf32>
      %58 = arith.addf %55, %57 : vector<32x128xf32>
      %c0_45 = arith.constant 0 : index
      %c0_46 = arith.constant 0 : index
      %59 = vector.load %arg10[%c0_45, %c0_46] : memref<32x1xf32, #tpu.memory_space<vmem>>, vector<32x1xf32>
      %60 = vector.broadcast %59 : vector<32x1xf32> to vector<32x128xf32>
      %61 = arith.addf %58, %60 : vector<32x128xf32>
      %c0_47 = arith.constant 0 : index
      %c0_48 = arith.constant 0 : index
      %c0_49 = arith.constant 0 : index
      %62 = vector.load %arg11[%c0_47, %c0_48, %c0_49] : memref<1x32x128xf32, #tpu.memory_space<vmem>>, vector<1x32x128xf32>
      %63 = vector.shape_cast %62 : vector<1x32x128xf32> to vector<32x128xf32>
      %64 = vector.shape_cast %61 : vector<32x128xf32> to vector<1x32x128xf32>
      tpu.vector_store %arg11[%c0_47, %c0_48, %c0_49], %64 {strides = array<i32>} : memref<1x32x128xf32, #tpu.memory_space<vmem>>, vector<1x32x128xf32>,
    } else {
    }
    return
  }
  func.func @transform_0(%arg0: i32, %arg1: i32, %arg2: i32) -> (i32, i32, i32) {
    %c0_i32 = arith.constant 0 : i32
    %c0_i32_0 = arith.constant 0 : i32
    return %arg0, %c0_i32, %arg1 : i32, i32, i32
  }
  func.func @transform_1(%arg0: i32, %arg1: i32, %arg2: i32) -> (i32, i32, i32) {
    %c0_i32 = arith.constant 0 : i32
    %c0_i32_0 = arith.constant 0 : i32
    return %arg0, %arg2, %c0_i32 : i32, i32, i32
  }
  func.func @transform_2(%arg0: i32, %arg1: i32, %arg2: i32) -> (i32, i32, i32) {
    %c0_i32 = arith.constant 0 : i32
    %c0_i32_0 = arith.constant 0 : i32
    return %arg0, %c0_i32, %arg2 : i32, i32, i32
  }
  func.func @transform_3(%arg0: i32, %arg1: i32, %arg2: i32) -> (i32, i32, i32) {
    %c0_i32 = arith.constant 0 : i32
    %c0_i32_0 = arith.constant 0 : i32
    return %arg0, %c0_i32, %arg1 : i32, i32, i32
  }
  func.func @transform_4(%arg0: i32, %arg1: i32, %arg2: i32) -> (i32, i32, i32) {
    %c0_i32 = arith.constant 0 : i32
    %c0_i32_0 = arith.constant 0 : i32
    return %arg0, %arg2, %c0_i32 : i32, i32, i32
  }
  func.func @transform_5(%arg0: i32, %arg1: i32, %arg2: i32) -> (i32, i32, i32) {
    %c0_i32 = arith.constant 0 : i32
    %c0_i32_0 = arith.constant 0 : i32
    return %arg0, %c0_i32, %arg1 : i32, i32, i32
  }
  func.func @transform_6(%arg0: i32, %arg1: i32, %arg2: i32) -> (i32, i32) {
    %c0_i32 = arith.constant 0 : i32
    %c0_i32_0 = arith.constant 0 : i32
    %c0_i32_1 = arith.constant 0 : i32
    return %c0_i32, %c0_i32_0 : i32, i32
  }
  func.func @transform_7(%arg0: i32, %arg1: i32, %arg2: i32) -> (i32, i32) {
    %c0_i32 = arith.constant 0 : i32
    %c0_i32_0 = arith.constant 0 : i32
    %c0_i32_1 = arith.constant 0 : i32
    return %c0_i32, %c0_i32_0 : i32, i32
  }
  func.func @transform_8(%arg0: i32, %arg1: i32, %arg2: i32) -> (i32, i32, i32) {
    %c0_i32 = arith.constant 0 : i32
    %c0_i32_0 = arith.constant 0 : i32
    return %arg0, %c0_i32, %arg1 : i32, i32, i32
  }
}

</mosaic_0001>

<llo_original>
// kernel: custom-call.3
$region0: #{custom-call.3}
  %s0 = inlined_call_operand.vmem [shape: f32[2,16,16], index: 0, kind: input, shape index: {}]
  %s1 = inlined_call_operand.vmem [shape: f32[2,16,16], index: 1, kind: input, shape index: {}]
  %s2 = inlined_call_operand.vmem [shape: f32[2,16,16], index: 2, kind: input, shape index: {}]
  %s3 = inlined_call_operand.vmem [shape: f32[2,16,16], index: 3, kind: input, shape index: {}]
  %s4 = inlined_call_operand.vmem [shape: f32[2,16], index: 4, kind: output, shape index: {0}]
  %s5 = inlined_call_operand.vmem [shape: f32[2,16], index: 5, kind: output, shape index: {1}]
  %s6 = inlined_call_operand.vmem [shape: f32[2,16,16], index: 6, kind: output, shape index: {2}]
  %s7 = inlined_call_operand.vmem [shape: f32[2,16,16], index: 7, kind: output, shape index: {3}]
  %s8 = inlined_call_operand.vmem [shape: f32[2,16,16], index: 8, kind: output, shape index: {4}]
  %s9 = inlined_call_operand.vmem [shape: f32[2,16,16], index: 9, kind: output, shape index: {5}]
  %10 = xla_tuple %s4, %s5, %s6, %s7, %s8, %s9
  $region1: #{custom-call.3} parent=0
    #allocation0 [shape = 'u8[16384]{0}', space=vmem, size = 0x4000, scoped, tag = 'operand span for operand 0']
    #allocation1 [shape = 'u8[16384]{0}', space=vmem, size = 0x4000, scoped, tag = 'operand span for operand 1']
    #allocation2 [shape = 'u8[16384]{0}', space=vmem, size = 0x4000, scoped, tag = 'operand span for operand 2']
    #allocation3 [shape = 'u8[16384]{0}', space=vmem, size = 0x4000, scoped, tag = 'operand span for operand 3']
    #allocation4 [shape = 'u8[4096]{0}', space=vmem, size = 0x1000, scoped, tag = 'operand span for operand 4']
    #allocation5 [shape = 'u8[2048]{0}', space=vmem, size = 0x800, scoped, tag = 'packed  for operand 4']
    #allocation6 [shape = 'u8[4096]{0}', space=vmem, size = 0x1000, scoped, tag = 'operand span for operand 5']
    #allocation7 [shape = 'u8[2048]{0}', space=vmem, size = 0x800, scoped, tag = 'packed  for operand 5']
    #allocation8 [shape = 'u8[16384]{0}', space=vmem, size = 0x4000, scoped, tag = 'operand span for operand 6']
    #allocation9 [shape = 'u8[16384]{0}', space=vmem, size = 0x4000, scoped, tag = 'operand span for operand 7']
    #allocation10 [shape = 'u8[16384]{0}', space=vmem, size = 0x4000, scoped, tag = 'operand span for operand 8']
    #allocation11 [shape = 'u8[16384]{0}', space=vmem, size = 0x4000, scoped, tag = 'operand span for operand 9']
    loop: start=0, step=1, limit=4
    $region2: #{custom-call.3} parent=1 // loop_pre_header
      _
    $region3: #{custom-call.3} parent=1 // loop_header
      %s12 = sphi 0, %s16
      %p13 = scmp.ge.s32.totalorder %s12, 4
      %s24 = sphi 0, %s26
      %s27 = sphi 0, %s24
      %s28 = sphi 0, %s27
      %s44 = sphi 0, %s28
      %s52 = sphi 0, %s54
      %s55 = sphi 0, %s52
      %s56 = sphi 0, %s55
      %s72 = sphi 0, %s56
    $region4: #{custom-call.3} parent=1 // loop_header_branch
      %15 = sbr.rel (%p13) target = $region8
    $region5: #{custom-call.3} parent=1 // loop_body
      %s17 = ssub.s32 %s12, 1
      %s18 = ssub.s32 %s12, 2
      %s19 = sadd.s32 %s12, 1
      %s20 = sshrl.u32 %s12, 3
      %s21 = sshrl.u32 %s19, 3
      %s22 = ssub.s32 %s20, %s21
      %p23 = scmp.eq.s32.totalorder %s22, 0
      %s25 = sadd.s32 %s24, 1
      %s26 = scalar_select %p23, %s24, %s25
      %p29 = pneg %p23
      %p30 = scmp.eq.s32.totalorder %s12, 1
      %p31 = por %p29, %p30
      %p32 = scmp.ne.s32.totalorder %s24, %s27
      %p33 = scmp.eq.s32.totalorder %s12, 0
      %p34 = por %p32, %p33
      %p35 = scmp.ne.s32.totalorder %s24, %s27
      %p36 = scmp.eq.s32.totalorder %s17, 1
      %p37 = por %p35, %p36
      %p38 = scmp.ne.s32.totalorder %s27, %s28
      %p39 = scmp.eq.s32.totalorder %s17, 0
      %p40 = por %p38, %p39
      %p41 = scmp.ne.s32.totalorder %s27, %s28
      %p42 = scmp.eq.s32.totalorder %s18, 1
      %p43 = por %p41, %p42
      %p45 = scmp.ne.s32.totalorder %s28, %s44
      %p46 = scmp.eq.s32.totalorder %s18, 0
      %p47 = por %p45, %p46
      %s48 = sshrl.u32 %s12, 3
      %s49 = sshrl.u32 %s19, 3
      %s50 = ssub.s32 %s48, %s49
      %p51 = scmp.eq.s32.totalorder %s50, 0
      %s53 = sadd.s32 %s52, 1
      %s54 = scalar_select %p51, %s52, %s53
      %p57 = pneg %p51
      %p58 = scmp.eq.s32.totalorder %s12, 1
      %p59 = por %p57, %p58
      %p60 = scmp.ne.s32.totalorder %s52, %s55
      %p61 = scmp.eq.s32.totalorder %s12, 0
      %p62 = por %p60, %p61
      %p63 = scmp.ne.s32.totalorder %s52, %s55
      %p64 = scmp.eq.s32.totalorder %s17, 1
      %p65 = por %p63, %p64
      %p66 = scmp.ne.s32.totalorder %s55, %s56
      %p67 = scmp.eq.s32.totalorder %s17, 0
      %p68 = por %p66, %p67
      %p69 = scmp.ne.s32.totalorder %s55, %s56
      %p70 = scmp.eq.s32.totalorder %s18, 1
      %p71 = por %p69, %p70
      %p73 = scmp.ne.s32.totalorder %s56, %s72
      %p74 = scmp.eq.s32.totalorder %s18, 0
      %p75 = por %p73, %p74
      %p76 = scmp.le.s32.totalorder 1, %s12
      %p77 = scmp.lt.s32.totalorder %s12, 3
      %p78 = pnand %p76, %p77
      %p79 = pneg %p78
      // Predicated region
      $region9: #{custom-call.3} parent=5 // pred_check
        _
      $region10: #{custom-call.3} parent=5 // pred_check_branch
        %81 = sbr.rel (%p78) target = $region12
      $region11: #{custom-call.3} parent=5 // pred_region
        %s82 = ssub.s32 %s12, 1
      $region12: #{custom-call.3} parent=5 // pred_fallthru
        _
      %p83 = scmp.lt.s32.totalorder %s12, 2
      // Predicated region
      $region13: #{custom-call.3} parent=5 // pred_check
        %p84 = pneg %p83
      $region14: #{custom-call.3} parent=5 // pred_check_branch
        %86 = sbr.rel (%p84) target = $region16
      $region15: #{custom-call.3} parent=5 // pred_region
        %s87 = sand.u32 %s12, 1
        %s88 = sand.u32 %s12, 1
        %s89 = smul.addr %s88, 16
        %s90 = scalar_lea.vmem [#allocation0], %s89
        %s91 = smul.addr %s12, 16
        %s92 = scalar_lea.vmem %s0, %s91
        // Predicated region
        $region17: #{custom-call.3} parent=15 // pred_check
          _
        $region18: #{custom-call.3} parent=15 // pred_check_branch
          %94 = sbr.rel (0) target = $region20
        $region19: #{custom-call.3} parent=15 // pred_region
          // Predicated region
          $region21: #{custom-call.3} parent=19 // pred_check
            _
          $region22: #{custom-call.3} parent=19 // pred_check_branch
            %96 = sbr.rel (0) target = $region24
          $region23: #{custom-call.3} parent=19 // pred_region
            loop: start=0, step=1, limit=1
            $region25: #{custom-call.3} parent=23 // loop_pre_header
              _
            $region26: #{custom-call.3} parent=23 // loop_header
              %s98 = sphi 0, %s102
              %p99 = scmp.ge.s32.totalorder %s98, 1
              %s103 = sphi %s92, %s92
              %s104 = sphi %s90, %s90
            $region27: #{custom-call.3} parent=23 // loop_header_branch
              %101 = sbr.rel (%p99) target = $region31
            $region28: #{custom-call.3} parent=23 // loop_body
              %v105 = vld [vmem:[%s103] sm:$0xff]
              %106 = vst [vmem:[%s104] sm:$0xff] %v105
              %v107 = vld [vmem:[%s103 + $0x8] sm:$0xff]
              %108 = vst [vmem:[%s104 + $0x8] sm:$0xff] %v107
            $region29: #{custom-call.3} parent=23 // loop_footer
              %s102 = sadd.s32 1, %s98
            $region30: #{custom-call.3} parent=23 // loop_footer_branch
              %97 = sbr.rel target = $region26
            $region31: #{custom-call.3} parent=23 // loop_exit
              _
          $region24: #{custom-call.3} parent=19 // pred_fallthru
            _
          // Predicated region
          $region32: #{custom-call.3} parent=19 // pred_check
            _
          $region33: #{custom-call.3} parent=19 // pred_check_branch
            %110 = sbr.rel target = $region35
          $region34: #{custom-call.3} parent=19 // pred_region
            _
          $region35: #{custom-call.3} parent=19 // pred_fallthru
            _
        $region20: #{custom-call.3} parent=15 // pred_fallthru
          _
        %111 = vnop
        %s112 = sand.u32 %s12, 1
        %s113 = sand.u32 %s12, 1
        %s114 = smul.addr %s113, 16
        %s115 = scalar_lea.vmem [#allocation1], %s114
        %s116 = smul.addr %s12, 16
        %s117 = scalar_lea.vmem %s1, %s116
        // Predicated region
        $region36: #{custom-call.3} parent=15 // pred_check
          _
        $region37: #{custom-call.3} parent=15 // pred_check_branch
          %119 = sbr.rel (0) target = $region39
        $region38: #{custom-call.3} parent=15 // pred_region
          // Predicated region
          $region40: #{custom-call.3} parent=38 // pred_check
            _
          $region41: #{custom-call.3} parent=38 // pred_check_branch
            %121 = sbr.rel (0) target = $region43
          $region42: #{custom-call.3} parent=38 // pred_region
            loop: start=0, step=1, limit=1
            $region44: #{custom-call.3} parent=42 // loop_pre_header
              _
            $region45: #{custom-call.3} parent=42 // loop_header
              %s123 = sphi 0, %s127
              %p124 = scmp.ge.s32.totalorder %s123, 1
              %s128 = sphi %s117, %s117
              %s129 = sphi %s115, %s115
            $region46: #{custom-call.3} parent=42 // loop_header_branch
              %126 = sbr.rel (%p124) target = $region50
            $region47: #{custom-call.3} parent=42 // loop_body
              %v130 = vld [vmem:[%s128] sm:$0xff]
              %131 = vst [vmem:[%s129] sm:$0xff] %v130
              %v132 = vld [vmem:[%s128 + $0x8] sm:$0xff]
              %133 = vst [vmem:[%s129 + $0x8] sm:$0xff] %v132
            $region48: #{custom-call.3} parent=42 // loop_footer
              %s127 = sadd.s32 1, %s123
            $region49: #{custom-call.3} parent=42 // loop_footer_branch
              %122 = sbr.rel target = $region45
            $region50: #{custom-call.3} parent=42 // loop_exit
              _
          $region43: #{custom-call.3} parent=38 // pred_fallthru
            _
          // Predicated region
          $region51: #{custom-call.3} parent=38 // pred_check
            _
          $region52: #{custom-call.3} parent=38 // pred_check_branch
            %135 = sbr.rel target = $region54
          $region53: #{custom-call.3} parent=38 // pred_region
            _
          $region54: #{custom-call.3} parent=38 // pred_fallthru
            _
        $region39: #{custom-call.3} parent=15 // pred_fallthru
          _
        %136 = vnop
        %s137 = sand.u32 %s12, 1
        %s138 = sand.u32 %s12, 1
        %s139 = smul.addr %s138, 16
        %s140 = scalar_lea.vmem [#allocation2], %s139
        %s141 = smul.addr %s12, 16
        %s142 = scalar_lea.vmem %s2, %s141
        // Predicated region
        $region55: #{custom-call.3} parent=15 // pred_check
          _
        $region56: #{custom-call.3} parent=15 // pred_check_branch
          %144 = sbr.rel (0) target = $region58
        $region57: #{custom-call.3} parent=15 // pred_region
          // Predicated region
          $region59: #{custom-call.3} parent=57 // pred_check
            _
          $region60: #{custom-call.3} parent=57 // pred_check_branch
            %146 = sbr.rel (0) target = $region62
          $region61: #{custom-call.3} parent=57 // pred_region
            loop: start=0, step=1, limit=1
            $region63: #{custom-call.3} parent=61 // loop_pre_header
              _
            $region64: #{custom-call.3} parent=61 // loop_header
              %s148 = sphi 0, %s152
              %p149 = scmp.ge.s32.totalorder %s148, 1
              %s153 = sphi %s142, %s142
              %s154 = sphi %s140, %s140
            $region65: #{custom-call.3} parent=61 // loop_header_branch
              %151 = sbr.rel (%p149) target = $region69
            $region66: #{custom-call.3} parent=61 // loop_body
              %v155 = vld [vmem:[%s153] sm:$0xff]
              %156 = vst [vmem:[%s154] sm:$0xff] %v155
              %v157 = vld [vmem:[%s153 + $0x8] sm:$0xff]
              %158 = vst [vmem:[%s154 + $0x8] sm:$0xff] %v157
            $region67: #{custom-call.3} parent=61 // loop_footer
              %s152 = sadd.s32 1, %s148
            $region68: #{custom-call.3} parent=61 // loop_footer_branch
              %147 = sbr.rel target = $region64
            $region69: #{custom-call.3} parent=61 // loop_exit
              _
          $region62: #{custom-call.3} parent=57 // pred_fallthru
            _
          // Predicated region
          $region70: #{custom-call.3} parent=57 // pred_check
            _
          $region71: #{custom-call.3} parent=57 // pred_check_branch
            %160 = sbr.rel target = $region73
          $region72: #{custom-call.3} parent=57 // pred_region
            _
          $region73: #{custom-call.3} parent=57 // pred_fallthru
            _
        $region58: #{custom-call.3} parent=15 // pred_fallthru
          _
        %161 = vnop
        %s162 = sand.u32 %s12, 1
        %s163 = sand.u32 %s12, 1
        %s164 = smul.addr %s163, 16
        %s165 = scalar_lea.vmem [#allocation3], %s164
        %s166 = smul.addr %s12, 16
        %s167 = scalar_lea.vmem %s3, %s166
        // Predicated region
        $region74: #{custom-call.3} parent=15 // pred_check
          _
        $region75: #{custom-call.3} parent=15 // pred_check_branch
          %169 = sbr.rel (0) target = $region77
        $region76: #{custom-call.3} parent=15 // pred_region
          // Predicated region
          $region78: #{custom-call.3} parent=76 // pred_check
            _
          $region79: #{custom-call.3} parent=76 // pred_check_branch
            %171 = sbr.rel (0) target = $region81
          $region80: #{custom-call.3} parent=76 // pred_region
            loop: start=0, step=1, limit=1
            $region82: #{custom-call.3} parent=80 // loop_pre_header
              _
            $region83: #{custom-call.3} parent=80 // loop_header
              %s173 = sphi 0, %s177
              %p174 = scmp.ge.s32.totalorder %s173, 1
              %s178 = sphi %s167, %s167
              %s179 = sphi %s165, %s165
            $region84: #{custom-call.3} parent=80 // loop_header_branch
              %176 = sbr.rel (%p174) target = $region88
            $region85: #{custom-call.3} parent=80 // loop_body
              %v180 = vld [vmem:[%s178] sm:$0xff]
              %181 = vst [vmem:[%s179] sm:$0xff] %v180
              %v182 = vld [vmem:[%s178 + $0x8] sm:$0xff]
              %183 = vst [vmem:[%s179 + $0x8] sm:$0xff] %v182
            $region86: #{custom-call.3} parent=80 // loop_footer
              %s177 = sadd.s32 1, %s173
            $region87: #{custom-call.3} parent=80 // loop_footer_branch
              %172 = sbr.rel target = $region83
            $region88: #{custom-call.3} parent=80 // loop_exit
              _
          $region81: #{custom-call.3} parent=76 // pred_fallthru
            _
          // Predicated region
          $region89: #{custom-call.3} parent=76 // pred_check
            _
          $region90: #{custom-call.3} parent=76 // pred_check_branch
            %185 = sbr.rel target = $region92
          $region91: #{custom-call.3} parent=76 // pred_region
            _
          $region92: #{custom-call.3} parent=76 // pred_fallthru
            _
        $region77: #{custom-call.3} parent=15 // pred_fallthru
          _
        %186 = vnop
      $region16: #{custom-call.3} parent=5 // pred_fallthru
        _
      %p187 = scmp.le.s32.totalorder 1, %s12
      %p188 = scmp.lt.s32.totalorder %s12, 3
      %p189 = pnand %p187, %p188
      %p190 = pneg %p189
      // Predicated region
      $region93: #{custom-call.3} parent=5 // pred_check
        _
      $region94: #{custom-call.3} parent=5 // pred_check_branch
        %192 = sbr.rel (%p189) target = $region96
      $region95: #{custom-call.3} parent=5 // pred_region
        #allocation12 [shape = 'f32[16,16]{1,0}', space=vmem, size = 0x2000, scoped, tag = 'a top-left matrix']
        #allocation13 [shape = 'f32[16,16]{1,0}', space=vmem, size = 0x2000, scoped, tag = 'a top-right matrix']
        #allocation14 [shape = 'f32[16,16]{1,0}', space=vmem, size = 0x2000, scoped, tag = 'a bottom-left matrix']
        #allocation15 [shape = 'f32[16,16]{1,0}', space=vmem, size = 0x2000, scoped, tag = 'a bottom-right matrix']
        %s193 = ssub.s32 %s12, 1
        %s194 = sand.u32 %s17, 1
        %s195 = sand.u32 %s17, 1
        %s196 = smul.addr %s195, 16
        %s197 = scalar_lea.vmem [#allocation0], %s196
        %s198 = sand.u32 %s17, 1
        %s199 = sand.u32 %s17, 1
        %s200 = smul.addr %s199, 16
        %s201 = scalar_lea.vmem [#allocation1], %s200
        %s202 = sand.u32 %s17, 1
        %s203 = sand.u32 %s17, 1
        %s204 = smul.addr %s203, 16
        %s205 = scalar_lea.vmem [#allocation2], %s204
        %s206 = sand.u32 %s17, 1
        %s207 = sand.u32 %s17, 1
        %s208 = smul.addr %s207, 16
        %s209 = scalar_lea.vmem [#allocation3], %s208
        %s210 = sand.u32 %s17, 1
        %s211 = sand.u32 %s17, 1
        %s212 = smul.addr %s211, 16
        %s213 = scalar_lea.vmem [#allocation0], %s212
        %s214 = sand.u32 %s17, 1
        %s215 = sand.u32 %s17, 1
        %s216 = smul.addr %s215, 16
        %s217 = scalar_lea.vmem [#allocation1], %s216
        %s218 = sand.u32 %s17, 1
        %s219 = sand.u32 %s17, 1
        %s220 = smul.addr %s219, 16
        %s221 = scalar_lea.vmem [#allocation2], %s220
        %s222 = sand.u32 %s17, 1
        %s223 = sand.u32 %s17, 1
        %s224 = smul.addr %s223, 16
        %s225 = scalar_lea.vmem [#allocation3], %s224
        %p226 = pneg %p40
        %p227 = pneg %p37
        %s228 = sand.u32 %s27, 1
        %s229 = sand.u32 %s27, 1
        %s230 = smul.addr %s229, 2
        %s231 = scalar_lea.vmem [#allocation5], %s230
        %p232 = pneg %p68
        %p233 = pneg %p65
        %s234 = sand.u32 %s55, 1
        %s235 = sand.u32 %s55, 1
        %s236 = smul.addr %s235, 2
        %s237 = scalar_lea.vmem [#allocation7], %s236
        %s238 = sand.u32 %s17, 1
        %s239 = sand.u32 %s17, 1
        %s240 = smul.addr %s239, 16
        %s241 = scalar_lea.vmem [#allocation8], %s240
        %s242 = sand.u32 %s17, 1
        %s243 = sand.u32 %s17, 1
        %s244 = smul.addr %s243, 16
        %s245 = scalar_lea.vmem [#allocation9], %s244
        %s246 = sand.u32 %s17, 1
        %s247 = sand.u32 %s17, 1
        %s248 = smul.addr %s247, 16
        %s249 = scalar_lea.vmem [#allocation10], %s248
        %s250 = sand.u32 %s17, 1
        %s251 = sand.u32 %s17, 1
        %s252 = smul.addr %s251, 16
        %s253 = scalar_lea.vmem [#allocation11], %s252
        %s254 = sshrl.u32 %s17, 3
        %s255 = sshrl.u32 %s17, 3
        %s256 = smov [#allocation12]
        %v257 = vld [vmem:[%s197] sm:$0xff]
        %258 = vst [vmem:[%s256] sm:$0xff] %v257
        %s259 = scalar_lea.vmem %s256, 8
        %s260 = scalar_lea.vmem %s197, 8 [#allocation0]
        %v261 = vld [vmem:[%s260] sm:$0xff]
        %262 = vst [vmem:[%s259] sm:$0xff] %v261
        %s263 = smov [#allocation13]
        %v264 = vld [vmem:[%s201] sm:$0xff]
        %265 = vst [vmem:[%s263] sm:$0xff] %v264
        %s266 = scalar_lea.vmem %s263, 8
        %s267 = scalar_lea.vmem %s201, 8 [#allocation1]
        %v268 = vld [vmem:[%s267] sm:$0xff]
        %269 = vst [vmem:[%s266] sm:$0xff] %v268
        %s270 = smov [#allocation14]
        %v271 = vld [vmem:[%s205] sm:$0xff]
        %272 = vst [vmem:[%s270] sm:$0xff] %v271
        %s273 = scalar_lea.vmem %s270, 8
        %s274 = scalar_lea.vmem %s205, 8 [#allocation2]
        %v275 = vld [vmem:[%s274] sm:$0xff]
        %276 = vst [vmem:[%s273] sm:$0xff] %v275
        %s277 = smov [#allocation15]
        %v278 = vld [vmem:[%s209] sm:$0xff]
        %279 = vst [vmem:[%s277] sm:$0xff] %v278
        %s280 = scalar_lea.vmem %s277, 8
        %s281 = scalar_lea.vmem %s209, 8 [#allocation3]
        %v282 = vld [vmem:[%s281] sm:$0xff]
        %283 = vst [vmem:[%s280] sm:$0xff] %v282
        %284 = vst [vmem:[%s241] sm:$0xff] 0.0
        %s285 = scalar_lea.vmem %s241, 8 [#allocation8]
        %286 = vst [vmem:[%s285] sm:$0xff] 0.0
        %287 = vst [vmem:[%s245] sm:$0xff] 0.0
        %s288 = scalar_lea.vmem %s245, 8 [#allocation9]
        %289 = vst [vmem:[%s288] sm:$0xff] 0.0
        %290 = vst [vmem:[%s249] sm:$0xff] 0.0
        %s291 = scalar_lea.vmem %s249, 8 [#allocation10]
        %292 = vst [vmem:[%s291] sm:$0xff] 0.0
        %293 = vst [vmem:[%s253] sm:$0xff] 0.0
        %s294 = scalar_lea.vmem %s253, 8 [#allocation11]
        %295 = vst [vmem:[%s294] sm:$0xff] 0.0
        %s296 = smov %s241
        %v297 = vlaneseq
        %v298 = vand.u32 %v297, 127
        %v299 = vmov %v298
        %v300 = vlaneseq
        %v301 = vshrl.u32 %v300, 7
        %v302 = vmov %v301
        %v303 = vld [vmem:[%s296] sm:$0xff]
        %vm306 = vcmp.eq.s32.totalorder %v302, %v299
        %v307 = vsel %vm306, 1.0, %v303
        %308 = vst [vmem:[%s296] sm:$0xff] %v307
        %s309 = scalar_lea.vmem %s296, 8
        %v310 = vld [vmem:[%s309] sm:$0xff]
        %v312 = vadd.s32 %v302, 8
        %vm313 = vcmp.eq.s32.totalorder %v312, %v299
        %v314 = vsel %vm313, 1.0, %v310
        %315 = vst [vmem:[%s309] sm:$0xff] %v314
        %s316 = smov %s253
        %v317 = vlaneseq
        %v318 = vand.u32 %v317, 127
        %v319 = vmov %v318
        %v320 = vlaneseq
        %v321 = vshrl.u32 %v320, 7
        %v322 = vmov %v321
        %v323 = vld [vmem:[%s316] sm:$0xff]
        %vm326 = vcmp.eq.s32.totalorder %v322, %v319
        %v327 = vsel %vm326, 1.0, %v323
        %328 = vst [vmem:[%s316] sm:$0xff] %v327
        %s329 = scalar_lea.vmem %s316, 8
        %v330 = vld [vmem:[%s329] sm:$0xff]
        %v332 = vadd.s32 %v322, 8
        %vm333 = vcmp.eq.s32.totalorder %v332, %v319
        %v334 = vsel %vm333, 1.0, %v330
        %335 = vst [vmem:[%s329] sm:$0xff] %v334
        // While loop
        $region97: #{custom-call.3} parent=95 // loop_pre_header
          _
        $region98: #{custom-call.3} parent=95 // loop_header
          %s337 = sphi 0, %s1235
          %v338 = vlaneseq
          %v339 = vand.u32 %v338, 127
          %v340 = vmov %v339
          %v341 = vlaneseq
          %v342 = vshrl.u32 %v341, 7
          %v343 = vmov %v342
          %s344 = smov [#allocation12]
          %v345 = vlaneseq
          %v346 = vand.u32 %v345, 127
          %vm347 = vcmp.ge.s32.totalorder %v346, 0
          %vm348 = vcmp.lt.s32.totalorder %v346, 16
          %vm349 = vmand %vm347, %vm348
          %v350 = vld [vmem:[%s344] sm:$0xff]
          %v351 = vsel %vm349, %v350, 0.0
          %v352 = vmul.f32 %v351, %v351
          %vm355 = vcmp.eq.s32.totalorder %v343, %v340
          %v356 = vsel %vm355, 0.0, %v352
          %s357 = scalar_lea.vmem %s344, 8
          %v358 = vld [vmem:[%s357] sm:$0xff]
          %v359 = vsel %vm349, %v358, 0.0
          %v360 = vmul.f32 %v359, %v359
          %v362 = vadd.s32 %v343, 8
          %vm363 = vcmp.eq.s32.totalorder %v362, %v340
          %v364 = vsel %vm363, 0.0, %v360
          %v365 = vadd.f32 %v356, %v364
          %v366 = vadd.f32 %v352, %v360
          %v367 = vlaneseq
          %v368 = vand.u32 %v367, 127
          %v369 = vmov %v368
          %v370 = vlaneseq
          %v371 = vshrl.u32 %v370, 7
          %v372 = vmov %v371
          %s373 = smov [#allocation13]
          %v374 = vlaneseq
          %v375 = vand.u32 %v374, 127
          %vm376 = vcmp.ge.s32.totalorder %v375, 0
          %vm377 = vcmp.lt.s32.totalorder %v375, 16
          %vm378 = vmand %vm376, %vm377
          %v379 = vld [vmem:[%s373] sm:$0xff]
          %v380 = vsel %vm378, %v379, 0.0
          %v381 = vmul.f32 %v380, %v380
          %v382 = vadd.f32 %v365, %v381
          %v383 = vadd.f32 %v366, %v381
          %s384 = scalar_lea.vmem %s373, 8
          %v385 = vld [vmem:[%s384] sm:$0xff]
          %v386 = vsel %vm378, %v385, 0.0
          %v387 = vmul.f32 %v386, %v386
          %v388 = vadd.f32 %v382, %v387
          %v389 = vadd.f32 %v383, %v387
          %v390 = vlaneseq
          %v391 = vand.u32 %v390, 127
          %v392 = vmov %v391
          %v393 = vlaneseq
          %v394 = vshrl.u32 %v393, 7
          %v395 = vmov %v394
          %s396 = smov [#allocation14]
          %v397 = vlaneseq
          %v398 = vand.u32 %v397, 127
          %vm399 = vcmp.ge.s32.totalorder %v398, 0
          %vm400 = vcmp.lt.s32.totalorder %v398, 16
          %vm401 = vmand %vm399, %vm400
          %v402 = vld [vmem:[%s396] sm:$0xff]
          %v403 = vsel %vm401, %v402, 0.0
          %v404 = vmul.f32 %v403, %v403
          %v405 = vadd.f32 %v388, %v404
          %v406 = vadd.f32 %v389, %v404
          %s407 = scalar_lea.vmem %s396, 8
          %v408 = vld [vmem:[%s407] sm:$0xff]
          %v409 = vsel %vm401, %v408, 0.0
          %v410 = vmul.f32 %v409, %v409
          %v411 = vadd.f32 %v405, %v410
          %v412 = vadd.f32 %v406, %v410
          %v413 = vlaneseq
          %v414 = vand.u32 %v413, 127
          %v415 = vmov %v414
          %v416 = vlaneseq
          %v417 = vshrl.u32 %v416, 7
          %v418 = vmov %v417
          %s419 = smov [#allocation15]
          %v420 = vlaneseq
          %v421 = vand.u32 %v420, 127
          %vm422 = vcmp.ge.s32.totalorder %v421, 0
          %vm423 = vcmp.lt.s32.totalorder %v421, 16
          %vm424 = vmand %vm422, %vm423
          %v425 = vld [vmem:[%s419] sm:$0xff]
          %v426 = vsel %vm424, %v425, 0.0
          %v427 = vmul.f32 %v426, %v426
          %vm430 = vcmp.eq.s32.totalorder %v418, %v415
          %v431 = vsel %vm430, 0.0, %v427
          %v432 = vadd.f32 %v411, %v431
          %v433 = vadd.f32 %v412, %v427
          %s434 = scalar_lea.vmem %s419, 8
          %v435 = vld [vmem:[%s434] sm:$0xff]
          %v436 = vsel %vm424, %v435, 0.0
          %v437 = vmul.f32 %v436, %v436
          %v439 = vadd.s32 %v418, 8
          %vm440 = vcmp.eq.s32.totalorder %v439, %v415
          %v441 = vsel %vm440, 0.0, %v437
          %v442 = vadd.f32 %v432, %v441
          %v443 = vadd.f32 %v433, %v437
          %444 = vadd.xlane.f32.xlu0 %v443
          %v445 = vpop.xlane.xlu0 %444
          %v446 = vrot.slane %v445, 4
          %v447 = vadd.f32 %v445, %v446
          %v448 = vrot.slane %v447, 2
          %v449 = vadd.f32 %v447, %v448
          %v450 = vrot.slane %v449, 1
          %v451 = vadd.f32 %v449, %v450
          %452 = vadd.xlane.f32.xlu0 %v442
          %v453 = vpop.xlane.xlu0 %452
          %v454 = vrot.slane %v453, 4
          %v455 = vadd.f32 %v453, %v454
          %v456 = vrot.slane %v455, 2
          %v457 = vadd.f32 %v455, %v456
          %v458 = vrot.slane %v457, 1
          %v459 = vadd.f32 %v457, %v458
          %s460 = vtos %v459
          %s461 = vtos %v451
          %s462 = smul.f32 1e-10, %s461
          %p463 = scmp.le.f32.partialorder %s460, %s462
          %p464 = scmp.ge.s32.totalorder %s337, 15
          %p465 = por %p463, %p464
        $region99: #{custom-call.3} parent=95 // loop_header_branch
          %1237 = sbr.rel (%p465) target = $region103
        $region100: #{custom-call.3} parent=95 // loop_body
          loop: start=0, step=1, limit=31
          $region104: #{custom-call.3} parent=100 // loop_pre_header
            _
          $region105: #{custom-call.3} parent=100 // loop_header
            %s467 = sphi 0, %s471
            %p468 = scmp.ge.s32.totalorder %s467, 31
          $region106: #{custom-call.3} parent=100 // loop_header_branch
            %470 = sbr.rel (%p468) target = $region110
          $region107: #{custom-call.3} parent=100 // loop_body
            #allocation16 [shape = 'f32[1024]{0}', space=vmem, size = 0x1000, scoped, tag = 'a_tl_diag vmem']
            #allocation17 [shape = 'f32[1024]{0}', space=vmem, size = 0x1000, scoped, tag = 'a_tr_diag vmem']
            #allocation18 [shape = 'f32[1024]{0}', space=vmem, size = 0x1000, scoped, tag = 'a_br_diag vmem']
            #allocation19 [shape = 'f32[1024]{0}', space=vmem, size = 0x1000, scoped, tag = 'rt1 vmem']
            #allocation20 [shape = 'f32[1024]{0}', space=vmem, size = 0x1000, scoped, tag = 'rt2 vmem']
            #allocation21 [shape = 'f32[1024]{0}', space=vmem, size = 0x1000, scoped, tag = 'c vmem']
            #allocation22 [shape = 'f32[1024]{0}', space=vmem, size = 0x1000, scoped, tag = 's vmem']
            #allocation23 [shape = 'f32[8192]{0}', space=vmem, size = 0x8000, scoped, tag = 'c broadcast']
            #allocation24 [shape = 'f32[8192]{0}', space=vmem, size = 0x8000, scoped, tag = 's broadcast']
            %s472 = smov [#allocation12]
            %s473 = smov [#allocation16]
            %v474 = vlaneseq
            %v475 = vand.u32 %v474, 127
            %v476 = vmov %v475
            %v477 = vlaneseq
            %v478 = vshrl.u32 %v477, 7
            %v479 = vmov %v478
            %v480 = vld [vmem:[%s472] sm:$0xff]
            %vm483 = vcmp.eq.s32.totalorder %v479, %v476
            %v484 = vsel %vm483, %v480, 0.0
            %s485 = scalar_lea.vmem %s472, 8
            %v486 = vld [vmem:[%s485] sm:$0xff]
            %v488 = vadd.s32 %v479, 8
            %vm489 = vcmp.eq.s32.totalorder %v488, %v476
            %v490 = vsel %vm489, %v486, %v484
            %v491 = vrot.slane %v490, 4
            %v492 = vadd.f32 %v490, %v491
            %v493 = vrot.slane %v492, 2
            %v494 = vadd.f32 %v492, %v493
            %v495 = vrot.slane %v494, 1
            %v496 = vadd.f32 %v494, %v495
            %497 = vst [vmem:[%s473] sm:$0x1] %v496
            %s498 = smov [#allocation13]
            %s499 = smov [#allocation17]
            %v500 = vlaneseq
            %v501 = vand.u32 %v500, 127
            %v502 = vmov %v501
            %v503 = vlaneseq
            %v504 = vshrl.u32 %v503, 7
            %v505 = vmov %v504
            %v506 = vld [vmem:[%s498] sm:$0xff]
            %vm509 = vcmp.eq.s32.totalorder %v505, %v502
            %v510 = vsel %vm509, %v506, 0.0
            %s511 = scalar_lea.vmem %s498, 8
            %v512 = vld [vmem:[%s511] sm:$0xff]
            %v514 = vadd.s32 %v505, 8
            %vm515 = vcmp.eq.s32.totalorder %v514, %v502
            %v516 = vsel %vm515, %v512, %v510
            %v517 = vrot.slane %v516, 4
            %v518 = vadd.f32 %v516, %v517
            %v519 = vrot.slane %v518, 2
            %v520 = vadd.f32 %v518, %v519
            %v521 = vrot.slane %v520, 1
            %v522 = vadd.f32 %v520, %v521
            %523 = vst [vmem:[%s499] sm:$0x1] %v522
            %s524 = smov [#allocation15]
            %s525 = smov [#allocation18]
            %v526 = vlaneseq
            %v527 = vand.u32 %v526, 127
            %v528 = vmov %v527
            %v529 = vlaneseq
            %v530 = vshrl.u32 %v529, 7
            %v531 = vmov %v530
            %v532 = vld [vmem:[%s524] sm:$0xff]
            %vm535 = vcmp.eq.s32.totalorder %v531, %v528
            %v536 = vsel %vm535, %v532, 0.0
            %s537 = scalar_lea.vmem %s524, 8
            %v538 = vld [vmem:[%s537] sm:$0xff]
            %v540 = vadd.s32 %v531, 8
            %vm541 = vcmp.eq.s32.totalorder %v540, %v528
            %v542 = vsel %vm541, %v538, %v536
            %v543 = vrot.slane %v542, 4
            %v544 = vadd.f32 %v542, %v543
            %v545 = vrot.slane %v544, 2
            %v546 = vadd.f32 %v544, %v545
            %v547 = vrot.slane %v546, 1
            %v548 = vadd.f32 %v546, %v547
            %549 = vst [vmem:[%s525] sm:$0x1] %v548
            %s550 = smov [#allocation21]
            %s551 = smov [#allocation22]
            %s552 = smov [#allocation16]
            %v553 = vld [vmem:[%s552] sm:$0xff]
            %s554 = smov [#allocation17]
            %v555 = vld [vmem:[%s554] sm:$0xff]
            %s556 = smov [#allocation18]
            %v557 = vld [vmem:[%s556] sm:$0xff]
            %v558 = vsub.f32 %v557, %v553
            %v559 = vmul.f32 2.0, %v555
            %v560 = vrcp.pop %v559
            %v561 = vmul.f32 %v558, %v560
            %vm562 = vcmp.ge.f32.partialorder %v561, 0.0
            %v563 = vmul.f32 %v561, %v561
            %v564 = vadd.f32 1.0, %v563
            %v565 = vrsqrt.pop %v564
            %v566 = vmul.f32 %v564, %v565
            %vm567 = vcmp.eq.f32.partialorder %v564, inf
            %v568 = vsel %vm567, %v564, %v566
            %vm569 = vcmp.eq.f32.partialorder %v564, 0.0
            %v570 = vand.u32 %v564, 2147483648
            %v571 = vsel %vm569, %v570, %v568
            %v572 = vxor.u32 %v571, 2147483648
            %v573 = vsel %vm562, %v571, %v572
            %v574 = vadd.f32 %v561, %v573
            %v575 = vrcp.pop %v574
            %v576 = vand.u32 2147483647, %v553
            %v577 = vand.u32 2147483647, %v555
            %v578 = vand.u32 2147483647, %v557
            %v579 = vmin.f32 %v576, %v578
            %v580 = vmul.f32 1.1920929e-08, %v579
            %vm581 = vcmp.le.f32.partialorder %v577, %v580
            %v582 = vsel %vm581, 0.0, %v575
            %v583 = vmul.f32 %v582, %v582
            %v584 = vadd.f32 1.0, %v583
            %v585 = vrsqrt.pop %v584
            %v586 = vmul.f32 %v582, %v585
            %v587 = vmul.f32 %v582, %v555
            %v588 = vsub.f32 %v553, %v587
            %v589 = vmul.f32 %v582, %v555
            %v590 = vadd.f32 %v557, %v589
            %s591 = smov [#allocation19]
            %592 = vst [vmem:[%s591] sm:$0xff] %v588
            %s593 = smov [#allocation20]
            %594 = vst [vmem:[%s593] sm:$0xff] %v590
            %s595 = smov %s550
            %596 = vst [vmem:[%s595] sm:$0xff] %v585
            %s597 = smov %s551
            %598 = vst [vmem:[%s597] sm:$0xff] %v586
            %s599 = smov [#allocation21]
            %v600 = vld [vmem:[%s599] ss:$0 sm:$0xff]
            %v601 = vlaneseq
            %v602 = vand.u32 %v601, 127
            %v603 = vmov %v602
            %v604 = vlaneseq
            %v605 = vshrl.u32 %v604, 7
            %v606 = vmov %v605
            %vm608 = vcmp.eq.s32.totalorder %v606, %v603
            %v609 = vsel %vm608, %v600, 0.0
            %610 = vadd.xlane.f32.xlu0 %v609
            %v611 = vpop.xlane.xlu0 %610
            %s612 = smov [#allocation23]
            %613 = vst [vmem:[%s612] sm:$0xff] %v611
            %s614 = smov [#allocation21]
            %v615 = vld [vmem:[%s614] ss:$0 sm:$0xff]
            %v616 = vlaneseq
            %v617 = vand.u32 %v616, 127
            %v618 = vmov %v617
            %v619 = vlaneseq
            %v620 = vshrl.u32 %v619, 7
            %v621 = vmov %v620
            %v622 = vadd.s32 %v621, 8
            %vm623 = vcmp.eq.s32.totalorder %v622, %v618
            %v624 = vsel %vm623, %v615, 0.0
            %625 = vadd.xlane.f32.xlu0 %v624
            %v626 = vpop.xlane.xlu0 %625
            %s627 = smov [#allocation23]
            %s628 = scalar_lea.vmem %s627, 8
            %629 = vst [vmem:[%s628] sm:$0xff] %v626
            %s630 = smov [#allocation22]
            %v631 = vld [vmem:[%s630] ss:$0 sm:$0xff]
            %v632 = vlaneseq
            %v633 = vand.u32 %v632, 127
            %v634 = vmov %v633
            %v635 = vlaneseq
            %v636 = vshrl.u32 %v635, 7
            %v637 = vmov %v636
            %vm639 = vcmp.eq.s32.totalorder %v637, %v634
            %v640 = vsel %vm639, %v631, 0.0
            %641 = vadd.xlane.f32.xlu0 %v640
            %v642 = vpop.xlane.xlu0 %641
            %s643 = smov [#allocation24]
            %644 = vst [vmem:[%s643] sm:$0xff] %v642
            %s645 = smov [#allocation22]
            %v646 = vld [vmem:[%s645] ss:$0 sm:$0xff]
            %v647 = vlaneseq
            %v648 = vand.u32 %v647, 127
            %v649 = vmov %v648
            %v650 = vlaneseq
            %v651 = vshrl.u32 %v650, 7
            %v652 = vmov %v651
            %v653 = vadd.s32 %v652, 8
            %vm654 = vcmp.eq.s32.totalorder %v653, %v649
            %v655 = vsel %vm654, %v646, 0.0
            %656 = vadd.xlane.f32.xlu0 %v655
            %v657 = vpop.xlane.xlu0 %656
            %s658 = smov [#allocation24]
            %s659 = scalar_lea.vmem %s658, 8
            %660 = vst [vmem:[%s659] sm:$0xff] %v657
            %s661 = smov [#allocation23]
            %v662 = vld [vmem:[%s661] sm:$0xff]
            %s663 = smov [#allocation24]
            %v664 = vld [vmem:[%s663] sm:$0xff]
            %s665 = smov [#allocation12]
            %s666 = smov [#allocation13]
            %s667 = smov [#allocation14]
            %s668 = smov [#allocation15]
            %v669 = vld [vmem:[%s665] sm:$0xff]
            %v670 = vld [vmem:[%s666] sm:$0xff]
            %v671 = vld [vmem:[%s667] sm:$0xff]
            %v672 = vld [vmem:[%s668] sm:$0xff]
            %v673 = vmul.f32 %v662, %v669
            %v674 = vmul.f32 %v664, %v671
            %v675 = vsub.f32 %v673, %v674
            %v676 = vmul.f32 %v662, %v670
            %v677 = vmul.f32 %v664, %v672
            %v678 = vsub.f32 %v676, %v677
            %v679 = vmul.f32 %v664, %v669
            %v680 = vmul.f32 %v662, %v671
            %v681 = vadd.f32 %v679, %v680
            %v682 = vmul.f32 %v664, %v670
            %v683 = vmul.f32 %v662, %v672
            %v684 = vadd.f32 %v682, %v683
            %685 = vst [vmem:[%s665] sm:$0xff] %v675
            %686 = vst [vmem:[%s666] sm:$0xff] %v678
            %687 = vst [vmem:[%s667] sm:$0xff] %v681
            %688 = vst [vmem:[%s668] sm:$0xff] %v684
            %s689 = smov [#allocation23]
            %s690 = scalar_lea.vmem %s689, 8
            %v691 = vld [vmem:[%s690] sm:$0xff]
            %s692 = smov [#allocation24]
            %s693 = scalar_lea.vmem %s692, 8
            %v694 = vld [vmem:[%s693] sm:$0xff]
            %s695 = smov [#allocation12]
            %s696 = scalar_lea.vmem %s695, 8
            %s697 = smov [#allocation13]
            %s698 = scalar_lea.vmem %s697, 8
            %s699 = smov [#allocation14]
            %s700 = scalar_lea.vmem %s699, 8
            %s701 = smov [#allocation15]
            %s702 = scalar_lea.vmem %s701, 8
            %v703 = vld [vmem:[%s696] sm:$0xff]
            %v704 = vld [vmem:[%s698] sm:$0xff]
            %v705 = vld [vmem:[%s700] sm:$0xff]
            %v706 = vld [vmem:[%s702] sm:$0xff]
            %v707 = vmul.f32 %v691, %v703
            %v708 = vmul.f32 %v694, %v705
            %v709 = vsub.f32 %v707, %v708
            %v710 = vmul.f32 %v691, %v704
            %v711 = vmul.f32 %v694, %v706
            %v712 = vsub.f32 %v710, %v711
            %v713 = vmul.f32 %v694, %v703
            %v714 = vmul.f32 %v691, %v705
            %v715 = vadd.f32 %v713, %v714
            %v716 = vmul.f32 %v694, %v704
            %v717 = vmul.f32 %v691, %v706
            %v718 = vadd.f32 %v716, %v717
            %719 = vst [vmem:[%s696] sm:$0xff] %v709
            %720 = vst [vmem:[%s698] sm:$0xff] %v712
            %721 = vst [vmem:[%s700] sm:$0xff] %v715
            %722 = vst [vmem:[%s702] sm:$0xff] %v718
            %s723 = smov [#allocation21]
            %v724 = vld [vmem:[%s723] ss:$0 sm:$0xff]
            %s725 = smov [#allocation22]
            %v726 = vld [vmem:[%s725] ss:$0 sm:$0xff]
            %s727 = smov [#allocation12]
            %s728 = smov [#allocation13]
            %s729 = smov [#allocation14]
            %s730 = smov [#allocation15]
            %v731 = vld [vmem:[%s727] sm:$0xff]
            %v732 = vld [vmem:[%s728] sm:$0xff]
            %v733 = vld [vmem:[%s729] sm:$0xff]
            %v734 = vld [vmem:[%s730] sm:$0xff]
            %v735 = vmul.f32 %v724, %v731
            %v736 = vmul.f32 %v726, %v732
            %v737 = vsub.f32 %v735, %v736
            %v738 = vmul.f32 %v726, %v731
            %v739 = vmul.f32 %v724, %v732
            %v740 = vadd.f32 %v738, %v739
            %v741 = vmul.f32 %v724, %v733
            %v742 = vmul.f32 %v726, %v734
            %v743 = vsub.f32 %v741, %v742
            %v744 = vmul.f32 %v726, %v733
            %v745 = vmul.f32 %v724, %v734
            %v746 = vadd.f32 %v744, %v745
            %747 = vst [vmem:[%s727] sm:$0xff] %v737
            %748 = vst [vmem:[%s728] sm:$0xff] %v740
            %749 = vst [vmem:[%s729] sm:$0xff] %v743
            %750 = vst [vmem:[%s730] sm:$0xff] %v746
            %s751 = smov [#allocation12]
            %s752 = scalar_lea.vmem %s751, 8
            %s753 = smov [#allocation13]
            %s754 = scalar_lea.vmem %s753, 8
            %s755 = smov [#allocation14]
            %s756 = scalar_lea.vmem %s755, 8
            %s757 = smov [#allocation15]
            %s758 = scalar_lea.vmem %s757, 8
            %v759 = vld [vmem:[%s752] sm:$0xff]
            %v760 = vld [vmem:[%s754] sm:$0xff]
            %v761 = vld [vmem:[%s756] sm:$0xff]
            %v762 = vld [vmem:[%s758] sm:$0xff]
            %v763 = vmul.f32 %v724, %v759
            %v764 = vmul.f32 %v726, %v760
            %v765 = vsub.f32 %v763, %v764
            %v766 = vmul.f32 %v726, %v759
            %v767 = vmul.f32 %v724, %v760
            %v768 = vadd.f32 %v766, %v767
            %v769 = vmul.f32 %v724, %v761
            %v770 = vmul.f32 %v726, %v762
            %v771 = vsub.f32 %v769, %v770
            %v772 = vmul.f32 %v726, %v761
            %v773 = vmul.f32 %v724, %v762
            %v774 = vadd.f32 %v772, %v773
            %775 = vst [vmem:[%s752] sm:$0xff] %v765
            %776 = vst [vmem:[%s754] sm:$0xff] %v768
            %777 = vst [vmem:[%s756] sm:$0xff] %v771
            %778 = vst [vmem:[%s758] sm:$0xff] %v774
            %s779 = smov [#allocation12]
            %s780 = smov [#allocation19]
            %v781 = vlaneseq
            %v782 = vand.u32 %v781, 127
            %v783 = vmov %v782
            %v784 = vlaneseq
            %v785 = vshrl.u32 %v784, 7
            %v786 = vmov %v785
            %v787 = vld [vmem:[%s780] ss:$0 sm:$0xff]
            %v788 = vld [vmem:[%s779] sm:$0xff]
            %vm791 = vcmp.eq.s32.totalorder %v786, %v783
            %v792 = vsel %vm791, %v787, %v788
            %793 = vst [vmem:[%s779] sm:$0xff] %v792
            %v794 = vld [vmem:[%s780] ss:$0 sm:$0xff]
            %s795 = scalar_lea.vmem %s779, 8
            %v796 = vld [vmem:[%s795] sm:$0xff]
            %v798 = vadd.s32 %v786, 8
            %vm799 = vcmp.eq.s32.totalorder %v798, %v783
            %v800 = vsel %vm799, %v794, %v796
            %801 = vst [vmem:[%s795] sm:$0xff] %v800
            %s802 = smov [#allocation13]
            %v803 = vlaneseq
            %v804 = vand.u32 %v803, 127
            %v805 = vmov %v804
            %v806 = vlaneseq
            %v807 = vshrl.u32 %v806, 7
            %v808 = vmov %v807
            %v809 = vld [vmem:[%s802] sm:$0xff]
            %vm812 = vcmp.eq.s32.totalorder %v808, %v805
            %v813 = vsel %vm812, 0.0, %v809
            %814 = vst [vmem:[%s802] sm:$0xff] %v813
            %s815 = scalar_lea.vmem %s802, 8
            %v816 = vld [vmem:[%s815] sm:$0xff]
            %v818 = vadd.s32 %v808, 8
            %vm819 = vcmp.eq.s32.totalorder %v818, %v805
            %v820 = vsel %vm819, 0.0, %v816
            %821 = vst [vmem:[%s815] sm:$0xff] %v820
            %s822 = smov [#allocation14]
            %v823 = vlaneseq
            %v824 = vand.u32 %v823, 127
            %v825 = vmov %v824
            %v826 = vlaneseq
            %v827 = vshrl.u32 %v826, 7
            %v828 = vmov %v827
            %v829 = vld [vmem:[%s822] sm:$0xff]
            %vm832 = vcmp.eq.s32.totalorder %v828, %v825
            %v833 = vsel %vm832, 0.0, %v829
            %834 = vst [vmem:[%s822] sm:$0xff] %v833
            %s835 = scalar_lea.vmem %s822, 8
            %v836 = vld [vmem:[%s835] sm:$0xff]
            %v838 = vadd.s32 %v828, 8
            %vm839 = vcmp.eq.s32.totalorder %v838, %v825
            %v840 = vsel %vm839, 0.0, %v836
            %841 = vst [vmem:[%s835] sm:$0xff] %v840
            %s842 = smov [#allocation15]
            %s843 = smov [#allocation20]
            %v844 = vlaneseq
            %v845 = vand.u32 %v844, 127
            %v846 = vmov %v845
            %v847 = vlaneseq
            %v848 = vshrl.u32 %v847, 7
            %v849 = vmov %v848
            %v850 = vld [vmem:[%s843] ss:$0 sm:$0xff]
            %v851 = vld [vmem:[%s842] sm:$0xff]
            %vm854 = vcmp.eq.s32.totalorder %v849, %v846
            %v855 = vsel %vm854, %v850, %v851
            %856 = vst [vmem:[%s842] sm:$0xff] %v855
            %v857 = vld [vmem:[%s843] ss:$0 sm:$0xff]
            %s858 = scalar_lea.vmem %s842, 8
            %v859 = vld [vmem:[%s858] sm:$0xff]
            %v861 = vadd.s32 %v849, 8
            %vm862 = vcmp.eq.s32.totalorder %v861, %v846
            %v863 = vsel %vm862, %v857, %v859
            %864 = vst [vmem:[%s858] sm:$0xff] %v863
            %s865 = smov [#allocation12]
            %s866 = smov [#allocation13]
            %v867 = vld [vmem:[%s866] sm:$0xff]
            %868 = vrot.lane.b32.xlu0 %v867, 1
            %v869 = vpop.permute.xlu0 %868
            %v870 = vld [vmem:[%s865] sm:$0xff]
            %v871 = vld [vmem:[%s865] sm:$0xff]
            %872 = vrot.lane.b32.xlu0 %v871, 1
            %v873 = vpop.permute.xlu0 %872
            %v874 = vlaneseq
            %v875 = vand.u32 %v874, 127
            %vm876 = vcmp.eq.s32.totalorder %v875, 0
            %v877 = vsel %vm876, %v871, %v873
            %v878 = vlaneseq
            %v879 = vand.u32 %v878, 127
            %vm880 = vcmp.eq.s32.totalorder %v879, 1
            %v881 = vsel %vm880, %v869, %v877
            %v882 = vlaneseq
            %v883 = vand.u32 %v882, 127
            %vm884 = vcmp.ge.s32.totalorder %v883, 0
            %vm885 = vcmp.lt.s32.totalorder %v883, 16
            %vm886 = vmand %vm884, %vm885
            %v887 = vsel %vm886, %v881, 0.0
            %v888 = vld [vmem:[%s866] sm:$0xff]
            %889 = vrot.lane.b32.xlu0 %v888, 127
            %v890 = vpop.permute.xlu0 %889
            %v891 = vlaneseq
            %v892 = vand.u32 %v891, 127
            %vm893 = vcmp.eq.s32.totalorder %v892, 15
            %v894 = vsel %vm893, %v870, %v890
            %s895 = smov [#allocation12]
            %s896 = scalar_lea.vmem %s895, 8
            %s897 = smov [#allocation13]
            %s898 = scalar_lea.vmem %s897, 8
            %v899 = vld [vmem:[%s898] sm:$0xff]
            %900 = vrot.lane.b32.xlu0 %v899, 1
            %v901 = vpop.permute.xlu0 %900
            %v902 = vld [vmem:[%s896] sm:$0xff]
            %v903 = vld [vmem:[%s896] sm:$0xff]
            %904 = vrot.lane.b32.xlu0 %v903, 1
            %v905 = vpop.permute.xlu0 %904
            %v906 = vlaneseq
            %v907 = vand.u32 %v906, 127
            %vm908 = vcmp.eq.s32.totalorder %v907, 0
            %v909 = vsel %vm908, %v903, %v905
            %v910 = vlaneseq
            %v911 = vand.u32 %v910, 127
            %vm912 = vcmp.eq.s32.totalorder %v911, 1
            %v913 = vsel %vm912, %v901, %v909
            %v914 = vlaneseq
            %v915 = vand.u32 %v914, 127
            %vm916 = vcmp.ge.s32.totalorder %v915, 0
            %vm917 = vcmp.lt.s32.totalorder %v915, 16
            %vm918 = vmand %vm916, %vm917
            %v919 = vsel %vm918, %v913, 0.0
            %v920 = vld [vmem:[%s898] sm:$0xff]
            %921 = vrot.lane.b32.xlu0 %v920, 127
            %v922 = vpop.permute.xlu0 %921
            %v923 = vlaneseq
            %v924 = vand.u32 %v923, 127
            %vm925 = vcmp.eq.s32.totalorder %v924, 15
            %v926 = vsel %vm925, %v902, %v922
            %927 = vst [vmem:[%s865] sm:$0xff] %v887
            %928 = vst [vmem:[%s866] sm:$0xff] %v894
            %929 = vst [vmem:[%s896] sm:$0xff] %v919
            %930 = vst [vmem:[%s898] sm:$0xff] %v926
            %s931 = smov [#allocation14]
            %s932 = smov [#allocation15]
            %v933 = vld [vmem:[%s932] sm:$0xff]
            %934 = vrot.lane.b32.xlu0 %v933, 1
            %v935 = vpop.permute.xlu0 %934
            %v936 = vld [vmem:[%s931] sm:$0xff]
            %v937 = vld [vmem:[%s931] sm:$0xff]
            %938 = vrot.lane.b32.xlu0 %v937, 1
            %v939 = vpop.permute.xlu0 %938
            %v940 = vlaneseq
            %v941 = vand.u32 %v940, 127
            %vm942 = vcmp.eq.s32.totalorder %v941, 0
            %v943 = vsel %vm942, %v937, %v939
            %v944 = vlaneseq
            %v945 = vand.u32 %v944, 127
            %vm946 = vcmp.eq.s32.totalorder %v945, 1
            %v947 = vsel %vm946, %v935, %v943
            %v948 = vlaneseq
            %v949 = vand.u32 %v948, 127
            %vm950 = vcmp.ge.s32.totalorder %v949, 0
            %vm951 = vcmp.lt.s32.totalorder %v949, 16
            %vm952 = vmand %vm950, %vm951
            %v953 = vsel %vm952, %v947, 0.0
            %v954 = vld [vmem:[%s932] sm:$0xff]
            %955 = vrot.lane.b32.xlu0 %v954, 127
            %v956 = vpop.permute.xlu0 %955
            %v957 = vlaneseq
            %v958 = vand.u32 %v957, 127
            %vm959 = vcmp.eq.s32.totalorder %v958, 15
            %v960 = vsel %vm959, %v936, %v956
            %s961 = smov [#allocation14]
            %s962 = scalar_lea.vmem %s961, 8
            %s963 = smov [#allocation15]
            %s964 = scalar_lea.vmem %s963, 8
            %v965 = vld [vmem:[%s964] sm:$0xff]
            %966 = vrot.lane.b32.xlu0 %v965, 1
            %v967 = vpop.permute.xlu0 %966
            %v968 = vld [vmem:[%s962] sm:$0xff]
            %v969 = vld [vmem:[%s962] sm:$0xff]
            %970 = vrot.lane.b32.xlu0 %v969, 1
            %v971 = vpop.permute.xlu0 %970
            %v972 = vlaneseq
            %v973 = vand.u32 %v972, 127
            %vm974 = vcmp.eq.s32.totalorder %v973, 0
            %v975 = vsel %vm974, %v969, %v971
            %v976 = vlaneseq
            %v977 = vand.u32 %v976, 127
            %vm978 = vcmp.eq.s32.totalorder %v977, 1
            %v979 = vsel %vm978, %v967, %v975
            %v980 = vlaneseq
            %v981 = vand.u32 %v980, 127
            %vm982 = vcmp.ge.s32.totalorder %v981, 0
            %vm983 = vcmp.lt.s32.totalorder %v981, 16
            %vm984 = vmand %vm982, %vm983
            %v985 = vsel %vm984, %v979, 0.0
            %v986 = vld [vmem:[%s964] sm:$0xff]
            %987 = vrot.lane.b32.xlu0 %v986, 127
            %v988 = vpop.permute.xlu0 %987
            %v989 = vlaneseq
            %v990 = vand.u32 %v989, 127
            %vm991 = vcmp.eq.s32.totalorder %v990, 15
            %v992 = vsel %vm991, %v968, %v988
            %993 = vst [vmem:[%s931] sm:$0xff] %v953
            %994 = vst [vmem:[%s932] sm:$0xff] %v960
            %995 = vst [vmem:[%s962] sm:$0xff] %v985
            %996 = vst [vmem:[%s964] sm:$0xff] %v992
            %s997 = smov [#allocation12]
            %s998 = smov [#allocation14]
            %v999 = vld [vmem:[%s997] ss:$0 sm:$0xff]
            %s1001 = scalar_lea.vmem %s997, 4294967295
            %v1002 = vld [vmem:[%s1001] sm:$0xfe]
            %v1003 = vlaneseq
            %v1004 = vshrl.u32 %v1003, 7
            %vm1005 = vcmp.eq.s32.totalorder %v1004, 0
            %v1006 = vsel %vm1005, %v999, %v1002
            %s1007 = scalar_lea.vmem %s997, 7
            %v1008 = vld [vmem:[%s1007] ss:$0 sm:$0xff]
            %1009 = vst [vmem:[%s997] sm:$0xff] %v1006
            %s1010 = scalar_lea.vmem %s997, 8
            %s1012 = scalar_lea.vmem %s1010, 4294967295
            %v1013 = vld [vmem:[%s1012] sm:$0xfe]
            %v1014 = vlaneseq
            %v1015 = vshrl.u32 %v1014, 7
            %vm1016 = vcmp.eq.s32.totalorder %v1015, 0
            %v1017 = vsel %vm1016, %v1008, %v1013
            %s1018 = scalar_lea.vmem %s1010, 7
            %v1019 = vld [vmem:[%s1018] ss:$0 sm:$0xff]
            %1020 = vst [vmem:[%s1010] sm:$0xff] %v1017
            %v1021 = vld [vmem:[%s998] ss:$0 sm:$0xff]
            %s1022 = scalar_lea.vmem %s997, 1
            %1023 = vst [vmem:[%s1022] sm:$0x1] %v1021
            %s1024 = scalar_lea.vmem %s998, 8
            %s1025 = scalar_lea.vmem %s1024, 1
            %v1026 = vld [vmem:[%s1025] sm:$0x7f]
            %v1027 = vlaneseq
            %v1028 = vshrl.u32 %v1027, 7
            %vm1029 = vcmp.eq.s32.totalorder %v1028, 7
            %v1030 = vsel %vm1029, %v1019, %v1026
            %v1031 = vld [vmem:[%s1024] ss:$0 sm:$0xff]
            %1032 = vst [vmem:[%s1024] sm:$0xff] %v1030
            %s1033 = scalar_lea.vmem %s998, 1
            %v1034 = vld [vmem:[%s1033] sm:$0x7f]
            %v1035 = vlaneseq
            %v1036 = vshrl.u32 %v1035, 7
            %vm1037 = vcmp.eq.s32.totalorder %v1036, 7
            %v1038 = vsel %vm1037, %v1031, %v1034
            %v1039 = vld [vmem:[%s998] ss:$0 sm:$0xff]
            %1040 = vst [vmem:[%s998] sm:$0xff] %v1038
            %s1041 = smov [#allocation13]
            %s1042 = smov [#allocation15]
            %v1043 = vld [vmem:[%s1041] ss:$0 sm:$0xff]
            %s1045 = scalar_lea.vmem %s1041, 4294967295
            %v1046 = vld [vmem:[%s1045] sm:$0xfe]
            %v1047 = vlaneseq
            %v1048 = vshrl.u32 %v1047, 7
            %vm1049 = vcmp.eq.s32.totalorder %v1048, 0
            %v1050 = vsel %vm1049, %v1043, %v1046
            %s1051 = scalar_lea.vmem %s1041, 7
            %v1052 = vld [vmem:[%s1051] ss:$0 sm:$0xff]
            %1053 = vst [vmem:[%s1041] sm:$0xff] %v1050
            %s1054 = scalar_lea.vmem %s1041, 8
            %s1056 = scalar_lea.vmem %s1054, 4294967295
            %v1057 = vld [vmem:[%s1056] sm:$0xfe]
            %v1058 = vlaneseq
            %v1059 = vshrl.u32 %v1058, 7
            %vm1060 = vcmp.eq.s32.totalorder %v1059, 0
            %v1061 = vsel %vm1060, %v1052, %v1057
            %s1062 = scalar_lea.vmem %s1054, 7
            %v1063 = vld [vmem:[%s1062] ss:$0 sm:$0xff]
            %1064 = vst [vmem:[%s1054] sm:$0xff] %v1061
            %v1065 = vld [vmem:[%s1042] ss:$0 sm:$0xff]
            %s1066 = scalar_lea.vmem %s1041, 1
            %1067 = vst [vmem:[%s1066] sm:$0x1] %v1065
            %s1068 = scalar_lea.vmem %s1042, 8
            %s1069 = scalar_lea.vmem %s1068, 1
            %v1070 = vld [vmem:[%s1069] sm:$0x7f]
            %v1071 = vlaneseq
            %v1072 = vshrl.u32 %v1071, 7
            %vm1073 = vcmp.eq.s32.totalorder %v1072, 7
            %v1074 = vsel %vm1073, %v1063, %v1070
            %v1075 = vld [vmem:[%s1068] ss:$0 sm:$0xff]
            %1076 = vst [vmem:[%s1068] sm:$0xff] %v1074
            %s1077 = scalar_lea.vmem %s1042, 1
            %v1078 = vld [vmem:[%s1077] sm:$0x7f]
            %v1079 = vlaneseq
            %v1080 = vshrl.u32 %v1079, 7
            %vm1081 = vcmp.eq.s32.totalorder %v1080, 7
            %v1082 = vsel %vm1081, %v1075, %v1078
            %v1083 = vld [vmem:[%s1042] ss:$0 sm:$0xff]
            %1084 = vst [vmem:[%s1042] sm:$0xff] %v1082
            %s1085 = smov [#allocation23]
            %v1086 = vld [vmem:[%s1085] sm:$0xff]
            %s1087 = smov [#allocation24]
            %v1088 = vld [vmem:[%s1087] sm:$0xff]
            %s1089 = smov %s241
            %s1090 = smov %s245
            %s1091 = smov %s249
            %s1092 = smov %s253
            %v1093 = vld [vmem:[%s1089] sm:$0xff]
            %v1094 = vld [vmem:[%s1090] sm:$0xff]
            %v1095 = vld [vmem:[%s1091] sm:$0xff]
            %v1096 = vld [vmem:[%s1092] sm:$0xff]
            %v1097 = vmul.f32 %v1086, %v1093
            %v1098 = vmul.f32 %v1088, %v1095
            %v1099 = vsub.f32 %v1097, %v1098
            %v1100 = vmul.f32 %v1086, %v1094
            %v1101 = vmul.f32 %v1088, %v1096
            %v1102 = vsub.f32 %v1100, %v1101
            %v1103 = vmul.f32 %v1088, %v1093
            %v1104 = vmul.f32 %v1086, %v1095
            %v1105 = vadd.f32 %v1103, %v1104
            %v1106 = vmul.f32 %v1088, %v1094
            %v1107 = vmul.f32 %v1086, %v1096
            %v1108 = vadd.f32 %v1106, %v1107
            %1109 = vst [vmem:[%s1089] sm:$0xff] %v1099
            %1110 = vst [vmem:[%s1090] sm:$0xff] %v1102
            %1111 = vst [vmem:[%s1091] sm:$0xff] %v1105
            %1112 = vst [vmem:[%s1092] sm:$0xff] %v1108
            %s1113 = smov [#allocation23]
            %s1114 = scalar_lea.vmem %s1113, 8
            %v1115 = vld [vmem:[%s1114] sm:$0xff]
            %s1116 = smov [#allocation24]
            %s1117 = scalar_lea.vmem %s1116, 8
            %v1118 = vld [vmem:[%s1117] sm:$0xff]
            %s1119 = smov %s241
            %s1120 = scalar_lea.vmem %s1119, 8
            %s1121 = smov %s245
            %s1122 = scalar_lea.vmem %s1121, 8
            %s1123 = smov %s249
            %s1124 = scalar_lea.vmem %s1123, 8
            %s1125 = smov %s253
            %s1126 = scalar_lea.vmem %s1125, 8
            %v1127 = vld [vmem:[%s1120] sm:$0xff]
            %v1128 = vld [vmem:[%s1122] sm:$0xff]
            %v1129 = vld [vmem:[%s1124] sm:$0xff]
            %v1130 = vld [vmem:[%s1126] sm:$0xff]
            %v1131 = vmul.f32 %v1115, %v1127
            %v1132 = vmul.f32 %v1118, %v1129
            %v1133 = vsub.f32 %v1131, %v1132
            %v1134 = vmul.f32 %v1115, %v1128
            %v1135 = vmul.f32 %v1118, %v1130
            %v1136 = vsub.f32 %v1134, %v1135
            %v1137 = vmul.f32 %v1118, %v1127
            %v1138 = vmul.f32 %v1115, %v1129
            %v1139 = vadd.f32 %v1137, %v1138
            %v1140 = vmul.f32 %v1118, %v1128
            %v1141 = vmul.f32 %v1115, %v1130
            %v1142 = vadd.f32 %v1140, %v1141
            %1143 = vst [vmem:[%s1120] sm:$0xff] %v1133
            %1144 = vst [vmem:[%s1122] sm:$0xff] %v1136
            %1145 = vst [vmem:[%s1124] sm:$0xff] %v1139
            %1146 = vst [vmem:[%s1126] sm:$0xff] %v1142
            %s1147 = smov %s241
            %s1148 = smov %s249
            %v1149 = vld [vmem:[%s1147] ss:$0 sm:$0xff]
            %s1151 = scalar_lea.vmem %s1147, 4294967295
            %v1152 = vld [vmem:[%s1151] sm:$0xfe]
            %v1153 = vlaneseq
            %v1154 = vshrl.u32 %v1153, 7
            %vm1155 = vcmp.eq.s32.totalorder %v1154, 0
            %v1156 = vsel %vm1155, %v1149, %v1152
            %s1157 = scalar_lea.vmem %s1147, 7
            %v1158 = vld [vmem:[%s1157] ss:$0 sm:$0xff]
            %1159 = vst [vmem:[%s1147] sm:$0xff] %v1156
            %s1160 = scalar_lea.vmem %s1147, 8
            %s1162 = scalar_lea.vmem %s1160, 4294967295
            %v1163 = vld [vmem:[%s1162] sm:$0xfe]
            %v1164 = vlaneseq
            %v1165 = vshrl.u32 %v1164, 7
            %vm1166 = vcmp.eq.s32.totalorder %v1165, 0
            %v1167 = vsel %vm1166, %v1158, %v1163
            %s1168 = scalar_lea.vmem %s1160, 7
            %v1169 = vld [vmem:[%s1168] ss:$0 sm:$0xff]
            %1170 = vst [vmem:[%s1160] sm:$0xff] %v1167
            %v1171 = vld [vmem:[%s1148] ss:$0 sm:$0xff]
            %s1172 = scalar_lea.vmem %s1147, 1
            %1173 = vst [vmem:[%s1172] sm:$0x1] %v1171
            %s1174 = scalar_lea.vmem %s1148, 8
            %s1175 = scalar_lea.vmem %s1174, 1
            %v1176 = vld [vmem:[%s1175] sm:$0x7f]
            %v1177 = vlaneseq
            %v1178 = vshrl.u32 %v1177, 7
            %vm1179 = vcmp.eq.s32.totalorder %v1178, 7
            %v1180 = vsel %vm1179, %v1169, %v1176
            %v1181 = vld [vmem:[%s1174] ss:$0 sm:$0xff]
            %1182 = vst [vmem:[%s1174] sm:$0xff] %v1180
            %s1183 = scalar_lea.vmem %s1148, 1
            %v1184 = vld [vmem:[%s1183] sm:$0x7f]
            %v1185 = vlaneseq
            %v1186 = vshrl.u32 %v1185, 7
            %vm1187 = vcmp.eq.s32.totalorder %v1186, 7
            %v1188 = vsel %vm1187, %v1181, %v1184
            %v1189 = vld [vmem:[%s1148] ss:$0 sm:$0xff]
            %1190 = vst [vmem:[%s1148] sm:$0xff] %v1188
            %s1191 = smov %s245
            %s1192 = smov %s253
            %v1193 = vld [vmem:[%s1191] ss:$0 sm:$0xff]
            %s1195 = scalar_lea.vmem %s1191, 4294967295
            %v1196 = vld [vmem:[%s1195] sm:$0xfe]
            %v1197 = vlaneseq
            %v1198 = vshrl.u32 %v1197, 7
            %vm1199 = vcmp.eq.s32.totalorder %v1198, 0
            %v1200 = vsel %vm1199, %v1193, %v1196
            %s1201 = scalar_lea.vmem %s1191, 7
            %v1202 = vld [vmem:[%s1201] ss:$0 sm:$0xff]
            %1203 = vst [vmem:[%s1191] sm:$0xff] %v1200
            %s1204 = scalar_lea.vmem %s1191, 8
            %s1206 = scalar_lea.vmem %s1204, 4294967295
            %v1207 = vld [vmem:[%s1206] sm:$0xfe]
            %v1208 = vlaneseq
            %v1209 = vshrl.u32 %v1208, 7
            %vm1210 = vcmp.eq.s32.totalorder %v1209, 0
            %v1211 = vsel %vm1210, %v1202, %v1207
            %s1212 = scalar_lea.vmem %s1204, 7
            %v1213 = vld [vmem:[%s1212] ss:$0 sm:$0xff]
            %1214 = vst [vmem:[%s1204] sm:$0xff] %v1211
            %v1215 = vld [vmem:[%s1192] ss:$0 sm:$0xff]
            %s1216 = scalar_lea.vmem %s1191, 1
            %1217 = vst [vmem:[%s1216] sm:$0x1] %v1215
            %s1218 = scalar_lea.vmem %s1192, 8
            %s1219 = scalar_lea.vmem %s1218, 1
            %v1220 = vld [vmem:[%s1219] sm:$0x7f]
            %v1221 = vlaneseq
            %v1222 = vshrl.u32 %v1221, 7
            %vm1223 = vcmp.eq.s32.totalorder %v1222, 7
            %v1224 = vsel %vm1223, %v1213, %v1220
            %v1225 = vld [vmem:[%s1218] ss:$0 sm:$0xff]
            %1226 = vst [vmem:[%s1218] sm:$0xff] %v1224
            %s1227 = scalar_lea.vmem %s1192, 1
            %v1228 = vld [vmem:[%s1227] sm:$0x7f]
            %v1229 = vlaneseq
            %v1230 = vshrl.u32 %v1229, 7
            %vm1231 = vcmp.eq.s32.totalorder %v1230, 7
            %v1232 = vsel %vm1231, %v1225, %v1228
            %v1233 = vld [vmem:[%s1192] ss:$0 sm:$0xff]
            %1234 = vst [vmem:[%s1192] sm:$0xff] %v1232
          $region108: #{custom-call.3} parent=100 // loop_footer
            %s471 = sadd.s32 1, %s467
          $region109: #{custom-call.3} parent=100 // loop_footer_branch
            %466 = sbr.rel target = $region105
          $region110: #{custom-call.3} parent=100 // loop_exit
            _
          %s1235 = sadd.s32 %s337, 1
        $region101: #{custom-call.3} parent=95 // loop_footer
          _
        $region102: #{custom-call.3} parent=95 // loop_footer_branch
          %336 = sbr.rel target = $region98
        $region103: #{custom-call.3} parent=95 // loop_exit
          _
        %s1238 = sand.u32 %s17, 7
        %s1239 = scalar_lea.vmem [#allocation4], %s1238
        %s1240 = sand.u32 %s17, 7
        %s1241 = scalar_lea.vmem [#allocation6], %s1240
        %s1242 = smov [#allocation12]
        %s1243 = smov %s1239
        %v1244 = vlaneseq
        %v1245 = vand.u32 %v1244, 127
        %v1246 = vmov %v1245
        %v1247 = vlaneseq
        %v1248 = vshrl.u32 %v1247, 7
        %v1249 = vmov %v1248
        %v1250 = vld [vmem:[%s1242] sm:$0xff]
        %vm1253 = vcmp.eq.s32.totalorder %v1249, %v1246
        %v1254 = vsel %vm1253, %v1250, 0.0
        %s1255 = scalar_lea.vmem %s1242, 8
        %v1256 = vld [vmem:[%s1255] sm:$0xff]
        %v1258 = vadd.s32 %v1249, 8
        %vm1259 = vcmp.eq.s32.totalorder %v1258, %v1246
        %v1260 = vsel %vm1259, %v1256, %v1254
        %v1261 = vrot.slane %v1260, 4
        %v1262 = vadd.f32 %v1260, %v1261
        %v1263 = vrot.slane %v1262, 2
        %v1264 = vadd.f32 %v1262, %v1263
        %v1265 = vrot.slane %v1264, 1
        %v1266 = vadd.f32 %v1264, %v1265
        %1267 = vst [vmem:[%s1243] sm:$0x1] %v1266
        %s1268 = smov [#allocation15]
        %s1269 = smov %s1241
        %v1270 = vlaneseq
        %v1271 = vand.u32 %v1270, 127
        %v1272 = vmov %v1271
        %v1273 = vlaneseq
        %v1274 = vshrl.u32 %v1273, 7
        %v1275 = vmov %v1274
        %v1276 = vld [vmem:[%s1268] sm:$0xff]
        %vm1279 = vcmp.eq.s32.totalorder %v1275, %v1272
        %v1280 = vsel %vm1279, %v1276, 0.0
        %s1281 = scalar_lea.vmem %s1268, 8
        %v1282 = vld [vmem:[%s1281] sm:$0xff]
        %v1284 = vadd.s32 %v1275, 8
        %vm1285 = vcmp.eq.s32.totalorder %v1284, %v1272
        %v1286 = vsel %vm1285, %v1282, %v1280
        %v1287 = vrot.slane %v1286, 4
        %v1288 = vadd.f32 %v1286, %v1287
        %v1289 = vrot.slane %v1288, 2
        %v1290 = vadd.f32 %v1288, %v1289
        %v1291 = vrot.slane %v1290, 1
        %v1292 = vadd.f32 %v1290, %v1291
        %1293 = vst [vmem:[%s1269] sm:$0x1] %v1292
        %s1295 = sshllo.u32 0, 2
        %v1297 = vld [vmem:[#allocation4] sm:%s1295]
        %s1298 = sshllo.u32 0, 2
        %1299 = vst [vmem:[%s231] sm:%s1298] %v1297
        %s1301 = sshllo.u32 0, 2
        %v1303 = vld [vmem:[#allocation6] sm:%s1301]
        %s1304 = sshllo.u32 0, 2
        %1305 = vst [vmem:[%s237] sm:%s1304] %v1303
        %s1306 = sand.u32 %s27, 1
        %s1307 = sand.u32 %s27, 1
        %s1308 = smul.addr %s1307, 2
        %s1309 = scalar_lea.vmem [#allocation5], %s1308
        %s1310 = sand.u32 %s55, 1
        %s1311 = sand.u32 %s55, 1
        %s1312 = smul.addr %s1311, 2
        %s1313 = scalar_lea.vmem [#allocation7], %s1312
        %s1314 = sand.u32 %s17, 1
        %s1315 = sand.u32 %s17, 1
        %s1316 = smul.addr %s1315, 16
        %s1317 = scalar_lea.vmem [#allocation8], %s1316
        %s1318 = sand.u32 %s17, 1
        %s1319 = sand.u32 %s17, 1
        %s1320 = smul.addr %s1319, 16
        %s1321 = scalar_lea.vmem [#allocation9], %s1320
        %s1322 = sand.u32 %s17, 1
        %s1323 = sand.u32 %s17, 1
        %s1324 = smul.addr %s1323, 16
        %s1325 = scalar_lea.vmem [#allocation10], %s1324
        %s1326 = sand.u32 %s17, 1
        %s1327 = sand.u32 %s17, 1
        %s1328 = smul.addr %s1327, 16
        %s1329 = scalar_lea.vmem [#allocation11], %s1328
        // Predicated region
        $region111: #{custom-call.3} parent=95 // pred_check
          %p1330 = pneg %p37
        $region112: #{custom-call.3} parent=95 // pred_check_branch
          %1332 = sbr.rel (%p1330) target = $region114
        $region113: #{custom-call.3} parent=95 // pred_region
          %s1333 = sshrl.u32 %s17, 3
          %s1334 = smul.addr %s1333, 2
          %s1335 = scalar_lea.vmem %s4, %s1334
          // Predicated region
          $region115: #{custom-call.3} parent=113 // pred_check
            _
          $region116: #{custom-call.3} parent=113 // pred_check_branch
            %1337 = sbr.rel (0) target = $region118
          $region117: #{custom-call.3} parent=113 // pred_region
            // Predicated region
            $region119: #{custom-call.3} parent=117 // pred_check
              _
            $region120: #{custom-call.3} parent=117 // pred_check_branch
              %1339 = sbr.rel target = $region122
            $region121: #{custom-call.3} parent=117 // pred_region
              // Predicated region
              $region134: #{custom-call.3} parent=121 // pred_check
                _
              $region135: #{custom-call.3} parent=121 // pred_check_branch
                %1354 = sbr.rel (0) target = $region137
              $region136: #{custom-call.3} parent=121 // pred_region
                loop: start=0, step=1, limit=1
                $region138: #{custom-call.3} parent=136 // loop_pre_header
                  _
                $region139: #{custom-call.3} parent=136 // loop_header
                  %s1357 = sphi 0, %s1361
                  %p1358 = scmp.ge.s32.totalorder %s1357, 1
                  %s1362 = sphi %s1309, %s1309
                  %s1363 = sphi %s1335, %s1335
                $region140: #{custom-call.3} parent=136 // loop_header_branch
                  %1360 = sbr.rel (%p1358) target = $region144
                $region141: #{custom-call.3} parent=136 // loop_body
                  %v1364 = vld [vmem:[%s1362] sm:$0x3]
                  %1365 = vst [vmem:[%s1363] sm:$0x3] %v1364
                $region142: #{custom-call.3} parent=136 // loop_footer
                  %s1361 = sadd.s32 1, %s1357
                $region143: #{custom-call.3} parent=136 // loop_footer_branch
                  %1356 = sbr.rel target = $region139
                $region144: #{custom-call.3} parent=136 // loop_exit
                  _
              $region137: #{custom-call.3} parent=121 // pred_fallthru
                _
            $region122: #{custom-call.3} parent=117 // pred_fallthru
              _
            // Predicated region
            $region123: #{custom-call.3} parent=117 // pred_check
              _
            $region124: #{custom-call.3} parent=117 // pred_check_branch
              %1341 = sbr.rel (0) target = $region126
            $region125: #{custom-call.3} parent=117 // pred_region
              loop: start=0, step=1, limit=1
              $region127: #{custom-call.3} parent=125 // loop_pre_header
                _
              $region128: #{custom-call.3} parent=125 // loop_header
                %s1344 = sphi 0, %s1348
                %p1345 = scmp.ge.s32.totalorder %s1344, 1
                %s1349 = sphi %s1309, %s1309
                %s1350 = sphi %s1335, %s1335
              $region129: #{custom-call.3} parent=125 // loop_header_branch
                %1347 = sbr.rel (%p1345) target = $region133
              $region130: #{custom-call.3} parent=125 // loop_body
                %v1351 = vld [vmem:[%s1349] sm:$0x3]
                %1352 = vst [vmem:[%s1350] sm:$0x3] %v1351
              $region131: #{custom-call.3} parent=125 // loop_footer
                %s1348 = sadd.s32 1, %s1344
              $region132: #{custom-call.3} parent=125 // loop_footer_branch
                %1343 = sbr.rel target = $region128
              $region133: #{custom-call.3} parent=125 // loop_exit
                _
            $region126: #{custom-call.3} parent=117 // pred_fallthru
              _
          $region118: #{custom-call.3} parent=113 // pred_fallthru
            _
          %1366 = vnop
        $region114: #{custom-call.3} parent=95 // pred_fallthru
          _
        // Predicated region
        $region145: #{custom-call.3} parent=95 // pred_check
          %p1367 = pneg %p65
        $region146: #{custom-call.3} parent=95 // pred_check_branch
          %1369 = sbr.rel (%p1367) target = $region148
        $region147: #{custom-call.3} parent=95 // pred_region
          %s1370 = sshrl.u32 %s17, 3
          %s1371 = smul.addr %s1370, 2
          %s1372 = scalar_lea.vmem %s5, %s1371
          // Predicated region
          $region149: #{custom-call.3} parent=147 // pred_check
            _
          $region150: #{custom-call.3} parent=147 // pred_check_branch
            %1374 = sbr.rel (0) target = $region152
          $region151: #{custom-call.3} parent=147 // pred_region
            // Predicated region
            $region153: #{custom-call.3} parent=151 // pred_check
              _
            $region154: #{custom-call.3} parent=151 // pred_check_branch
              %1376 = sbr.rel target = $region156
            $region155: #{custom-call.3} parent=151 // pred_region
              // Predicated region
              $region168: #{custom-call.3} parent=155 // pred_check
                _
              $region169: #{custom-call.3} parent=155 // pred_check_branch
                %1391 = sbr.rel (0) target = $region171
              $region170: #{custom-call.3} parent=155 // pred_region
                loop: start=0, step=1, limit=1
                $region172: #{custom-call.3} parent=170 // loop_pre_header
                  _
                $region173: #{custom-call.3} parent=170 // loop_header
                  %s1394 = sphi 0, %s1398
                  %p1395 = scmp.ge.s32.totalorder %s1394, 1
                  %s1399 = sphi %s1313, %s1313
                  %s1400 = sphi %s1372, %s1372
                $region174: #{custom-call.3} parent=170 // loop_header_branch
                  %1397 = sbr.rel (%p1395) target = $region178
                $region175: #{custom-call.3} parent=170 // loop_body
                  %v1401 = vld [vmem:[%s1399] sm:$0x3]
                  %1402 = vst [vmem:[%s1400] sm:$0x3] %v1401
                $region176: #{custom-call.3} parent=170 // loop_footer
                  %s1398 = sadd.s32 1, %s1394
                $region177: #{custom-call.3} parent=170 // loop_footer_branch
                  %1393 = sbr.rel target = $region173
                $region178: #{custom-call.3} parent=170 // loop_exit
                  _
              $region171: #{custom-call.3} parent=155 // pred_fallthru
                _
            $region156: #{custom-call.3} parent=151 // pred_fallthru
              _
            // Predicated region
            $region157: #{custom-call.3} parent=151 // pred_check
              _
            $region158: #{custom-call.3} parent=151 // pred_check_branch
              %1378 = sbr.rel (0) target = $region160
            $region159: #{custom-call.3} parent=151 // pred_region
              loop: start=0, step=1, limit=1
              $region161: #{custom-call.3} parent=159 // loop_pre_header
                _
              $region162: #{custom-call.3} parent=159 // loop_header
                %s1381 = sphi 0, %s1385
                %p1382 = scmp.ge.s32.totalorder %s1381, 1
                %s1386 = sphi %s1313, %s1313
                %s1387 = sphi %s1372, %s1372
              $region163: #{custom-call.3} parent=159 // loop_header_branch
                %1384 = sbr.rel (%p1382) target = $region167
              $region164: #{custom-call.3} parent=159 // loop_body
                %v1388 = vld [vmem:[%s1386] sm:$0x3]
                %1389 = vst [vmem:[%s1387] sm:$0x3] %v1388
              $region165: #{custom-call.3} parent=159 // loop_footer
                %s1385 = sadd.s32 1, %s1381
              $region166: #{custom-call.3} parent=159 // loop_footer_branch
                %1380 = sbr.rel target = $region162
              $region167: #{custom-call.3} parent=159 // loop_exit
                _
            $region160: #{custom-call.3} parent=151 // pred_fallthru
              _
          $region152: #{custom-call.3} parent=147 // pred_fallthru
            _
          %1403 = vnop
        $region148: #{custom-call.3} parent=95 // pred_fallthru
          _
        %s1404 = smul.addr %s17, 16
        %s1405 = scalar_lea.vmem %s6, %s1404
        // Predicated region
        $region179: #{custom-call.3} parent=95 // pred_check
          _
        $region180: #{custom-call.3} parent=95 // pred_check_branch
          %1407 = sbr.rel (0) target = $region182
        $region181: #{custom-call.3} parent=95 // pred_region
          // Predicated region
          $region183: #{custom-call.3} parent=181 // pred_check
            _
          $region184: #{custom-call.3} parent=181 // pred_check_branch
            %1409 = sbr.rel (0) target = $region186
          $region185: #{custom-call.3} parent=181 // pred_region
            loop: start=0, step=1, limit=1
            $region187: #{custom-call.3} parent=185 // loop_pre_header
              _
            $region188: #{custom-call.3} parent=185 // loop_header
              %s1411 = sphi 0, %s1415
              %p1412 = scmp.ge.s32.totalorder %s1411, 1
              %s1416 = sphi %s1317, %s1317
              %s1417 = sphi %s1405, %s1405
            $region189: #{custom-call.3} parent=185 // loop_header_branch
              %1414 = sbr.rel (%p1412) target = $region193
            $region190: #{custom-call.3} parent=185 // loop_body
              %v1418 = vld [vmem:[%s1416] sm:$0xff]
              %1419 = vst [vmem:[%s1417] sm:$0xff] %v1418
              %v1420 = vld [vmem:[%s1416 + $0x8] sm:$0xff]
              %1421 = vst [vmem:[%s1417 + $0x8] sm:$0xff] %v1420
            $region191: #{custom-call.3} parent=185 // loop_footer
              %s1415 = sadd.s32 1, %s1411
            $region192: #{custom-call.3} parent=185 // loop_footer_branch
              %1410 = sbr.rel target = $region188
            $region193: #{custom-call.3} parent=185 // loop_exit
              _
          $region186: #{custom-call.3} parent=181 // pred_fallthru
            _
          // Predicated region
          $region194: #{custom-call.3} parent=181 // pred_check
            _
          $region195: #{custom-call.3} parent=181 // pred_check_branch
            %1423 = sbr.rel target = $region197
          $region196: #{custom-call.3} parent=181 // pred_region
            _
          $region197: #{custom-call.3} parent=181 // pred_fallthru
            _
        $region182: #{custom-call.3} parent=95 // pred_fallthru
          _
        %1424 = vnop
        %s1425 = smul.addr %s17, 16
        %s1426 = scalar_lea.vmem %s7, %s1425
        // Predicated region
        $region198: #{custom-call.3} parent=95 // pred_check
          _
        $region199: #{custom-call.3} parent=95 // pred_check_branch
          %1428 = sbr.rel (0) target = $region201
        $region200: #{custom-call.3} parent=95 // pred_region
          // Predicated region
          $region202: #{custom-call.3} parent=200 // pred_check
            _
          $region203: #{custom-call.3} parent=200 // pred_check_branch
            %1430 = sbr.rel (0) target = $region205
          $region204: #{custom-call.3} parent=200 // pred_region
            loop: start=0, step=1, limit=1
            $region206: #{custom-call.3} parent=204 // loop_pre_header
              _
            $region207: #{custom-call.3} parent=204 // loop_header
              %s1432 = sphi 0, %s1436
              %p1433 = scmp.ge.s32.totalorder %s1432, 1
              %s1437 = sphi %s1321, %s1321
              %s1438 = sphi %s1426, %s1426
            $region208: #{custom-call.3} parent=204 // loop_header_branch
              %1435 = sbr.rel (%p1433) target = $region212
            $region209: #{custom-call.3} parent=204 // loop_body
              %v1439 = vld [vmem:[%s1437] sm:$0xff]
              %1440 = vst [vmem:[%s1438] sm:$0xff] %v1439
              %v1441 = vld [vmem:[%s1437 + $0x8] sm:$0xff]
              %1442 = vst [vmem:[%s1438 + $0x8] sm:$0xff] %v1441
            $region210: #{custom-call.3} parent=204 // loop_footer
              %s1436 = sadd.s32 1, %s1432
            $region211: #{custom-call.3} parent=204 // loop_footer_branch
              %1431 = sbr.rel target = $region207
            $region212: #{custom-call.3} parent=204 // loop_exit
              _
          $region205: #{custom-call.3} parent=200 // pred_fallthru
            _
          // Predicated region
          $region213: #{custom-call.3} parent=200 // pred_check
            _
          $region214: #{custom-call.3} parent=200 // pred_check_branch
            %1444 = sbr.rel target = $region216
          $region215: #{custom-call.3} parent=200 // pred_region
            _
          $region216: #{custom-call.3} parent=200 // pred_fallthru
            _
        $region201: #{custom-call.3} parent=95 // pred_fallthru
          _
        %1445 = vnop
        %s1446 = smul.addr %s17, 16
        %s1447 = scalar_lea.vmem %s8, %s1446
        // Predicated region
        $region217: #{custom-call.3} parent=95 // pred_check
          _
        $region218: #{custom-call.3} parent=95 // pred_check_branch
          %1449 = sbr.rel (0) target = $region220
        $region219: #{custom-call.3} parent=95 // pred_region
          // Predicated region
          $region221: #{custom-call.3} parent=219 // pred_check
            _
          $region222: #{custom-call.3} parent=219 // pred_check_branch
            %1451 = sbr.rel (0) target = $region224
          $region223: #{custom-call.3} parent=219 // pred_region
            loop: start=0, step=1, limit=1
            $region225: #{custom-call.3} parent=223 // loop_pre_header
              _
            $region226: #{custom-call.3} parent=223 // loop_header
              %s1453 = sphi 0, %s1457
              %p1454 = scmp.ge.s32.totalorder %s1453, 1
              %s1458 = sphi %s1325, %s1325
              %s1459 = sphi %s1447, %s1447
            $region227: #{custom-call.3} parent=223 // loop_header_branch
              %1456 = sbr.rel (%p1454) target = $region231
            $region228: #{custom-call.3} parent=223 // loop_body
              %v1460 = vld [vmem:[%s1458] sm:$0xff]
              %1461 = vst [vmem:[%s1459] sm:$0xff] %v1460
              %v1462 = vld [vmem:[%s1458 + $0x8] sm:$0xff]
              %1463 = vst [vmem:[%s1459 + $0x8] sm:$0xff] %v1462
            $region229: #{custom-call.3} parent=223 // loop_footer
              %s1457 = sadd.s32 1, %s1453
            $region230: #{custom-call.3} parent=223 // loop_footer_branch
              %1452 = sbr.rel target = $region226
            $region231: #{custom-call.3} parent=223 // loop_exit
              _
          $region224: #{custom-call.3} parent=219 // pred_fallthru
            _
          // Predicated region
          $region232: #{custom-call.3} parent=219 // pred_check
            _
          $region233: #{custom-call.3} parent=219 // pred_check_branch
            %1465 = sbr.rel target = $region235
          $region234: #{custom-call.3} parent=219 // pred_region
            _
          $region235: #{custom-call.3} parent=219 // pred_fallthru
            _
        $region220: #{custom-call.3} parent=95 // pred_fallthru
          _
        %1466 = vnop
        %s1467 = smul.addr %s17, 16
        %s1468 = scalar_lea.vmem %s9, %s1467
        // Predicated region
        $region236: #{custom-call.3} parent=95 // pred_check
          _
        $region237: #{custom-call.3} parent=95 // pred_check_branch
          %1470 = sbr.rel (0) target = $region239
        $region238: #{custom-call.3} parent=95 // pred_region
          // Predicated region
          $region240: #{custom-call.3} parent=238 // pred_check
            _
          $region241: #{custom-call.3} parent=238 // pred_check_branch
            %1472 = sbr.rel (0) target = $region243
          $region242: #{custom-call.3} parent=238 // pred_region
            loop: start=0, step=1, limit=1
            $region244: #{custom-call.3} parent=242 // loop_pre_header
              _
            $region245: #{custom-call.3} parent=242 // loop_header
              %s1474 = sphi 0, %s1478
              %p1475 = scmp.ge.s32.totalorder %s1474, 1
              %s1479 = sphi %s1329, %s1329
              %s1480 = sphi %s1468, %s1468
            $region246: #{custom-call.3} parent=242 // loop_header_branch
              %1477 = sbr.rel (%p1475) target = $region250
            $region247: #{custom-call.3} parent=242 // loop_body
              %v1481 = vld [vmem:[%s1479] sm:$0xff]
              %1482 = vst [vmem:[%s1480] sm:$0xff] %v1481
              %v1483 = vld [vmem:[%s1479 + $0x8] sm:$0xff]
              %1484 = vst [vmem:[%s1480 + $0x8] sm:$0xff] %v1483
            $region248: #{custom-call.3} parent=242 // loop_footer
              %s1478 = sadd.s32 1, %s1474
            $region249: #{custom-call.3} parent=242 // loop_footer_branch
              %1473 = sbr.rel target = $region245
            $region250: #{custom-call.3} parent=242 // loop_exit
              _
          $region243: #{custom-call.3} parent=238 // pred_fallthru
            _
          // Predicated region
          $region251: #{custom-call.3} parent=238 // pred_check
            _
          $region252: #{custom-call.3} parent=238 // pred_check_branch
            %1486 = sbr.rel target = $region254
          $region253: #{custom-call.3} parent=238 // pred_region
            _
          $region254: #{custom-call.3} parent=238 // pred_fallthru
            _
        $region239: #{custom-call.3} parent=95 // pred_fallthru
          _
        %1487 = vnop
      $region96: #{custom-call.3} parent=5 // pred_fallthru
        _
      %p1488 = scmp.le.s32.totalorder 2, %s12
      // Predicated region
      $region255: #{custom-call.3} parent=5 // pred_check
        %p1489 = pneg %p1488
      $region256: #{custom-call.3} parent=5 // pred_check_branch
        %1491 = sbr.rel (%p1489) target = $region258
      $region257: #{custom-call.3} parent=5 // pred_region
        %s1492 = ssub.s32 %s12, 2
        // Predicated region
        $region259: #{custom-call.3} parent=257 // pred_check
          %p1493 = pneg %p43
        $region260: #{custom-call.3} parent=257 // pred_check_branch
          %1495 = sbr.rel (%p1493) target = $region262
        $region261: #{custom-call.3} parent=257 // pred_region
          %s1496 = sand.u32 %s28, 1
          %s1497 = sand.u32 %s28, 1
          %s1498 = smul.addr %s1497, 2
          %s1499 = scalar_lea.vmem [#allocation5], %s1498
        $region262: #{custom-call.3} parent=257 // pred_fallthru
          _
        // Predicated region
        $region263: #{custom-call.3} parent=257 // pred_check
          %p1500 = pneg %p71
        $region264: #{custom-call.3} parent=257 // pred_check_branch
          %1502 = sbr.rel (%p1500) target = $region266
        $region265: #{custom-call.3} parent=257 // pred_region
          %s1503 = sand.u32 %s56, 1
          %s1504 = sand.u32 %s56, 1
          %s1505 = smul.addr %s1504, 2
          %s1506 = scalar_lea.vmem [#allocation7], %s1505
        $region266: #{custom-call.3} parent=257 // pred_fallthru
          _
        %s1507 = sand.u32 %s18, 1
        %s1508 = sand.u32 %s18, 1
        %s1509 = smul.addr %s1508, 16
        %s1510 = scalar_lea.vmem [#allocation8], %s1509
        %s1511 = sand.u32 %s18, 1
        %s1512 = sand.u32 %s18, 1
        %s1513 = smul.addr %s1512, 16
        %s1514 = scalar_lea.vmem [#allocation9], %s1513
        %s1515 = sand.u32 %s18, 1
        %s1516 = sand.u32 %s18, 1
        %s1517 = smul.addr %s1516, 16
        %s1518 = scalar_lea.vmem [#allocation10], %s1517
        %s1519 = sand.u32 %s18, 1
        %s1520 = sand.u32 %s18, 1
        %s1521 = smul.addr %s1520, 16
        %s1522 = scalar_lea.vmem [#allocation11], %s1521
      $region258: #{custom-call.3} parent=5 // pred_fallthru
        _
    $region6: #{custom-call.3} parent=1 // loop_footer
      %s16 = sadd.s32 1, %s12
    $region7: #{custom-call.3} parent=1 // loop_footer_branch
      %11 = sbr.rel target = $region3
    $region8: #{custom-call.3} parent=1 // loop_exit
      _

// kernel: savanet_forward.2
$region0: #{savanet_forward.2}
  #allocation0 [shape = 'u32[]', space=smem, size = 0x4, offset = 0x4, fixed_abs, tag = 'smem constant byte address 0x4 - core index']
  #allocation1 [shape = 'u32[144,128]{1,0:T(1,128)}', space=vmem, size = 0x12000, scoped, tag = 'internal scratch']
  #allocation2 [shape = 'f32[1,256]{1,0:T(1,128)}', space=vmem, size = 0x400, scoped, tag = 'scratch operand']
  %s0 = inlined_call_operand.vmem [shape: bf16[4,256,32], index: 0, kind: input, shape index: {}]
  %s1 = inlined_call_operand.vmem [shape: bf16[4,32,256], index: 1, kind: input, shape index: {}]
  %s2 = inlined_call_operand.vmem [shape: f32[4,1,256], index: 2, kind: output, shape index: {}]
  %s3 = sld [smem:[#allocation0]]
  $region49: #{savanet_forward.2} parent=0
    _
  %s5 = ssub.s32 1, %s3
  %s6 = scalar_select 0, %s5, %s3
  loop: start=0, step=1, limit=10
  $region2: #{savanet_forward.2} parent=0 // loop_pre_header
    _
  $region3: #{savanet_forward.2} parent=0 // loop_header
    %s8 = sphi 0, %s12
    %p9 = scmp.ge.s32.totalorder %s8, 10
    %s15 = sphi 0, %s27
    %s16 = sphi 0, %s23
    %s17 = sphi 0, %s15
    %s18 = sphi 0, %s16
    %s19 = sphi 0, %s17
    %s20 = sphi 0, %s18
    %s32 = sphi 0, %s34
    %s35 = sphi 0, %s32
    %s36 = sphi 0, %s35
    %s52 = sphi 0, %s36
    %s58 = sphi 0, %s60
    %s61 = sphi 0, %s58
    %s62 = sphi 0, %s61
    %s78 = sphi 0, %s62
    %s84 = sphi 0, %s86
    %s87 = sphi 0, %s84
    %s88 = sphi 0, %s87
    %s104 = sphi 0, %s88
  $region4: #{savanet_forward.2} parent=0 // loop_header_branch
    %11 = sbr.rel (%p9) target = $region8
  $region5: #{savanet_forward.2} parent=0 // loop_body
    %s13 = ssub.s32 %s8, 1
    %s14 = ssub.s32 %s8, 2
    %s21 = sadd.s32 1, %s16
    %p22 = scmp.ge.s32.totalorder %s21, 2
    %s23 = scalar_select %p22, 0, %s21
    %s24 = sadd.s32 1, %s15
    %s25 = scalar_select %p22, %s24, %s15
    %p26 = scmp.ge.s32.totalorder %s25, 4
    %s27 = scalar_select %p26, 0, %s25
    %s28 = ssub.s32 %s15, %s27
    %s29 = ssub.s32 %s16, %s23
    %s30 = sor.u32 %s28, %s29
    %p31 = scmp.eq.s32.totalorder %s30, 0
    %s33 = sadd.s32 %s32, 1
    %s34 = scalar_select %p31, %s32, %s33
    %p37 = pneg %p31
    %p38 = scmp.eq.s32.totalorder %s8, 7
    %p39 = por %p37, %p38
    %p40 = scmp.ne.s32.totalorder %s32, %s35
    %p41 = scmp.eq.s32.totalorder %s8, 0
    %p42 = por %p40, %p41
    %p43 = scmp.ne.s32.totalorder %s32, %s35
    %p44 = scmp.eq.s32.totalorder %s13, 7
    %p45 = por %p43, %p44
    %p46 = scmp.ne.s32.totalorder %s35, %s36
    %p47 = scmp.eq.s32.totalorder %s13, 0
    %p48 = por %p46, %p47
    %p49 = scmp.ne.s32.totalorder %s35, %s36
    %p50 = scmp.eq.s32.totalorder %s14, 7
    %p51 = por %p49, %p50
    %p53 = scmp.ne.s32.totalorder %s36, %s52
    %p54 = scmp.eq.s32.totalorder %s14, 0
    %p55 = por %p53, %p54
    %s56 = ssub.s32 %s15, %s27
    %p57 = scmp.eq.s32.totalorder %s56, 0
    %s59 = sadd.s32 %s58, 1
    %s60 = scalar_select %p57, %s58, %s59
    %p63 = pneg %p57
    %p64 = scmp.eq.s32.totalorder %s8, 7
    %p65 = por %p63, %p64
    %p66 = scmp.ne.s32.totalorder %s58, %s61
    %p67 = scmp.eq.s32.totalorder %s8, 0
    %p68 = por %p66, %p67
    %p69 = scmp.ne.s32.totalorder %s58, %s61
    %p70 = scmp.eq.s32.totalorder %s13, 7
    %p71 = por %p69, %p70
    %p72 = scmp.ne.s32.totalorder %s61, %s62
    %p73 = scmp.eq.s32.totalorder %s13, 0
    %p74 = por %p72, %p73
    %p75 = scmp.ne.s32.totalorder %s61, %s62
    %p76 = scmp.eq.s32.totalorder %s14, 7
    %p77 = por %p75, %p76
    %p79 = scmp.ne.s32.totalorder %s62, %s78
    %p80 = scmp.eq.s32.totalorder %s14, 0
    %p81 = por %p79, %p80
    %s82 = ssub.s32 %s15, %s27
    %p83 = scmp.eq.s32.totalorder %s82, 0
    %s85 = sadd.s32 %s84, 1
    %s86 = scalar_select %p83, %s84, %s85
    %p89 = pneg %p83
    %p90 = scmp.eq.s32.totalorder %s8, 7
    %p91 = por %p89, %p90
    %p92 = scmp.ne.s32.totalorder %s84, %s87
    %p93 = scmp.eq.s32.totalorder %s8, 0
    %p94 = por %p92, %p93
    %p95 = scmp.ne.s32.totalorder %s84, %s87
    %p96 = scmp.eq.s32.totalorder %s13, 7
    %p97 = por %p95, %p96
    %p98 = scmp.ne.s32.totalorder %s87, %s88
    %p99 = scmp.eq.s32.totalorder %s13, 0
    %p100 = por %p98, %p99
    %p101 = scmp.ne.s32.totalorder %s87, %s88
    %p102 = scmp.eq.s32.totalorder %s14, 7
    %p103 = por %p101, %p102
    %p105 = scmp.ne.s32.totalorder %s88, %s104
    %p106 = scmp.eq.s32.totalorder %s14, 0
    %p107 = por %p105, %p106
    %p108 = scmp.le.s32.totalorder 1, %s8
    %p109 = scmp.lt.s32.totalorder %s8, 9
    %p110 = pnand %p108, %p109
    %p111 = pneg %p110
    // Predicated region
    $region9: #{savanet_forward.2} parent=5 // pred_check
      _
    $region10: #{savanet_forward.2} parent=5 // pred_check_branch
      %113 = sbr.rel (%p110) target = $region12
    $region11: #{savanet_forward.2} parent=5 // pred_region
      %s114 = ssub.s32 %s8, 1
    $region12: #{savanet_forward.2} parent=5 // pred_fallthru
      _
    %p115 = scmp.lt.s32.totalorder %s8, 8
    // Predicated region
    $region13: #{savanet_forward.2} parent=5 // pred_check
      %p116 = pneg %p115
    $region14: #{savanet_forward.2} parent=5 // pred_check_branch
      %118 = sbr.rel (%p116) target = $region16
    $region15: #{savanet_forward.2} parent=5 // pred_region
      // Predicated region
      $region17: #{savanet_forward.2} parent=15 // pred_check
        %p119 = pneg %p42
      $region18: #{savanet_forward.2} parent=15 // pred_check_branch
        %121 = sbr.rel (%p119) target = $region20
      $region19: #{savanet_forward.2} parent=15 // pred_region
        %s122 = smul.u32 16, %s16
        %p123 = scmp.lt.s32.totalorder %s15, 3
        %s124 = scalar_select %p123, %s15, 3
        %p125 = scmp.lt.s32.totalorder %s122, 31
        %s126 = scalar_select %p125, %s122, 31
        %s127 = smul.addr %s124, 32
        %s128 = sadd.s32 %s126, %s127
        %s129 = smul.addr %s128, 4
        %s130 = scalar_lea.vmem %s0, %s129
        %s131 = smul.u32 16, %s16
      $region20: #{savanet_forward.2} parent=15 // pred_fallthru
        _
      // Predicated region
      $region21: #{savanet_forward.2} parent=15 // pred_check
        %p132 = pneg %p68
      $region22: #{savanet_forward.2} parent=15 // pred_check_branch
        %134 = sbr.rel (%p132) target = $region24
      $region23: #{savanet_forward.2} parent=15 // pred_region
        %p135 = scmp.lt.s32.totalorder %s15, 3
        %s136 = scalar_select %p135, %s15, 3
        %s137 = smul.addr %s136, 8
        %s138 = smul.addr %s137, 4
        %s139 = scalar_lea.vmem %s1, %s138
      $region24: #{savanet_forward.2} parent=15 // pred_fallthru
        _
    $region16: #{savanet_forward.2} parent=5 // pred_fallthru
      _
    %p140 = scmp.le.s32.totalorder 1, %s8
    %p141 = scmp.lt.s32.totalorder %s8, 9
    %p142 = pnand %p140, %p141
    %p143 = pneg %p142
    // Predicated region
    $region25: #{savanet_forward.2} parent=5 // pred_check
      _
    $region26: #{savanet_forward.2} parent=5 // pred_check_branch
      %145 = sbr.rel (%p142) target = $region28
    $region27: #{savanet_forward.2} parent=5 // pred_region
      %s146 = ssub.s32 %s8, 1
      %s147 = smul.u32 16, %s18
      %p148 = scmp.lt.s32.totalorder %s17, 3
      %s149 = scalar_select %p148, %s17, 3
      %p150 = scmp.lt.s32.totalorder %s147, 31
      %s151 = scalar_select %p150, %s147, 31
      %s152 = smul.addr %s149, 32
      %s153 = sadd.s32 %s151, %s152
      %s154 = smul.addr %s153, 4
      %s155 = scalar_lea.vmem %s0, %s154
      %p156 = pneg %p48
      %p157 = pneg %p45
      %p158 = scmp.lt.s32.totalorder %s17, 3
      %s159 = scalar_select %p158, %s17, 3
      %s160 = smul.addr %s159, 8
      %s161 = smul.addr %s160, 4
      %s162 = scalar_lea.vmem %s1, %s161
      %p163 = pneg %p74
      %p164 = pneg %p71
      %p165 = pneg %p100
      %p166 = pneg %p97
      %p167 = scmp.lt.s32.totalorder %s17, 3
      %s168 = scalar_select %p167, %s17, 3
      %s169 = smul.addr %s168, 2
      %s170 = scalar_lea.vmem %s2, %s169
      %s171 = smul.u32 16, %s18
      %p172 = scmp.lt.s32.totalorder %s17, 3
      %s173 = scalar_select %p172, %s17, 3
      %p174 = scmp.lt.s32.totalorder %s171, 31
      %s175 = scalar_select %p174, %s171, 31
      %s176 = smul.addr %s173, 32
      %s177 = sadd.s32 %s175, %s176
      %s178 = smul.addr %s177, 4
      %s179 = scalar_lea.vmem %s0, %s178
      %s180 = smul.u32 16, %s18
      %p181 = scmp.lt.s32.totalorder %s17, 3
      %s182 = scalar_select %p181, %s17, 3
      %s183 = smul.addr %s182, 8
      %s184 = smul.addr %s183, 4
      %s185 = scalar_lea.vmem %s1, %s184
      %p186 = scmp.lt.s32.totalorder %s17, 3
      %s187 = scalar_select %p186, %s17, 3
      %s188 = smul.addr %s187, 2
      %s189 = scalar_lea.vmem %s2, %s188
      %p191 = scmp.eq.s32.totalorder %s18, 0
      // Predicated region
      $region29: #{savanet_forward.2} parent=27 // pred_check
        %p192 = pneg %p191
      $region30: #{savanet_forward.2} parent=27 // pred_check_branch
        %194 = sbr.rel (%p192) target = $region32
      $region31: #{savanet_forward.2} parent=27 // pred_region
        %v195 = vlaneseq
        %vm196 = vcmp.ge.s32.totalorder %v195, 0
        %vm197 = vcmp.lt.s32.totalorder %v195, 256
        %vm198 = vmand %vm196, %vm197
        %199 = vst.msk [vmem:[#allocation2] sm:$0x3] %vm198, 0.0
      $region32: #{savanet_forward.2} parent=27 // pred_fallthru
        _
      %v200 = vld [vmem:[%s179] sm:$0xf]
      %v201 = vld [vmem:[%s179 + $0x4] sm:$0xf]
      %v202 = vld [vmem:[%s179 + $0x8] sm:$0xf]
      %v203 = vld [vmem:[%s179 + $0xc] sm:$0xf]
      %v204 = vld [vmem:[%s179 + $0x10] sm:$0xf]
      %v205 = vld [vmem:[%s179 + $0x14] sm:$0xf]
      %v206 = vld [vmem:[%s179 + $0x18] sm:$0xf]
      %v207 = vld [vmem:[%s179 + $0x1c] sm:$0xf]
      %v208 = vld [vmem:[%s179 + $0x20] sm:$0xf]
      %v209 = vld [vmem:[%s179 + $0x24] sm:$0xf]
      %v210 = vld [vmem:[%s179 + $0x28] sm:$0xf]
      %v211 = vld [vmem:[%s179 + $0x2c] sm:$0xf]
      %v212 = vld [vmem:[%s179 + $0x30] sm:$0xf]
      %v213 = vld [vmem:[%s179 + $0x34] sm:$0xf]
      %v214 = vld [vmem:[%s179 + $0x38] sm:$0xf]
      %v215 = vld [vmem:[%s179 + $0x3c] sm:$0xf]
      %v216 = vld [vmem:[%s185] sm:$0xff]
      %v217 = vld [vmem:[%s185 + $0x8] sm:$0xff]
      %v218 = vld [vmem:[%s185 + $0x10] sm:$0xff]
      %v219 = vld [vmem:[%s185 + $0x18] sm:$0xff]
      %v236 = vunpack.c.l.b16 %v200
      %v237 = vunpack.c.l.b16 %v201
      %v238 = vunpack.c.l.b16 %v202
      %v239 = vunpack.c.l.b16 %v203
      %v240 = vunpack.c.l.b16 %v204
      %v241 = vunpack.c.l.b16 %v205
      %v242 = vunpack.c.l.b16 %v206
      %v243 = vunpack.c.l.b16 %v207
      %v244 = vunpack.c.l.b16 %v208
      %v245 = vunpack.c.l.b16 %v209
      %v246 = vunpack.c.l.b16 %v210
      %v247 = vunpack.c.l.b16 %v211
      %v248 = vunpack.c.l.b16 %v212
      %v249 = vunpack.c.l.b16 %v213
      %v250 = vunpack.c.l.b16 %v214
      %v251 = vunpack.c.l.b16 %v215
      %v252 = vpack.c.b16 %v237, %v236
      %v253 = vpack.c.b16 %v239, %v238
      %v254 = vpack.c.b16 %v241, %v240
      %v255 = vpack.c.b16 %v243, %v242
      %v256 = vpack.c.b16 %v245, %v244
      %v257 = vpack.c.b16 %v247, %v246
      %v258 = vpack.c.b16 %v249, %v248
      %v259 = vpack.c.b16 %v251, %v250
      %v264 = vunpack.c.l.b16 %v216
      %v265 = vunpack.c.h.b16 %v216
      %v266 = vunpack.c.l.b16 %v217
      %v267 = vunpack.c.h.b16 %v217
      %v268 = vunpack.c.l.b16 %v218
      %v269 = vunpack.c.h.b16 %v218
      %v270 = vunpack.c.l.b16 %v219
      %v271 = vunpack.c.h.b16 %v219
      %v272 = vpack.c.b16 %v266, %v264
      %v273 = vpack.c.b16 %v267, %v265
      %v274 = vpack.c.b16 %v270, %v268
      %v275 = vpack.c.b16 %v271, %v269
      %vm280 = vcmask 261120
      %v282 = vsel %vm280, %v252, 0
      %v285 = vsel %vm280, %v253, 0
      %v288 = vsel %vm280, %v254, 0
      %v291 = vsel %vm280, %v255, 0
      %v294 = vsel %vm280, %v256, 0
      %v297 = vsel %vm280, %v257, 0
      %v300 = vsel %vm280, %v258, 0
      %v303 = vsel %vm280, %v259, 0
      %305 = vmatprep.subr.bf16.mxu0 %v273
      %306 = vmatpush1.bf16.msra.mxu0 %v272
      %307 = vmatprep.subr.bf16.mxu0 %v275
      %308 = vmatpush1.bf16.msra.mxu0 %v274
      %309 = vmatprep.subr.bf16.mxu0 0
      %310 = vmatpush1.bf16.msra.mxu0 0
      %311 = vmatprep.subr.bf16.mxu0 0
      %312 = vmatpush1.bf16.msra.mxu0 0
      %313 = vmatprep.subr.bf16.mxu0 0
      %314 = vmatpush1.bf16.msra.mxu0 0
      %315 = vmatprep.subr.bf16.mxu0 0
      %316 = vmatpush1.bf16.msra.mxu0 0
      %317 = vmatprep.subr.bf16.mxu0 0
      %318 = vmatpush1.bf16.msra.mxu0 0
      %319 = vmatprep.subr.bf16.mxu0 0
      %320 = vmatpush1.bf16.msra.mxu0 0
      %321 = vmatprep.subr.bf16.mxu0 0
      %322 = vmatpush1.bf16.msra.mxu0 0
      %323 = vmatprep.subr.bf16.mxu0 0
      %324 = vmatpush1.bf16.msra.mxu0 0
      %325 = vmatprep.subr.bf16.mxu0 0
      %326 = vmatpush1.bf16.msra.mxu0 0
      %327 = vmatprep.subr.bf16.mxu0 0
      %328 = vmatpush1.bf16.msra.mxu0 0
      %329 = vmatprep.subr.bf16.mxu0 0
      %330 = vmatpush1.bf16.msra.mxu0 0
      %331 = vmatprep.subr.bf16.mxu0 0
      %332 = vmatpush1.bf16.msra.mxu0 0
      %333 = vmatprep.subr.bf16.mxu0 0
      %334 = vmatpush1.bf16.msra.mxu0 0
      %335 = vmatprep.subr.bf16.mxu0 0
      %336 = vmatpush1.bf16.msra.mxu0 0
      %337 = vmatprep.mubr.bf16.mxu0 0
      %338 = vmatmul.mubr.bf16.gmra.mrb[0].mxu0 %v282
      %v339 = vpop.f32.mrb[0].mxu0
      %v340 = vadd.f32 0.0, %v339
      %v341 = vpop.f32.mrb[0].mxu0
      %v342 = vadd.f32 0.0, %v341
      %v343 = vpop.f32.mrb[0].mxu0
      %v344 = vadd.f32 0.0, %v343
      %v345 = vpop.f32.mrb[0].mxu0
      %v346 = vadd.f32 0.0, %v345
      %347 = vmatprep.mubr.bf16.mxu0 0
      %348 = vmatmul.mubr.bf16.gmra.mrb[0].mxu0 %v285
      %v349 = vpop.f32.mrb[0].mxu0
      %v350 = vadd.f32 0.0, %v349
      %v351 = vpop.f32.mrb[0].mxu0
      %v352 = vadd.f32 0.0, %v351
      %v353 = vpop.f32.mrb[0].mxu0
      %v354 = vadd.f32 0.0, %v353
      %v355 = vpop.f32.mrb[0].mxu0
      %v356 = vadd.f32 0.0, %v355
      %357 = vmatprep.mubr.bf16.mxu0 0
      %358 = vmatmul.mubr.bf16.gmra.mrb[0].mxu0 %v288
      %v359 = vpop.f32.mrb[0].mxu0
      %v360 = vadd.f32 0.0, %v359
      %v361 = vpop.f32.mrb[0].mxu0
      %v362 = vadd.f32 0.0, %v361
      %v363 = vpop.f32.mrb[0].mxu0
      %v364 = vadd.f32 0.0, %v363
      %v365 = vpop.f32.mrb[0].mxu0
      %v366 = vadd.f32 0.0, %v365
      %367 = vmatprep.mubr.bf16.mxu0 0
      %368 = vmatmul.mubr.bf16.gmra.mrb[0].mxu0 %v291
      %v369 = vpop.f32.mrb[0].mxu0
      %v370 = vadd.f32 0.0, %v369
      %v371 = vpop.f32.mrb[0].mxu0
      %v372 = vadd.f32 0.0, %v371
      %v373 = vpop.f32.mrb[0].mxu0
      %v374 = vadd.f32 0.0, %v373
      %v375 = vpop.f32.mrb[0].mxu0
      %v376 = vadd.f32 0.0, %v375
      %377 = vmatprep.mubr.bf16.mxu0 0
      %378 = vmatmul.mubr.bf16.gmra.mrb[0].mxu0 %v294
      %v379 = vpop.f32.mrb[0].mxu0
      %v380 = vadd.f32 0.0, %v379
      %v381 = vpop.f32.mrb[0].mxu0
      %v382 = vadd.f32 0.0, %v381
      %v383 = vpop.f32.mrb[0].mxu0
      %v384 = vadd.f32 0.0, %v383
      %v385 = vpop.f32.mrb[0].mxu0
      %v386 = vadd.f32 0.0, %v385
      %387 = vmatprep.mubr.bf16.mxu0 0
      %388 = vmatmul.mubr.bf16.gmra.mrb[0].mxu0 %v297
      %v389 = vpop.f32.mrb[0].mxu0
      %v390 = vadd.f32 0.0, %v389
      %v391 = vpop.f32.mrb[0].mxu0
      %v392 = vadd.f32 0.0, %v391
      %v393 = vpop.f32.mrb[0].mxu0
      %v394 = vadd.f32 0.0, %v393
      %v395 = vpop.f32.mrb[0].mxu0
      %v396 = vadd.f32 0.0, %v395
      %397 = vmatprep.mubr.bf16.mxu0 0
      %398 = vmatmul.mubr.bf16.gmra.mrb[0].mxu0 %v300
      %v399 = vpop.f32.mrb[0].mxu0
      %v400 = vadd.f32 0.0, %v399
      %v401 = vpop.f32.mrb[0].mxu0
      %v402 = vadd.f32 0.0, %v401
      %v403 = vpop.f32.mrb[0].mxu0
      %v404 = vadd.f32 0.0, %v403
      %v405 = vpop.f32.mrb[0].mxu0
      %v406 = vadd.f32 0.0, %v405
      %407 = vmatprep.mubr.bf16.mxu0 0
      %408 = vmatmul.mubr.bf16.gmra.mrb[0].mxu0 %v303
      %v409 = vpop.f32.mrb[0].mxu0
      %v410 = vadd.f32 0.0, %v409
      %v411 = vpop.f32.mrb[0].mxu0
      %v412 = vadd.f32 0.0, %v411
      %v413 = vpop.f32.mrb[0].mxu0
      %v414 = vadd.f32 0.0, %v413
      %v415 = vpop.f32.mrb[0].mxu0
      %v416 = vadd.f32 0.0, %v415
      %417 = vdwg.mxu0
      %v418 = vmax.f32 %v340, %v342
      %419 = vmax.xlane.f32.xlu0 %v418
      %v420 = vpop.xlane.xlu0 %419
      %v421 = vmax.f32 %v344, %v346
      %422 = vmax.xlane.f32.xlu0 %v421
      %v423 = vpop.xlane.xlu0 %422
      %v424 = vmax.f32 %v350, %v352
      %425 = vmax.xlane.f32.xlu0 %v424
      %v426 = vpop.xlane.xlu0 %425
      %v427 = vmax.f32 %v354, %v356
      %428 = vmax.xlane.f32.xlu0 %v427
      %v429 = vpop.xlane.xlu0 %428
      %v430 = vmax.f32 %v360, %v362
      %431 = vmax.xlane.f32.xlu0 %v430
      %v432 = vpop.xlane.xlu0 %431
      %v433 = vmax.f32 %v364, %v366
      %434 = vmax.xlane.f32.xlu0 %v433
      %v435 = vpop.xlane.xlu0 %434
      %v436 = vmax.f32 %v370, %v372
      %437 = vmax.xlane.f32.xlu0 %v436
      %v438 = vpop.xlane.xlu0 %437
      %v439 = vmax.f32 %v374, %v376
      %440 = vmax.xlane.f32.xlu0 %v439
      %v441 = vpop.xlane.xlu0 %440
      %v442 = vmax.f32 %v380, %v382
      %443 = vmax.xlane.f32.xlu0 %v442
      %v444 = vpop.xlane.xlu0 %443
      %v445 = vmax.f32 %v384, %v386
      %446 = vmax.xlane.f32.xlu0 %v445
      %v447 = vpop.xlane.xlu0 %446
      %v448 = vmax.f32 %v390, %v392
      %449 = vmax.xlane.f32.xlu0 %v448
      %v450 = vpop.xlane.xlu0 %449
      %v451 = vmax.f32 %v394, %v396
      %452 = vmax.xlane.f32.xlu0 %v451
      %v453 = vpop.xlane.xlu0 %452
      %v454 = vmax.f32 %v400, %v402
      %455 = vmax.xlane.f32.xlu0 %v454
      %v456 = vpop.xlane.xlu0 %455
      %v457 = vmax.f32 %v404, %v406
      %458 = vmax.xlane.f32.xlu0 %v457
      %v459 = vpop.xlane.xlu0 %458
      %v460 = vmax.f32 %v410, %v412
      %461 = vmax.xlane.f32.xlu0 %v460
      %v462 = vpop.xlane.xlu0 %461
      %v463 = vmax.f32 %v414, %v416
      %464 = vmax.xlane.f32.xlu0 %v463
      %v465 = vpop.xlane.xlu0 %464
      %v466 = vsub.f32 %v340, %v420
      %v467 = vsub.f32 %v342, %v420
      %v468 = vsub.f32 %v344, %v423
      %v469 = vsub.f32 %v346, %v423
      %v470 = vsub.f32 %v350, %v426
      %v471 = vsub.f32 %v352, %v426
      %v472 = vsub.f32 %v354, %v429
      %v473 = vsub.f32 %v356, %v429
      %v474 = vsub.f32 %v360, %v432
      %v475 = vsub.f32 %v362, %v432
      %v476 = vsub.f32 %v364, %v435
      %v477 = vsub.f32 %v366, %v435
      %v478 = vsub.f32 %v370, %v438
      %v479 = vsub.f32 %v372, %v438
      %v480 = vsub.f32 %v374, %v441
      %v481 = vsub.f32 %v376, %v441
      %v482 = vsub.f32 %v380, %v444
      %v483 = vsub.f32 %v382, %v444
      %v484 = vsub.f32 %v384, %v447
      %v485 = vsub.f32 %v386, %v447
      %v486 = vsub.f32 %v390, %v450
      %v487 = vsub.f32 %v392, %v450
      %v488 = vsub.f32 %v394, %v453
      %v489 = vsub.f32 %v396, %v453
      %v490 = vsub.f32 %v400, %v456
      %v491 = vsub.f32 %v402, %v456
      %v492 = vsub.f32 %v404, %v459
      %v493 = vsub.f32 %v406, %v459
      %v494 = vsub.f32 %v410, %v462
      %v495 = vsub.f32 %v412, %v462
      %v496 = vsub.f32 %v414, %v465
      %v497 = vsub.f32 %v416, %v465
      %v498 = vmul.f32 %v466, 1.442695
      %v499 = vpow.pop %v498
      %v500 = vmul.f32 %v467, 1.442695
      %v501 = vpow.pop %v500
      %v502 = vmul.f32 %v468, 1.442695
      %v503 = vpow.pop %v502
      %v504 = vmul.f32 %v469, 1.442695
      %v505 = vpow.pop %v504
      %v506 = vmul.f32 %v470, 1.442695
      %v507 = vpow.pop %v506
      %v508 = vmul.f32 %v471, 1.442695
      %v509 = vpow.pop %v508
      %v510 = vmul.f32 %v472, 1.442695
      %v511 = vpow.pop %v510
      %v512 = vmul.f32 %v473, 1.442695
      %v513 = vpow.pop %v512
      %v514 = vmul.f32 %v474, 1.442695
      %v515 = vpow.pop %v514
      %v516 = vmul.f32 %v475, 1.442695
      %v517 = vpow.pop %v516
      %v518 = vmul.f32 %v476, 1.442695
      %v519 = vpow.pop %v518
      %v520 = vmul.f32 %v477, 1.442695
      %v521 = vpow.pop %v520
      %v522 = vmul.f32 %v478, 1.442695
      %v523 = vpow.pop %v522
      %v524 = vmul.f32 %v479, 1.442695
      %v525 = vpow.pop %v524
      %v526 = vmul.f32 %v480, 1.442695
      %v527 = vpow.pop %v526
      %v528 = vmul.f32 %v481, 1.442695
      %v529 = vpow.pop %v528
      %v530 = vmul.f32 %v482, 1.442695
      %v531 = vpow.pop %v530
      %v532 = vmul.f32 %v483, 1.442695
      %v533 = vpow.pop %v532
      %v534 = vmul.f32 %v484, 1.442695
      %v535 = vpow.pop %v534
      %v536 = vmul.f32 %v485, 1.442695
      %v537 = vpow.pop %v536
      %v538 = vmul.f32 %v486, 1.442695
      %v539 = vpow.pop %v538
      %v540 = vmul.f32 %v487, 1.442695
      %v541 = vpow.pop %v540
      %v542 = vmul.f32 %v488, 1.442695
      %v543 = vpow.pop %v542
      %v544 = vmul.f32 %v489, 1.442695
      %v545 = vpow.pop %v544
      %v546 = vmul.f32 %v490, 1.442695
      %v547 = vpow.pop %v546
      %v548 = vmul.f32 %v491, 1.442695
      %v549 = vpow.pop %v548
      %v550 = vmul.f32 %v492, 1.442695
      %v551 = vpow.pop %v550
      %v552 = vmul.f32 %v493, 1.442695
      %v553 = vpow.pop %v552
      %v554 = vmul.f32 %v494, 1.442695
      %v555 = vpow.pop %v554
      %v556 = vmul.f32 %v495, 1.442695
      %v557 = vpow.pop %v556
      %v558 = vmul.f32 %v496, 1.442695
      %v559 = vpow.pop %v558
      %v560 = vmul.f32 %v497, 1.442695
      %v561 = vpow.pop %v560
      %v562 = vadd.f32 %v499, %v501
      %563 = vadd.xlane.f32.xlu0 %v562
      %v564 = vpop.xlane.xlu0 %563
      %v565 = vadd.f32 %v503, %v505
      %566 = vadd.xlane.f32.xlu0 %v565
      %v567 = vpop.xlane.xlu0 %566
      %v568 = vadd.f32 %v507, %v509
      %569 = vadd.xlane.f32.xlu0 %v568
      %v570 = vpop.xlane.xlu0 %569
      %v571 = vadd.f32 %v511, %v513
      %572 = vadd.xlane.f32.xlu0 %v571
      %v573 = vpop.xlane.xlu0 %572
      %v574 = vadd.f32 %v515, %v517
      %575 = vadd.xlane.f32.xlu0 %v574
      %v576 = vpop.xlane.xlu0 %575
      %v577 = vadd.f32 %v519, %v521
      %578 = vadd.xlane.f32.xlu0 %v577
      %v579 = vpop.xlane.xlu0 %578
      %v580 = vadd.f32 %v523, %v525
      %581 = vadd.xlane.f32.xlu0 %v580
      %v582 = vpop.xlane.xlu0 %581
      %v583 = vadd.f32 %v527, %v529
      %584 = vadd.xlane.f32.xlu0 %v583
      %v585 = vpop.xlane.xlu0 %584
      %v586 = vadd.f32 %v531, %v533
      %587 = vadd.xlane.f32.xlu0 %v586
      %v588 = vpop.xlane.xlu0 %587
      %v589 = vadd.f32 %v535, %v537
      %590 = vadd.xlane.f32.xlu0 %v589
      %v591 = vpop.xlane.xlu0 %590
      %v592 = vadd.f32 %v539, %v541
      %593 = vadd.xlane.f32.xlu0 %v592
      %v594 = vpop.xlane.xlu0 %593
      %v595 = vadd.f32 %v543, %v545
      %596 = vadd.xlane.f32.xlu0 %v595
      %v597 = vpop.xlane.xlu0 %596
      %v598 = vadd.f32 %v547, %v549
      %599 = vadd.xlane.f32.xlu0 %v598
      %v600 = vpop.xlane.xlu0 %599
      %v601 = vadd.f32 %v551, %v553
      %602 = vadd.xlane.f32.xlu0 %v601
      %v603 = vpop.xlane.xlu0 %602
      %v604 = vadd.f32 %v555, %v557
      %605 = vadd.xlane.f32.xlu0 %v604
      %v606 = vpop.xlane.xlu0 %605
      %v607 = vadd.f32 %v559, %v561
      %608 = vadd.xlane.f32.xlu0 %v607
      %v609 = vpop.xlane.xlu0 %608
      %v610 = vrcp.pop %v564
      %v611 = vmul.f32 %v499, %v610
      %v612 = vmul.f32 %v501, %v610
      %v613 = vrcp.pop %v567
      %v614 = vmul.f32 %v503, %v613
      %v615 = vmul.f32 %v505, %v613
      %v616 = vrcp.pop %v570
      %v617 = vmul.f32 %v507, %v616
      %v618 = vmul.f32 %v509, %v616
      %v619 = vrcp.pop %v573
      %v620 = vmul.f32 %v511, %v619
      %v621 = vmul.f32 %v513, %v619
      %v622 = vrcp.pop %v576
      %v623 = vmul.f32 %v515, %v622
      %v624 = vmul.f32 %v517, %v622
      %v625 = vrcp.pop %v579
      %v626 = vmul.f32 %v519, %v625
      %v627 = vmul.f32 %v521, %v625
      %v628 = vrcp.pop %v582
      %v629 = vmul.f32 %v523, %v628
      %v630 = vmul.f32 %v525, %v628
      %v631 = vrcp.pop %v585
      %v632 = vmul.f32 %v527, %v631
      %v633 = vmul.f32 %v529, %v631
      %v634 = vrcp.pop %v588
      %v635 = vmul.f32 %v531, %v634
      %v636 = vmul.f32 %v533, %v634
      %v637 = vrcp.pop %v591
      %v638 = vmul.f32 %v535, %v637
      %v639 = vmul.f32 %v537, %v637
      %v640 = vrcp.pop %v594
      %v641 = vmul.f32 %v539, %v640
      %v642 = vmul.f32 %v541, %v640
      %v643 = vrcp.pop %v597
      %v644 = vmul.f32 %v543, %v643
      %v645 = vmul.f32 %v545, %v643
      %v646 = vrcp.pop %v600
      %v647 = vmul.f32 %v547, %v646
      %v648 = vmul.f32 %v549, %v646
      %v649 = vrcp.pop %v603
      %v650 = vmul.f32 %v551, %v649
      %v651 = vmul.f32 %v553, %v649
      %v652 = vrcp.pop %v606
      %v653 = vmul.f32 %v555, %v652
      %v654 = vmul.f32 %v557, %v652
      %v655 = vrcp.pop %v609
      %v656 = vmul.f32 %v559, %v655
      %v657 = vmul.f32 %v561, %v655
      %v658 = vld [vmem:[#allocation2] sm:$0x3]
      %v659 = vadd.f32 %v611, %v614
      %v660 = vadd.f32 %v659, %v617
      %v661 = vadd.f32 %v660, %v620
      %v662 = vadd.f32 %v661, %v623
      %v663 = vadd.f32 %v662, %v626
      %v664 = vadd.f32 %v663, %v629
      %v665 = vadd.f32 %v664, %v632
      %v666 = vadd.f32 %v665, %v635
      %v667 = vadd.f32 %v666, %v638
      %v668 = vadd.f32 %v667, %v641
      %v669 = vadd.f32 %v668, %v644
      %v670 = vadd.f32 %v669, %v647
      %v671 = vadd.f32 %v670, %v650
      %v672 = vadd.f32 %v671, %v653
      %v673 = vadd.f32 %v672, %v656
      %v674 = vrot.slane %v673, 4
      %v675 = vadd.f32 %v673, %v674
      %v676 = vrot.slane %v675, 2
      %v677 = vadd.f32 %v675, %v676
      %v678 = vrot.slane %v677, 1
      %v679 = vadd.f32 %v677, %v678
      %v680 = vadd.f32 %v612, %v615
      %v681 = vadd.f32 %v680, %v618
      %v682 = vadd.f32 %v681, %v621
      %v683 = vadd.f32 %v682, %v624
      %v684 = vadd.f32 %v683, %v627
      %v685 = vadd.f32 %v684, %v630
      %v686 = vadd.f32 %v685, %v633
      %v687 = vadd.f32 %v686, %v636
      %v688 = vadd.f32 %v687, %v639
      %v689 = vadd.f32 %v688, %v642
      %v690 = vadd.f32 %v689, %v645
      %v691 = vadd.f32 %v690, %v648
      %v692 = vadd.f32 %v691, %v651
      %v693 = vadd.f32 %v692, %v654
      %v694 = vadd.f32 %v693, %v657
      %v695 = vrot.slane %v694, 4
      %v696 = vadd.f32 %v694, %v695
      %v697 = vrot.slane %v696, 2
      %v698 = vadd.f32 %v696, %v697
      %v699 = vrot.slane %v698, 1
      %v700 = vadd.f32 %v698, %v699
      %v703 = vcombine.low %v679, %v700
      %v705 = vunpack.c.l.s4 1966171168
      %v706 = vunpack.c.0.s8 %v705
      %v707 = vlaneseq
      %v708 = vshrl.u32 %v707, 7
      %v709 = vsub.s32 %v706, %v708
      %v710 = vrot.slane %v703, %v709
      %v712 = vunpack.c.l.s4 1966171168
      %v713 = vunpack.c.0.s8 %v712
      %v714 = vlaneseq
      %v715 = vshrl.u32 %v714, 7
      %v716 = vsub.s32 %v713, %v715
      %v717 = vrot.slane %v710, %v716
      %v719 = vadd.f32 %v658, %v717
      %v720 = vlaneseq
      %vm721 = vcmp.ge.s32.totalorder %v720, 0
      %vm722 = vcmp.lt.s32.totalorder %v720, 256
      %vm723 = vmand %vm721, %vm722
      %724 = vst.msk [vmem:[#allocation2] sm:$0x3] %vm723, %v719
      %p725 = scmp.eq.s32.totalorder %s18, 1
      // Predicated region
      $region33: #{savanet_forward.2} parent=27 // pred_check
        %p726 = pneg %p725
      $region34: #{savanet_forward.2} parent=27 // pred_check_branch
        %728 = sbr.rel (%p726) target = $region36
      $region35: #{savanet_forward.2} parent=27 // pred_region
        %v729 = vld [vmem:[#allocation2] sm:$0x3]
        %v730 = vmul.f32 %v729, 0.00390625
        %731 = vst.msk [vmem:[%s189] sm:$0x3] %vm723, %v730
      $region36: #{savanet_forward.2} parent=27 // pred_fallthru
        _
      %p732 = scmp.lt.s32.totalorder %s17, 3
      %s733 = scalar_select %p732, %s17, 3
      %s734 = smul.addr %s733, 2
      %s735 = scalar_lea.vmem %s2, %s734
      // Predicated region
      $region37: #{savanet_forward.2} parent=27 // pred_check
        %p736 = pneg %p97
      $region38: #{savanet_forward.2} parent=27 // pred_check_branch
        %738 = sbr.rel (%p736) target = $region40
      $region39: #{savanet_forward.2} parent=27 // pred_region
        _
      $region40: #{savanet_forward.2} parent=27 // pred_fallthru
        _
    $region28: #{savanet_forward.2} parent=5 // pred_fallthru
      _
    %p739 = scmp.le.s32.totalorder 2, %s8
    // Predicated region
    $region41: #{savanet_forward.2} parent=5 // pred_check
      %p740 = pneg %p739
    $region42: #{savanet_forward.2} parent=5 // pred_check_branch
      %742 = sbr.rel (%p740) target = $region44
    $region43: #{savanet_forward.2} parent=5 // pred_region
      %s743 = ssub.s32 %s8, 2
      // Predicated region
      $region45: #{savanet_forward.2} parent=43 // pred_check
        %p744 = pneg %p103
      $region46: #{savanet_forward.2} parent=43 // pred_check_branch
        %746 = sbr.rel (%p744) target = $region48
      $region47: #{savanet_forward.2} parent=43 // pred_region
        %p747 = scmp.lt.s32.totalorder %s19, 3
        %s748 = scalar_select %p747, %s19, 3
        %s749 = smul.addr %s748, 2
        %s750 = scalar_lea.vmem %s2, %s749
      $region48: #{savanet_forward.2} parent=43 // pred_fallthru
        _
    $region44: #{savanet_forward.2} parent=5 // pred_fallthru
      _
  $region6: #{savanet_forward.2} parent=0 // loop_footer
    %s12 = sadd.s32 1, %s8
  $region7: #{savanet_forward.2} parent=0 // loop_footer_branch
    %7 = sbr.rel target = $region3
  $region8: #{savanet_forward.2} parent=0 // loop_exit
    _

// kernel: savanet_forward.3
$region0: #{savanet_forward.3}
  #allocation0 [shape = 'u32[]', space=smem, size = 0x4, offset = 0x4, fixed_abs, tag = 'smem constant byte address 0x4 - core index']
  #allocation1 [shape = 'u32[144,128]{1,0:T(1,128)}', space=vmem, size = 0x12000, scoped, tag = 'internal scratch']
  #allocation2 [shape = 'f32[1,128]{1,0:T(1,128)}', space=vmem, size = 0x200, scoped, tag = 'scratch operand']
  #allocation3 [shape = 'f32[1,128]{1,0:T(1,128)}', space=vmem, size = 0x200, scoped, tag = 'scratch operand']
  #allocation4 [shape = 'f32[32,128]{1,0:T(8,128)}', space=vmem, size = 0x4000, scoped, tag = 'scratch operand']
  %s0 = inlined_call_operand.vmem [shape: bf16[2,32,256], index: 0, kind: input, shape index: {}]
  %s1 = inlined_call_operand.vmem [shape: bf16[2,256,32], index: 1, kind: input, shape index: {}]
  %s2 = inlined_call_operand.vmem [shape: bf16[2,32,256], index: 2, kind: input, shape index: {}]
  %s3 = inlined_call_operand.vmem [shape: f32[2,1,256], index: 3, kind: input, shape index: {}]
  %s4 = inlined_call_operand.vmem [shape: f32[2,256,1], index: 4, kind: input, shape index: {}]
  %s5 = inlined_call_operand.vmem [shape: f32[2,32,256], index: 5, kind: input, shape index: {}]
  %s6 = inlined_call_operand.vmem [shape: bf16[32,32], index: 6, kind: input, shape index: {}]
  %s7 = inlined_call_operand.vmem [shape: f32[32,1], index: 7, kind: input, shape index: {}]
  %s8 = inlined_call_operand.vmem [shape: f32[2,32,256], index: 8, kind: output, shape index: {}]
  %s9 = sld [smem:[#allocation0]]
  $region227: #{savanet_forward.3} parent=0
    _
  %s11 = ssub.s32 1, %s9
  %s12 = scalar_select 0, %s11, %s9
  $region1: #{savanet_forward.3} parent=0
    #allocation5 [shape = 'u8[16384]{0}', space=vmem, size = 0x4000, scoped, tag = 'input window, operand 0']
    #allocation6 [shape = 'u8[16384]{0}', space=vmem, size = 0x4000, scoped, tag = 'input window, operand 2']
    #allocation7 [shape = 'u8[32768]{0}', space=vmem, size = 0x8000, scoped, tag = 'input window, operand 5']
    #allocation8 [shape = 'u8[32768]{0}', space=vmem, size = 0x8000, scoped, tag = 'output window, operand 0']
    loop: start=0, step=1, limit=10
    $region2: #{savanet_forward.3} parent=1 // loop_pre_header
      _
    $region3: #{savanet_forward.3} parent=1 // loop_header
      %s14 = sphi 0, %s18
      %p15 = scmp.ge.s32.totalorder %s14, 10
      %s21 = sphi 0, %s40
      %s22 = sphi 0, %s36
      %s23 = sphi 0, %s32
      %s24 = sphi 0, %s21
      %s25 = sphi 0, %s22
      %s26 = sphi 0, %s23
      %s27 = sphi 0, %s24
      %s28 = sphi 0, %s25
      %s29 = sphi 0, %s26
      %s45 = sphi 0, %s47
      %s48 = sphi 0, %s45
      %s49 = sphi 0, %s48
      %s65 = sphi 0, %s49
      %s73 = sphi 0, %s75
      %s76 = sphi 0, %s73
      %s77 = sphi 0, %s76
      %s93 = sphi 0, %s77
      %s101 = sphi 0, %s103
      %s104 = sphi 0, %s101
      %s105 = sphi 0, %s104
      %s121 = sphi 0, %s105
      %s129 = sphi 0, %s131
      %s132 = sphi 0, %s129
      %s133 = sphi 0, %s132
      %s149 = sphi 0, %s133
      %s157 = sphi 0, %s159
      %s160 = sphi 0, %s157
      %s161 = sphi 0, %s160
      %s177 = sphi 0, %s161
      %s185 = sphi 0, %s187
      %s188 = sphi 0, %s185
      %s189 = sphi 0, %s188
      %s205 = sphi 0, %s189
      %s209 = sphi 0, %s209
      %s211 = sphi 0, %s209
      %s212 = sphi 0, %s211
      %s226 = sphi 0, %s212
      %s230 = sphi 0, %s230
      %s232 = sphi 0, %s230
      %s233 = sphi 0, %s232
      %s247 = sphi 0, %s233
      %s255 = sphi 0, %s257
      %s258 = sphi 0, %s255
      %s259 = sphi 0, %s258
      %s275 = sphi 0, %s259
    $region4: #{savanet_forward.3} parent=1 // loop_header_branch
      %17 = sbr.rel (%p15) target = $region8
    $region5: #{savanet_forward.3} parent=1 // loop_body
      %s19 = ssub.s32 %s14, 1
      %s20 = ssub.s32 %s14, 2
      %s30 = sadd.s32 1, %s23
      %p31 = scmp.ge.s32.totalorder %s30, 2
      %s32 = scalar_select %p31, 0, %s30
      %s33 = sadd.s32 1, %s22
      %s34 = scalar_select %p31, %s33, %s22
      %p35 = scmp.ge.s32.totalorder %s34, 2
      %s36 = scalar_select %p35, 0, %s34
      %s37 = sadd.s32 1, %s21
      %s38 = scalar_select %p35, %s37, %s21
      %p39 = scmp.ge.s32.totalorder %s38, 2
      %s40 = scalar_select %p39, 0, %s38
      %s41 = ssub.s32 %s21, %s40
      %s42 = ssub.s32 %s22, %s36
      %s43 = sor.u32 %s41, %s42
      %p44 = scmp.eq.s32.totalorder %s43, 0
      %s46 = sadd.s32 %s45, 1
      %s47 = scalar_select %p44, %s45, %s46
      %p50 = pneg %p44
      %p51 = scmp.eq.s32.totalorder %s14, 7
      %p52 = por %p50, %p51
      %p53 = scmp.ne.s32.totalorder %s45, %s48
      %p54 = scmp.eq.s32.totalorder %s14, 0
      %p55 = por %p53, %p54
      %p56 = scmp.ne.s32.totalorder %s45, %s48
      %p57 = scmp.eq.s32.totalorder %s19, 7
      %p58 = por %p56, %p57
      %p59 = scmp.ne.s32.totalorder %s48, %s49
      %p60 = scmp.eq.s32.totalorder %s19, 0
      %p61 = por %p59, %p60
      %p62 = scmp.ne.s32.totalorder %s48, %s49
      %p63 = scmp.eq.s32.totalorder %s20, 7
      %p64 = por %p62, %p63
      %p66 = scmp.ne.s32.totalorder %s49, %s65
      %p67 = scmp.eq.s32.totalorder %s20, 0
      %p68 = por %p66, %p67
      %s69 = ssub.s32 %s21, %s40
      %s70 = ssub.s32 %s23, %s32
      %s71 = sor.u32 %s69, %s70
      %p72 = scmp.eq.s32.totalorder %s71, 0
      %s74 = sadd.s32 %s73, 1
      %s75 = scalar_select %p72, %s73, %s74
      %p78 = pneg %p72
      %p79 = scmp.eq.s32.totalorder %s14, 7
      %p80 = por %p78, %p79
      %p81 = scmp.ne.s32.totalorder %s73, %s76
      %p82 = scmp.eq.s32.totalorder %s14, 0
      %p83 = por %p81, %p82
      %p84 = scmp.ne.s32.totalorder %s73, %s76
      %p85 = scmp.eq.s32.totalorder %s19, 7
      %p86 = por %p84, %p85
      %p87 = scmp.ne.s32.totalorder %s76, %s77
      %p88 = scmp.eq.s32.totalorder %s19, 0
      %p89 = por %p87, %p88
      %p90 = scmp.ne.s32.totalorder %s76, %s77
      %p91 = scmp.eq.s32.totalorder %s20, 7
      %p92 = por %p90, %p91
      %p94 = scmp.ne.s32.totalorder %s77, %s93
      %p95 = scmp.eq.s32.totalorder %s20, 0
      %p96 = por %p94, %p95
      %s97 = ssub.s32 %s21, %s40
      %s98 = ssub.s32 %s23, %s32
      %s99 = sor.u32 %s97, %s98
      %p100 = scmp.eq.s32.totalorder %s99, 0
      %s102 = sadd.s32 %s101, 1
      %s103 = scalar_select %p100, %s101, %s102
      %p106 = pneg %p100
      %p107 = scmp.eq.s32.totalorder %s14, 7
      %p108 = por %p106, %p107
      %p109 = scmp.ne.s32.totalorder %s101, %s104
      %p110 = scmp.eq.s32.totalorder %s14, 0
      %p111 = por %p109, %p110
      %p112 = scmp.ne.s32.totalorder %s101, %s104
      %p113 = scmp.eq.s32.totalorder %s19, 7
      %p114 = por %p112, %p113
      %p115 = scmp.ne.s32.totalorder %s104, %s105
      %p116 = scmp.eq.s32.totalorder %s19, 0
      %p117 = por %p115, %p116
      %p118 = scmp.ne.s32.totalorder %s104, %s105
      %p119 = scmp.eq.s32.totalorder %s20, 7
      %p120 = por %p118, %p119
      %p122 = scmp.ne.s32.totalorder %s105, %s121
      %p123 = scmp.eq.s32.totalorder %s20, 0
      %p124 = por %p122, %p123
      %s125 = ssub.s32 %s21, %s40
      %s126 = ssub.s32 %s22, %s36
      %s127 = sor.u32 %s125, %s126
      %p128 = scmp.eq.s32.totalorder %s127, 0
      %s130 = sadd.s32 %s129, 1
      %s131 = scalar_select %p128, %s129, %s130
      %p134 = pneg %p128
      %p135 = scmp.eq.s32.totalorder %s14, 7
      %p136 = por %p134, %p135
      %p137 = scmp.ne.s32.totalorder %s129, %s132
      %p138 = scmp.eq.s32.totalorder %s14, 0
      %p139 = por %p137, %p138
      %p140 = scmp.ne.s32.totalorder %s129, %s132
      %p141 = scmp.eq.s32.totalorder %s19, 7
      %p142 = por %p140, %p141
      %p143 = scmp.ne.s32.totalorder %s132, %s133
      %p144 = scmp.eq.s32.totalorder %s19, 0
      %p145 = por %p143, %p144
      %p146 = scmp.ne.s32.totalorder %s132, %s133
      %p147 = scmp.eq.s32.totalorder %s20, 7
      %p148 = por %p146, %p147
      %p150 = scmp.ne.s32.totalorder %s133, %s149
      %p151 = scmp.eq.s32.totalorder %s20, 0
      %p152 = por %p150, %p151
      %s153 = ssub.s32 %s21, %s40
      %s154 = ssub.s32 %s23, %s32
      %s155 = sor.u32 %s153, %s154
      %p156 = scmp.eq.s32.totalorder %s155, 0
      %s158 = sadd.s32 %s157, 1
      %s159 = scalar_select %p156, %s157, %s158
      %p162 = pneg %p156
      %p163 = scmp.eq.s32.totalorder %s14, 7
      %p164 = por %p162, %p163
      %p165 = scmp.ne.s32.totalorder %s157, %s160
      %p166 = scmp.eq.s32.totalorder %s14, 0
      %p167 = por %p165, %p166
      %p168 = scmp.ne.s32.totalorder %s157, %s160
      %p169 = scmp.eq.s32.totalorder %s19, 7
      %p170 = por %p168, %p169
      %p171 = scmp.ne.s32.totalorder %s160, %s161
      %p172 = scmp.eq.s32.totalorder %s19, 0
      %p173 = por %p171, %p172
      %p174 = scmp.ne.s32.totalorder %s160, %s161
      %p175 = scmp.eq.s32.totalorder %s20, 7
      %p176 = por %p174, %p175
      %p178 = scmp.ne.s32.totalorder %s161, %s177
      %p179 = scmp.eq.s32.totalorder %s20, 0
      %p180 = por %p178, %p179
      %s181 = ssub.s32 %s21, %s40
      %s182 = ssub.s32 %s22, %s36
      %s183 = sor.u32 %s181, %s182
      %p184 = scmp.eq.s32.totalorder %s183, 0
      %s186 = sadd.s32 %s185, 1
      %s187 = scalar_select %p184, %s185, %s186
      %p190 = pneg %p184
      %p191 = scmp.eq.s32.totalorder %s14, 7
      %p192 = por %p190, %p191
      %p193 = scmp.ne.s32.totalorder %s185, %s188
      %p194 = scmp.eq.s32.totalorder %s14, 0
      %p195 = por %p193, %p194
      %p196 = scmp.ne.s32.totalorder %s185, %s188
      %p197 = scmp.eq.s32.totalorder %s19, 7
      %p198 = por %p196, %p197
      %p199 = scmp.ne.s32.totalorder %s188, %s189
      %p200 = scmp.eq.s32.totalorder %s19, 0
      %p201 = por %p199, %p200
      %p202 = scmp.ne.s32.totalorder %s188, %s189
      %p203 = scmp.eq.s32.totalorder %s20, 7
      %p204 = por %p202, %p203
      %p206 = scmp.ne.s32.totalorder %s189, %s205
      %p207 = scmp.eq.s32.totalorder %s20, 0
      %p208 = por %p206, %p207
      %s210 = sadd.s32 %s209, 1
      %p213 = scmp.eq.s32.totalorder %s14, 7
      %p214 = scmp.ne.s32.totalorder %s209, %s211
      %p215 = scmp.eq.s32.totalorder %s14, 0
      %p216 = por %p214, %p215
      %p217 = scmp.ne.s32.totalorder %s209, %s211
      %p218 = scmp.eq.s32.totalorder %s19, 7
      %p219 = por %p217, %p218
      %p220 = scmp.ne.s32.totalorder %s211, %s212
      %p221 = scmp.eq.s32.totalorder %s19, 0
      %p222 = por %p220, %p221
      %p223 = scmp.ne.s32.totalorder %s211, %s212
      %p224 = scmp.eq.s32.totalorder %s20, 7
      %p225 = por %p223, %p224
      %p227 = scmp.ne.s32.totalorder %s212, %s226
      %p228 = scmp.eq.s32.totalorder %s20, 0
      %p229 = por %p227, %p228
      %s231 = sadd.s32 %s230, 1
      %p234 = scmp.eq.s32.totalorder %s14, 7
      %p235 = scmp.ne.s32.totalorder %s230, %s232
      %p236 = scmp.eq.s32.totalorder %s14, 0
      %p237 = por %p235, %p236
      %p238 = scmp.ne.s32.totalorder %s230, %s232
      %p239 = scmp.eq.s32.totalorder %s19, 7
      %p240 = por %p238, %p239
      %p241 = scmp.ne.s32.totalorder %s232, %s233
      %p242 = scmp.eq.s32.totalorder %s19, 0
      %p243 = por %p241, %p242
      %p244 = scmp.ne.s32.totalorder %s232, %s233
      %p245 = scmp.eq.s32.totalorder %s20, 7
      %p246 = por %p244, %p245
      %p248 = scmp.ne.s32.totalorder %s233, %s247
      %p249 = scmp.eq.s32.totalorder %s20, 0
      %p250 = por %p248, %p249
      %s251 = ssub.s32 %s21, %s40
      %s252 = ssub.s32 %s22, %s36
      %s253 = sor.u32 %s251, %s252
      %p254 = scmp.eq.s32.totalorder %s253, 0
      %s256 = sadd.s32 %s255, 1
      %s257 = scalar_select %p254, %s255, %s256
      %p260 = pneg %p254
      %p261 = scmp.eq.s32.totalorder %s14, 7
      %p262 = por %p260, %p261
      %p263 = scmp.ne.s32.totalorder %s255, %s258
      %p264 = scmp.eq.s32.totalorder %s14, 0
      %p265 = por %p263, %p264
      %p266 = scmp.ne.s32.totalorder %s255, %s258
      %p267 = scmp.eq.s32.totalorder %s19, 7
      %p268 = por %p266, %p267
      %p269 = scmp.ne.s32.totalorder %s258, %s259
      %p270 = scmp.eq.s32.totalorder %s19, 0
      %p271 = por %p269, %p270
      %p272 = scmp.ne.s32.totalorder %s258, %s259
      %p273 = scmp.eq.s32.totalorder %s20, 7
      %p274 = por %p272, %p273
      %p276 = scmp.ne.s32.totalorder %s259, %s275
      %p277 = scmp.eq.s32.totalorder %s20, 0
      %p278 = por %p276, %p277
      %p279 = scmp.le.s32.totalorder 1, %s14
      %p280 = scmp.lt.s32.totalorder %s14, 9
      %p281 = pnand %p279, %p280
      %p282 = pneg %p281
      // Predicated region
      $region9: #{savanet_forward.3} parent=5 // pred_check
        _
      $region10: #{savanet_forward.3} parent=5 // pred_check_branch
        %284 = sbr.rel (%p281) target = $region12
      $region11: #{savanet_forward.3} parent=5 // pred_region
        %s285 = ssub.s32 %s14, 1
        // Predicated region
        $region13: #{savanet_forward.3} parent=11 // pred_check
          %p286 = pneg %p222
        $region14: #{savanet_forward.3} parent=11 // pred_check_branch
          %288 = sbr.rel (%p286) target = $region16
        $region15: #{savanet_forward.3} parent=11 // pred_region
          _
        $region16: #{savanet_forward.3} parent=11 // pred_fallthru
          _
        // Predicated region
        $region17: #{savanet_forward.3} parent=11 // pred_check
          %p289 = pneg %p243
        $region18: #{savanet_forward.3} parent=11 // pred_check_branch
          %291 = sbr.rel (%p289) target = $region20
        $region19: #{savanet_forward.3} parent=11 // pred_region
          _
        $region20: #{savanet_forward.3} parent=11 // pred_fallthru
          _
      $region12: #{savanet_forward.3} parent=5 // pred_fallthru
        _
      %p292 = scmp.lt.s32.totalorder %s14, 8
      // Predicated region
      $region21: #{savanet_forward.3} parent=5 // pred_check
        %p293 = pneg %p292
      $region22: #{savanet_forward.3} parent=5 // pred_check_branch
        %295 = sbr.rel (%p293) target = $region24
      $region23: #{savanet_forward.3} parent=5 // pred_region
        // Predicated region
        $region25: #{savanet_forward.3} parent=23 // pred_check
          %p296 = pneg %p55
        $region26: #{savanet_forward.3} parent=23 // pred_check_branch
          %298 = sbr.rel (%p296) target = $region28
        $region27: #{savanet_forward.3} parent=23 // pred_region
          %s299 = sand.u32 %s45, 1
          %s300 = sand.u32 %s45, 1
          %s301 = smul.addr %s300, 16
          %s302 = scalar_lea.vmem [#allocation5], %s301
          %s303 = smul.addr %s21, 8
          %s304 = sadd.s32 %s22, %s303
          %s305 = smul.addr %s304, 4
          %s306 = scalar_lea.vmem %s0, %s305
          // Predicated region
          $region29: #{savanet_forward.3} parent=27 // pred_check
            _
          $region30: #{savanet_forward.3} parent=27 // pred_check_branch
            %308 = sbr.rel (0) target = $region32
          $region31: #{savanet_forward.3} parent=27 // pred_region
            // Predicated region
            $region33: #{savanet_forward.3} parent=31 // pred_check
              _
            $region34: #{savanet_forward.3} parent=31 // pred_check_branch
              %310 = sbr.rel target = $region36
            $region35: #{savanet_forward.3} parent=31 // pred_region
              // Predicated region
              $region48: #{savanet_forward.3} parent=35 // pred_check
                _
              $region49: #{savanet_forward.3} parent=35 // pred_check_branch
                %331 = sbr.rel (0) target = $region51
              $region50: #{savanet_forward.3} parent=35 // pred_region
                loop: start=0, step=1, limit=1
                $region52: #{savanet_forward.3} parent=50 // loop_pre_header
                  _
                $region53: #{savanet_forward.3} parent=50 // loop_header
                  %s333 = sphi 0, %s337
                  %p334 = scmp.ge.s32.totalorder %s333, 1
                  %s338 = sphi %s306, %s306
                  %s339 = sphi %s302, %s302
                $region54: #{savanet_forward.3} parent=50 // loop_header_branch
                  %336 = sbr.rel (%p334) target = $region58
                $region55: #{savanet_forward.3} parent=50 // loop_body
                  _
                $region56: #{savanet_forward.3} parent=50 // loop_footer
                  %s337 = sadd.s32 1, %s333
                $region57: #{savanet_forward.3} parent=50 // loop_footer_branch
                  %332 = sbr.rel target = $region53
                $region58: #{savanet_forward.3} parent=50 // loop_exit
                  _
                loop: start=0, step=1, limit=1
                $region59: #{savanet_forward.3} parent=50 // loop_pre_header
                  _
                $region60: #{savanet_forward.3} parent=50 // loop_header
                  %s342 = sphi 0, %s346
                  %p343 = scmp.ge.s32.totalorder %s342, 1
                  %s347 = sphi %s306, %s306
                  %s348 = sphi %s302, %s302
                $region61: #{savanet_forward.3} parent=50 // loop_header_branch
                  %345 = sbr.rel (%p343) target = $region65
                $region62: #{savanet_forward.3} parent=50 // loop_body
                  %v349 = vld [vmem:[%s347] sm:$0xf]
                  %350 = vst [vmem:[%s348] sm:$0xf] %v349
                  %v351 = vld [vmem:[%s347 + $0x8] sm:$0xf]
                  %352 = vst [vmem:[%s348 + $0x4] sm:$0xf] %v351
                  %v353 = vld [vmem:[%s347 + $0x10] sm:$0xf]
                  %354 = vst [vmem:[%s348 + $0x8] sm:$0xf] %v353
                  %v355 = vld [vmem:[%s347 + $0x18] sm:$0xf]
                  %356 = vst [vmem:[%s348 + $0xc] sm:$0xf] %v355
                $region63: #{savanet_forward.3} parent=50 // loop_footer
                  %s346 = sadd.s32 1, %s342
                $region64: #{savanet_forward.3} parent=50 // loop_footer_branch
                  %341 = sbr.rel target = $region60
                $region65: #{savanet_forward.3} parent=50 // loop_exit
                  _
              $region51: #{savanet_forward.3} parent=35 // pred_fallthru
                _
            $region36: #{savanet_forward.3} parent=31 // pred_fallthru
              _
            // Predicated region
            $region37: #{savanet_forward.3} parent=31 // pred_check
              _
            $region38: #{savanet_forward.3} parent=31 // pred_check_branch
              %312 = sbr.rel (0) target = $region40
            $region39: #{savanet_forward.3} parent=31 // pred_region
              loop: start=0, step=1, limit=1
              $region41: #{savanet_forward.3} parent=39 // loop_pre_header
                _
              $region42: #{savanet_forward.3} parent=39 // loop_header
                %s315 = sphi 0, %s319
                %p316 = scmp.ge.s32.totalorder %s315, 1
                %s320 = sphi %s306, %s306
                %s321 = sphi %s302, %s302
              $region43: #{savanet_forward.3} parent=39 // loop_header_branch
                %318 = sbr.rel (%p316) target = $region47
              $region44: #{savanet_forward.3} parent=39 // loop_body
                %v322 = vld [vmem:[%s320] sm:$0xf]
                %323 = vst [vmem:[%s321] sm:$0xf] %v322
                %v324 = vld [vmem:[%s320 + $0x8] sm:$0xf]
                %325 = vst [vmem:[%s321 + $0x4] sm:$0xf] %v324
                %v326 = vld [vmem:[%s320 + $0x10] sm:$0xf]
                %327 = vst [vmem:[%s321 + $0x8] sm:$0xf] %v326
                %v328 = vld [vmem:[%s320 + $0x18] sm:$0xf]
                %329 = vst [vmem:[%s321 + $0xc] sm:$0xf] %v328
              $region45: #{savanet_forward.3} parent=39 // loop_footer
                %s319 = sadd.s32 1, %s315
              $region46: #{savanet_forward.3} parent=39 // loop_footer_branch
                %314 = sbr.rel target = $region42
              $region47: #{savanet_forward.3} parent=39 // loop_exit
                _
            $region40: #{savanet_forward.3} parent=31 // pred_fallthru
              _
          $region32: #{savanet_forward.3} parent=27 // pred_fallthru
            _
          %357 = vnop
        $region28: #{savanet_forward.3} parent=23 // pred_fallthru
          _
        // Predicated region
        $region66: #{savanet_forward.3} parent=23 // pred_check
          %p358 = pneg %p83
        $region67: #{savanet_forward.3} parent=23 // pred_check_branch
          %360 = sbr.rel (%p358) target = $region69
        $region68: #{savanet_forward.3} parent=23 // pred_region
          %s361 = smul.u32 16, %s23
          %p362 = scmp.lt.s32.totalorder %s21, 1
          %s363 = scalar_select %p362, %s21, 1
          %p364 = scmp.lt.s32.totalorder %s361, 31
          %s365 = scalar_select %p364, %s361, 31
          %s366 = smul.addr %s363, 32
          %s367 = sadd.s32 %s365, %s366
          %s368 = smul.addr %s367, 4
          %s369 = scalar_lea.vmem %s1, %s368
          %s370 = smul.u32 16, %s23
        $region69: #{savanet_forward.3} parent=23 // pred_fallthru
          _
        // Predicated region
        $region70: #{savanet_forward.3} parent=23 // pred_check
          %p371 = pneg %p111
        $region71: #{savanet_forward.3} parent=23 // pred_check_branch
          %373 = sbr.rel (%p371) target = $region73
        $region72: #{savanet_forward.3} parent=23 // pred_region
          %s374 = sand.u32 %s101, 1
          %s375 = sand.u32 %s101, 1
          %s376 = smul.addr %s375, 16
          %s377 = scalar_lea.vmem [#allocation6], %s376
          %s378 = smul.addr %s21, 8
          %s379 = sadd.s32 %s23, %s378
          %s380 = smul.addr %s379, 4
          %s381 = scalar_lea.vmem %s2, %s380
          // Predicated region
          $region74: #{savanet_forward.3} parent=72 // pred_check
            _
          $region75: #{savanet_forward.3} parent=72 // pred_check_branch
            %383 = sbr.rel (0) target = $region77
          $region76: #{savanet_forward.3} parent=72 // pred_region
            // Predicated region
            $region78: #{savanet_forward.3} parent=76 // pred_check
              _
            $region79: #{savanet_forward.3} parent=76 // pred_check_branch
              %385 = sbr.rel target = $region81
            $region80: #{savanet_forward.3} parent=76 // pred_region
              // Predicated region
              $region93: #{savanet_forward.3} parent=80 // pred_check
                _
              $region94: #{savanet_forward.3} parent=80 // pred_check_branch
                %406 = sbr.rel (0) target = $region96
              $region95: #{savanet_forward.3} parent=80 // pred_region
                loop: start=0, step=1, limit=1
                $region97: #{savanet_forward.3} parent=95 // loop_pre_header
                  _
                $region98: #{savanet_forward.3} parent=95 // loop_header
                  %s408 = sphi 0, %s412
                  %p409 = scmp.ge.s32.totalorder %s408, 1
                  %s413 = sphi %s381, %s381
                  %s414 = sphi %s377, %s377
                $region99: #{savanet_forward.3} parent=95 // loop_header_branch
                  %411 = sbr.rel (%p409) target = $region103
                $region100: #{savanet_forward.3} parent=95 // loop_body
                  _
                $region101: #{savanet_forward.3} parent=95 // loop_footer
                  %s412 = sadd.s32 1, %s408
                $region102: #{savanet_forward.3} parent=95 // loop_footer_branch
                  %407 = sbr.rel target = $region98
                $region103: #{savanet_forward.3} parent=95 // loop_exit
                  _
                loop: start=0, step=1, limit=1
                $region104: #{savanet_forward.3} parent=95 // loop_pre_header
                  _
                $region105: #{savanet_forward.3} parent=95 // loop_header
                  %s417 = sphi 0, %s421
                  %p418 = scmp.ge.s32.totalorder %s417, 1
                  %s422 = sphi %s381, %s381
                  %s423 = sphi %s377, %s377
                $region106: #{savanet_forward.3} parent=95 // loop_header_branch
                  %420 = sbr.rel (%p418) target = $region110
                $region107: #{savanet_forward.3} parent=95 // loop_body
                  %v424 = vld [vmem:[%s422] sm:$0xf]
                  %425 = vst [vmem:[%s423] sm:$0xf] %v424
                  %v426 = vld [vmem:[%s422 + $0x8] sm:$0xf]
                  %427 = vst [vmem:[%s423 + $0x4] sm:$0xf] %v426
                  %v428 = vld [vmem:[%s422 + $0x10] sm:$0xf]
                  %429 = vst [vmem:[%s423 + $0x8] sm:$0xf] %v428
                  %v430 = vld [vmem:[%s422 + $0x18] sm:$0xf]
                  %431 = vst [vmem:[%s423 + $0xc] sm:$0xf] %v430
                $region108: #{savanet_forward.3} parent=95 // loop_footer
                  %s421 = sadd.s32 1, %s417
                $region109: #{savanet_forward.3} parent=95 // loop_footer_branch
                  %416 = sbr.rel target = $region105
                $region110: #{savanet_forward.3} parent=95 // loop_exit
                  _
              $region96: #{savanet_forward.3} parent=80 // pred_fallthru
                _
            $region81: #{savanet_forward.3} parent=76 // pred_fallthru
              _
            // Predicated region
            $region82: #{savanet_forward.3} parent=76 // pred_check
              _
            $region83: #{savanet_forward.3} parent=76 // pred_check_branch
              %387 = sbr.rel (0) target = $region85
            $region84: #{savanet_forward.3} parent=76 // pred_region
              loop: start=0, step=1, limit=1
              $region86: #{savanet_forward.3} parent=84 // loop_pre_header
                _
              $region87: #{savanet_forward.3} parent=84 // loop_header
                %s390 = sphi 0, %s394
                %p391 = scmp.ge.s32.totalorder %s390, 1
                %s395 = sphi %s381, %s381
                %s396 = sphi %s377, %s377
              $region88: #{savanet_forward.3} parent=84 // loop_header_branch
                %393 = sbr.rel (%p391) target = $region92
              $region89: #{savanet_forward.3} parent=84 // loop_body
                %v397 = vld [vmem:[%s395] sm:$0xf]
                %398 = vst [vmem:[%s396] sm:$0xf] %v397
                %v399 = vld [vmem:[%s395 + $0x8] sm:$0xf]
                %400 = vst [vmem:[%s396 + $0x4] sm:$0xf] %v399
                %v401 = vld [vmem:[%s395 + $0x10] sm:$0xf]
                %402 = vst [vmem:[%s396 + $0x8] sm:$0xf] %v401
                %v403 = vld [vmem:[%s395 + $0x18] sm:$0xf]
                %404 = vst [vmem:[%s396 + $0xc] sm:$0xf] %v403
              $region90: #{savanet_forward.3} parent=84 // loop_footer
                %s394 = sadd.s32 1, %s390
              $region91: #{savanet_forward.3} parent=84 // loop_footer_branch
                %389 = sbr.rel target = $region87
              $region92: #{savanet_forward.3} parent=84 // loop_exit
                _
            $region85: #{savanet_forward.3} parent=76 // pred_fallthru
              _
          $region77: #{savanet_forward.3} parent=72 // pred_fallthru
            _
          %432 = vnop
        $region73: #{savanet_forward.3} parent=23 // pred_fallthru
          _
        // Predicated region
        $region111: #{savanet_forward.3} parent=23 // pred_check
          %p433 = pneg %p139
        $region112: #{savanet_forward.3} parent=23 // pred_check_branch
          %435 = sbr.rel (%p433) target = $region114
        $region113: #{savanet_forward.3} parent=23 // pred_region
          %p436 = scmp.lt.s32.totalorder %s21, 1
          %s437 = scalar_select %p436, %s21, 1
          %p438 = scmp.lt.s32.totalorder %s22, 1
          %s439 = scalar_select %p438, %s22, 1
          %s440 = smul.addr %s437, 2
          %s441 = sadd.s32 %s439, %s440
          %s442 = scalar_lea.vmem %s3, %s441
        $region114: #{savanet_forward.3} parent=23 // pred_fallthru
          _
        // Predicated region
        $region115: #{savanet_forward.3} parent=23 // pred_check
          %p443 = pneg %p167
        $region116: #{savanet_forward.3} parent=23 // pred_check_branch
          %445 = sbr.rel (%p443) target = $region118
        $region117: #{savanet_forward.3} parent=23 // pred_region
          %s446 = smul.u32 16, %s23
          %p447 = scmp.lt.s32.totalorder %s21, 1
          %s448 = scalar_select %p447, %s21, 1
          %p449 = scmp.lt.s32.totalorder %s446, 31
          %s450 = scalar_select %p449, %s446, 31
          %s451 = smul.addr %s448, 32
          %s452 = sadd.s32 %s450, %s451
          %s453 = smul.addr %s452, 8
          %s454 = scalar_lea.vmem %s4, %s453
          %s455 = smul.u32 16, %s23
        $region118: #{savanet_forward.3} parent=23 // pred_fallthru
          _
        // Predicated region
        $region119: #{savanet_forward.3} parent=23 // pred_check
          %p456 = pneg %p195
        $region120: #{savanet_forward.3} parent=23 // pred_check_branch
          %458 = sbr.rel (%p456) target = $region122
        $region121: #{savanet_forward.3} parent=23 // pred_region
          %s459 = sand.u32 %s185, 1
          %s460 = sand.u32 %s185, 1
          %s461 = smul.addr %s460, 32
          %s462 = scalar_lea.vmem [#allocation7], %s461
          %s463 = smul.addr %s21, 8
          %s464 = sadd.s32 %s22, %s463
          %s465 = smul.addr %s464, 8
          %s466 = scalar_lea.vmem %s5, %s465
          // Predicated region
          $region123: #{savanet_forward.3} parent=121 // pred_check
            _
          $region124: #{savanet_forward.3} parent=121 // pred_check_branch
            %468 = sbr.rel (0) target = $region126
          $region125: #{savanet_forward.3} parent=121 // pred_region
            // Predicated region
            $region127: #{savanet_forward.3} parent=125 // pred_check
              _
            $region128: #{savanet_forward.3} parent=125 // pred_check_branch
              %470 = sbr.rel (0) target = $region130
            $region129: #{savanet_forward.3} parent=125 // pred_region
              // Predicated region
              $region142: #{savanet_forward.3} parent=129 // pred_check
                _
              $region143: #{savanet_forward.3} parent=129 // pred_check_branch
                %491 = sbr.rel (0) target = $region145
              $region144: #{savanet_forward.3} parent=129 // pred_region
                loop: start=0, step=1, limit=1
                $region146: #{savanet_forward.3} parent=144 // loop_pre_header
                  _
                $region147: #{savanet_forward.3} parent=144 // loop_header
                  %s493 = sphi 0, %s497
                  %p494 = scmp.ge.s32.totalorder %s493, 1
                  %s498 = sphi %s466, %s466
                  %s499 = sphi %s462, %s462
                $region148: #{savanet_forward.3} parent=144 // loop_header_branch
                  %496 = sbr.rel (%p494) target = $region152
                $region149: #{savanet_forward.3} parent=144 // loop_body
                  %v500 = vld [vmem:[%s498] sm:$0xff]
                  %501 = vst [vmem:[%s499] sm:$0xff] %v500
                  %v502 = vld [vmem:[%s498 + $0x10] sm:$0xff]
                  %503 = vst [vmem:[%s499 + $0x8] sm:$0xff] %v502
                  %v504 = vld [vmem:[%s498 + $0x20] sm:$0xff]
                  %505 = vst [vmem:[%s499 + $0x10] sm:$0xff] %v504
                  %v506 = vld [vmem:[%s498 + $0x30] sm:$0xff]
                  %507 = vst [vmem:[%s499 + $0x18] sm:$0xff] %v506
                $region150: #{savanet_forward.3} parent=144 // loop_footer
                  %s497 = sadd.s32 1, %s493
                $region151: #{savanet_forward.3} parent=144 // loop_footer_branch
                  %492 = sbr.rel target = $region147
                $region152: #{savanet_forward.3} parent=144 // loop_exit
                  _
              $region145: #{savanet_forward.3} parent=129 // pred_fallthru
                _
              // Predicated region
              $region153: #{savanet_forward.3} parent=129 // pred_check
                _
              $region154: #{savanet_forward.3} parent=129 // pred_check_branch
                %509 = sbr.rel target = $region156
              $region155: #{savanet_forward.3} parent=129 // pred_region
                _
              $region156: #{savanet_forward.3} parent=129 // pred_fallthru
                _
            $region130: #{savanet_forward.3} parent=125 // pred_fallthru
              _
            // Predicated region
            $region131: #{savanet_forward.3} parent=125 // pred_check
              _
            $region132: #{savanet_forward.3} parent=125 // pred_check_branch
              %472 = sbr.rel target = $region134
            $region133: #{savanet_forward.3} parent=125 // pred_region
              loop: start=0, step=1, limit=1
              $region135: #{savanet_forward.3} parent=133 // loop_pre_header
                _
              $region136: #{savanet_forward.3} parent=133 // loop_header
                %s475 = sphi 0, %s479
                %p476 = scmp.ge.s32.totalorder %s475, 1
                %s480 = sphi %s466, %s466
                %s481 = sphi %s462, %s462
              $region137: #{savanet_forward.3} parent=133 // loop_header_branch
                %478 = sbr.rel (%p476) target = $region141
              $region138: #{savanet_forward.3} parent=133 // loop_body
                %v482 = vld [vmem:[%s480] sm:$0xff]
                %483 = vst [vmem:[%s481] sm:$0xff] %v482
                %v484 = vld [vmem:[%s480 + $0x10] sm:$0xff]
                %485 = vst [vmem:[%s481 + $0x8] sm:$0xff] %v484
                %v486 = vld [vmem:[%s480 + $0x20] sm:$0xff]
                %487 = vst [vmem:[%s481 + $0x10] sm:$0xff] %v486
                %v488 = vld [vmem:[%s480 + $0x30] sm:$0xff]
                %489 = vst [vmem:[%s481 + $0x18] sm:$0xff] %v488
              $region139: #{savanet_forward.3} parent=133 // loop_footer
                %s479 = sadd.s32 1, %s475
              $region140: #{savanet_forward.3} parent=133 // loop_footer_branch
                %474 = sbr.rel target = $region136
              $region141: #{savanet_forward.3} parent=133 // loop_exit
                _
            $region134: #{savanet_forward.3} parent=125 // pred_fallthru
              _
          $region126: #{savanet_forward.3} parent=121 // pred_fallthru
            _
          %510 = vnop
        $region122: #{savanet_forward.3} parent=23 // pred_fallthru
          _
      $region24: #{savanet_forward.3} parent=5 // pred_fallthru
        _
      %p511 = scmp.le.s32.totalorder 1, %s14
      %p512 = scmp.lt.s32.totalorder %s14, 9
      %p513 = pnand %p511, %p512
      %p514 = pneg %p513
      // Predicated region
      $region157: #{savanet_forward.3} parent=5 // pred_check
        _
      $region158: #{savanet_forward.3} parent=5 // pred_check_branch
        %516 = sbr.rel (%p513) target = $region160
      $region159: #{savanet_forward.3} parent=5 // pred_region
        %s517 = ssub.s32 %s14, 1
        %s518 = sand.u32 %s48, 1
        %s519 = sand.u32 %s48, 1
        %s520 = smul.addr %s519, 16
        %s521 = scalar_lea.vmem [#allocation5], %s520
        // Predicated region
        $region161: #{savanet_forward.3} parent=159 // pred_check
          %p522 = pneg %p61
        $region162: #{savanet_forward.3} parent=159 // pred_check_branch
          %524 = sbr.rel (%p522) target = $region164
        $region163: #{savanet_forward.3} parent=159 // pred_region
          _
        $region164: #{savanet_forward.3} parent=159 // pred_fallthru
          _
        %s525 = sand.u32 %s104, 1
        %s526 = sand.u32 %s104, 1
        %s527 = smul.addr %s526, 16
        %s528 = scalar_lea.vmem [#allocation6], %s527
        // Predicated region
        $region165: #{savanet_forward.3} parent=159 // pred_check
          %p529 = pneg %p117
        $region166: #{savanet_forward.3} parent=159 // pred_check_branch
          %531 = sbr.rel (%p529) target = $region168
        $region167: #{savanet_forward.3} parent=159 // pred_region
          _
        $region168: #{savanet_forward.3} parent=159 // pred_fallthru
          _
        %s532 = sand.u32 %s188, 1
        %s533 = sand.u32 %s188, 1
        %s534 = smul.addr %s533, 32
        %s535 = scalar_lea.vmem [#allocation7], %s534
        // Predicated region
        $region169: #{savanet_forward.3} parent=159 // pred_check
          %p536 = pneg %p201
        $region170: #{savanet_forward.3} parent=159 // pred_check_branch
          %538 = sbr.rel (%p536) target = $region172
        $region171: #{savanet_forward.3} parent=159 // pred_region
          _
        $region172: #{savanet_forward.3} parent=159 // pred_fallthru
          _
        %s539 = sand.u32 %s48, 1
        %s540 = sand.u32 %s48, 1
        %s541 = smul.addr %s540, 16
        %s542 = scalar_lea.vmem [#allocation5], %s541
        %p543 = pneg %p61
        %p544 = pneg %p58
        %s545 = smul.u32 16, %s26
        %p546 = scmp.lt.s32.totalorder %s24, 1
        %s547 = scalar_select %p546, %s24, 1
        %p548 = scmp.lt.s32.totalorder %s545, 31
        %s549 = scalar_select %p548, %s545, 31
        %s550 = smul.addr %s547, 32
        %s551 = sadd.s32 %s549, %s550
        %s552 = smul.addr %s551, 4
        %s553 = scalar_lea.vmem %s1, %s552
        %p554 = pneg %p89
        %p555 = pneg %p86
        %s556 = sand.u32 %s104, 1
        %s557 = sand.u32 %s104, 1
        %s558 = smul.addr %s557, 16
        %s559 = scalar_lea.vmem [#allocation6], %s558
        %p560 = pneg %p117
        %p561 = pneg %p114
        %p562 = scmp.lt.s32.totalorder %s24, 1
        %s563 = scalar_select %p562, %s24, 1
        %p564 = scmp.lt.s32.totalorder %s25, 1
        %s565 = scalar_select %p564, %s25, 1
        %s566 = smul.addr %s563, 2
        %s567 = sadd.s32 %s565, %s566
        %s568 = scalar_lea.vmem %s3, %s567
        %p569 = pneg %p145
        %p570 = pneg %p142
        %s571 = smul.u32 16, %s26
        %p572 = scmp.lt.s32.totalorder %s24, 1
        %s573 = scalar_select %p572, %s24, 1
        %p574 = scmp.lt.s32.totalorder %s571, 31
        %s575 = scalar_select %p574, %s571, 31
        %s576 = smul.addr %s573, 32
        %s577 = sadd.s32 %s575, %s576
        %s578 = smul.addr %s577, 8
        %s579 = scalar_lea.vmem %s4, %s578
        %p580 = pneg %p173
        %p581 = pneg %p170
        %s582 = sand.u32 %s188, 1
        %s583 = sand.u32 %s188, 1
        %s584 = smul.addr %s583, 32
        %s585 = scalar_lea.vmem [#allocation7], %s584
        %p586 = pneg %p201
        %p587 = pneg %p198
        %p588 = pneg %p222
        %p589 = pneg %p219
        %p590 = pneg %p243
        %p591 = pneg %p240
        %p592 = pneg %p271
        %p593 = pneg %p268
        %s594 = sand.u32 %s258, 1
        %s595 = sand.u32 %s258, 1
        %s596 = smul.addr %s595, 32
        %s597 = scalar_lea.vmem [#allocation8], %s596
        %s598 = smul.u32 16, %s26
        %p599 = scmp.lt.s32.totalorder %s24, 1
        %s600 = scalar_select %p599, %s24, 1
        %p601 = scmp.lt.s32.totalorder %s598, 31
        %s602 = scalar_select %p601, %s598, 31
        %s603 = smul.addr %s600, 32
        %s604 = sadd.s32 %s602, %s603
        %s605 = smul.addr %s604, 4
        %s606 = scalar_lea.vmem %s1, %s605
        %s607 = smul.u32 16, %s26
        %p608 = scmp.lt.s32.totalorder %s24, 1
        %s609 = scalar_select %p608, %s24, 1
        %p610 = scmp.lt.s32.totalorder %s25, 1
        %s611 = scalar_select %p610, %s25, 1
        %s612 = smul.addr %s609, 2
        %s613 = sadd.s32 %s611, %s612
        %s614 = scalar_lea.vmem %s3, %s613
        %s615 = smul.u32 16, %s26
        %p616 = scmp.lt.s32.totalorder %s24, 1
        %s617 = scalar_select %p616, %s24, 1
        %p618 = scmp.lt.s32.totalorder %s615, 31
        %s619 = scalar_select %p618, %s615, 31
        %s620 = smul.addr %s617, 32
        %s621 = sadd.s32 %s619, %s620
        %s622 = smul.addr %s621, 8
        %s623 = scalar_lea.vmem %s4, %s622
        %s624 = smul.u32 16, %s26
        %p626 = scmp.eq.s32.totalorder %s26, 0
        // Predicated region
        $region173: #{savanet_forward.3} parent=159 // pred_check
          %p627 = pneg %p626
        $region174: #{savanet_forward.3} parent=159 // pred_check_branch
          %629 = sbr.rel (%p627) target = $region176
        $region175: #{savanet_forward.3} parent=159 // pred_region
          %630 = vst [vmem:[#allocation2] sm:$0x1] -inf
          %631 = vst [vmem:[#allocation3] sm:$0x1] 0.0
          %632 = vst [vmem:[#allocation4] sm:$0xff] 0.0
          %633 = vst [vmem:[#allocation4 + $0x8] sm:$0xff] 0.0
          %634 = vst [vmem:[#allocation4 + $0x10] sm:$0xff] 0.0
          %635 = vst [vmem:[#allocation4 + $0x18] sm:$0xff] 0.0
        $region176: #{savanet_forward.3} parent=159 // pred_fallthru
          _
        %v636 = vld [vmem:[%s606] sm:$0xf]
        %v637 = vld [vmem:[%s606 + $0x4] sm:$0xf]
        %v638 = vld [vmem:[%s606 + $0x8] sm:$0xf]
        %v639 = vld [vmem:[%s606 + $0xc] sm:$0xf]
        %v640 = vld [vmem:[%s606 + $0x10] sm:$0xf]
        %v641 = vld [vmem:[%s606 + $0x14] sm:$0xf]
        %v642 = vld [vmem:[%s606 + $0x18] sm:$0xf]
        %v643 = vld [vmem:[%s606 + $0x1c] sm:$0xf]
        %v644 = vld [vmem:[%s606 + $0x20] sm:$0xf]
        %v645 = vld [vmem:[%s606 + $0x24] sm:$0xf]
        %v646 = vld [vmem:[%s606 + $0x28] sm:$0xf]
        %v647 = vld [vmem:[%s606 + $0x2c] sm:$0xf]
        %v648 = vld [vmem:[%s606 + $0x30] sm:$0xf]
        %v649 = vld [vmem:[%s606 + $0x34] sm:$0xf]
        %v650 = vld [vmem:[%s606 + $0x38] sm:$0xf]
        %v651 = vld [vmem:[%s606 + $0x3c] sm:$0xf]
        %v652 = vld [vmem:[%s521] sm:$0xf]
        %v653 = vld [vmem:[%s521 + $0x4] sm:$0xf]
        %v654 = vld [vmem:[%s521 + $0x8] sm:$0xf]
        %v655 = vld [vmem:[%s521 + $0xc] sm:$0xf]
        %v672 = vunpack.c.l.b16 %v636
        %v673 = vunpack.c.l.b16 %v637
        %v674 = vunpack.c.l.b16 %v638
        %v675 = vunpack.c.l.b16 %v639
        %v676 = vunpack.c.l.b16 %v640
        %v677 = vunpack.c.l.b16 %v641
        %v678 = vunpack.c.l.b16 %v642
        %v679 = vunpack.c.l.b16 %v643
        %v680 = vunpack.c.l.b16 %v644
        %v681 = vunpack.c.l.b16 %v645
        %v682 = vunpack.c.l.b16 %v646
        %v683 = vunpack.c.l.b16 %v647
        %v684 = vunpack.c.l.b16 %v648
        %v685 = vunpack.c.l.b16 %v649
        %v686 = vunpack.c.l.b16 %v650
        %v687 = vunpack.c.l.b16 %v651
        %v688 = vpack.c.b16 %v673, %v672
        %v689 = vpack.c.b16 %v675, %v674
        %v690 = vpack.c.b16 %v677, %v676
        %v691 = vpack.c.b16 %v679, %v678
        %v692 = vpack.c.b16 %v681, %v680
        %v693 = vpack.c.b16 %v683, %v682
        %v694 = vpack.c.b16 %v685, %v684
        %v695 = vpack.c.b16 %v687, %v686
        %v700 = vunpack.c.l.b16 %v652
        %v701 = vunpack.c.l.b16 %v653
        %v702 = vunpack.c.l.b16 %v654
        %v703 = vunpack.c.l.b16 %v655
        %v704 = vpack.c.b16 %v701, %v700
        %v705 = vpack.c.b16 %v703, %v702
        %vm708 = vcmask 261120
        %v710 = vsel %vm708, %v688, 0
        %v713 = vsel %vm708, %v689, 0
        %v716 = vsel %vm708, %v690, 0
        %v719 = vsel %vm708, %v691, 0
        %v722 = vsel %vm708, %v692, 0
        %v725 = vsel %vm708, %v693, 0
        %v728 = vsel %vm708, %v694, 0
        %v731 = vsel %vm708, %v695, 0
        %733 = vmatprep.subr.bf16.mxu0 0
        %734 = vmatpush1.bf16.msra.mxu0 %v704
        %735 = vmatprep.subr.bf16.mxu0 0
        %736 = vmatpush1.bf16.msra.mxu0 %v705
        %737 = vmatprep.subr.bf16.mxu0 0
        %738 = vmatpush1.bf16.msra.mxu0 0
        %739 = vmatprep.subr.bf16.mxu0 0
        %740 = vmatpush1.bf16.msra.mxu0 0
        %741 = vmatprep.subr.bf16.mxu0 0
        %742 = vmatpush1.bf16.msra.mxu0 0
        %743 = vmatprep.subr.bf16.mxu0 0
        %744 = vmatpush1.bf16.msra.mxu0 0
        %745 = vmatprep.subr.bf16.mxu0 0
        %746 = vmatpush1.bf16.msra.mxu0 0
        %747 = vmatprep.subr.bf16.mxu0 0
        %748 = vmatpush1.bf16.msra.mxu0 0
        %749 = vmatprep.subr.bf16.mxu0 0
        %750 = vmatpush1.bf16.msra.mxu0 0
        %751 = vmatprep.subr.bf16.mxu0 0
        %752 = vmatpush1.bf16.msra.mxu0 0
        %753 = vmatprep.subr.bf16.mxu0 0
        %754 = vmatpush1.bf16.msra.mxu0 0
        %755 = vmatprep.subr.bf16.mxu0 0
        %756 = vmatpush1.bf16.msra.mxu0 0
        %757 = vmatprep.subr.bf16.mxu0 0
        %758 = vmatpush1.bf16.msra.mxu0 0
        %759 = vmatprep.subr.bf16.mxu0 0
        %760 = vmatpush1.bf16.msra.mxu0 0
        %761 = vmatprep.subr.bf16.mxu0 0
        %762 = vmatpush1.bf16.msra.mxu0 0
        %763 = vmatprep.subr.bf16.mxu0 0
        %764 = vmatpush1.bf16.msra.mxu0 0
        %765 = vmatprep.mubr.bf16.mxu0 0
        %766 = vmatmul.mubr.bf16.gmra.mrb[0].mxu0 %v710
        %v767 = vpop.f32.mrb[0].mxu0
        %v768 = vadd.f32 0.0, %v767
        %v769 = vpop.f32.mrb[0].mxu0
        %v770 = vpop.f32.mrb[0].mxu0
        %v771 = vadd.f32 0.0, %v770
        %v772 = vpop.f32.mrb[0].mxu0
        %773 = vmatprep.mubr.bf16.mxu0 0
        %774 = vmatmul.mubr.bf16.gmra.mrb[0].mxu0 %v713
        %v775 = vpop.f32.mrb[0].mxu0
        %v776 = vadd.f32 0.0, %v775
        %v777 = vpop.f32.mrb[0].mxu0
        %v778 = vpop.f32.mrb[0].mxu0
        %v779 = vadd.f32 0.0, %v778
        %v780 = vpop.f32.mrb[0].mxu0
        %781 = vmatprep.mubr.bf16.mxu0 0
        %782 = vmatmul.mubr.bf16.gmra.mrb[0].mxu0 %v716
        %v783 = vpop.f32.mrb[0].mxu0
        %v784 = vadd.f32 0.0, %v783
        %v785 = vpop.f32.mrb[0].mxu0
        %v786 = vpop.f32.mrb[0].mxu0
        %v787 = vadd.f32 0.0, %v786
        %v788 = vpop.f32.mrb[0].mxu0
        %789 = vmatprep.mubr.bf16.mxu0 0
        %790 = vmatmul.mubr.bf16.gmra.mrb[0].mxu0 %v719
        %v791 = vpop.f32.mrb[0].mxu0
        %v792 = vadd.f32 0.0, %v791
        %v793 = vpop.f32.mrb[0].mxu0
        %v794 = vpop.f32.mrb[0].mxu0
        %v795 = vadd.f32 0.0, %v794
        %v796 = vpop.f32.mrb[0].mxu0
        %797 = vmatprep.mubr.bf16.mxu0 0
        %798 = vmatmul.mubr.bf16.gmra.mrb[0].mxu0 %v722
        %v799 = vpop.f32.mrb[0].mxu0
        %v800 = vadd.f32 0.0, %v799
        %v801 = vpop.f32.mrb[0].mxu0
        %v802 = vpop.f32.mrb[0].mxu0
        %v803 = vadd.f32 0.0, %v802
        %v804 = vpop.f32.mrb[0].mxu0
        %805 = vmatprep.mubr.bf16.mxu0 0
        %806 = vmatmul.mubr.bf16.gmra.mrb[0].mxu0 %v725
        %v807 = vpop.f32.mrb[0].mxu0
        %v808 = vadd.f32 0.0, %v807
        %v809 = vpop.f32.mrb[0].mxu0
        %v810 = vpop.f32.mrb[0].mxu0
        %v811 = vadd.f32 0.0, %v810
        %v812 = vpop.f32.mrb[0].mxu0
        %813 = vmatprep.mubr.bf16.mxu0 0
        %814 = vmatmul.mubr.bf16.gmra.mrb[0].mxu0 %v728
        %v815 = vpop.f32.mrb[0].mxu0
        %v816 = vadd.f32 0.0, %v815
        %v817 = vpop.f32.mrb[0].mxu0
        %v818 = vpop.f32.mrb[0].mxu0
        %v819 = vadd.f32 0.0, %v818
        %v820 = vpop.f32.mrb[0].mxu0
        %821 = vmatprep.mubr.bf16.mxu0 0
        %822 = vmatmul.mubr.bf16.gmra.mrb[0].mxu0 %v731
        %v823 = vpop.f32.mrb[0].mxu0
        %v824 = vadd.f32 0.0, %v823
        %v825 = vpop.f32.mrb[0].mxu0
        %v826 = vpop.f32.mrb[0].mxu0
        %v827 = vadd.f32 0.0, %v826
        %v828 = vpop.f32.mrb[0].mxu0
        %829 = vdwg.mxu0
        %v830 = vld [vmem:[#allocation2] sm:$0x1]
        %v831 = vmax.f32 %v768, %v784
        %v832 = vmax.f32 %v771, %v787
        %v833 = vmax.f32 %v776, %v792
        %v834 = vmax.f32 %v779, %v795
        %v835 = vmax.f32 %v831, %v800
        %v836 = vmax.f32 %v832, %v803
        %v837 = vmax.f32 %v833, %v808
        %v838 = vmax.f32 %v834, %v811
        %v839 = vmax.f32 %v835, %v816
        %v840 = vmax.f32 %v836, %v819
        %v841 = vmax.f32 %v837, %v824
        %v842 = vmax.f32 %v838, %v827
        %v843 = vmax.f32 %v839, %v840
        %v844 = vmax.f32 %v841, %v842
        %v845 = vmax.f32 %v843, %v844
        %v846 = vrot.slane %v845, 4
        %v847 = vmax.f32 %v845, %v846
        %v848 = vrot.slane %v847, 2
        %v849 = vmax.f32 %v847, %v848
        %v850 = vrot.slane %v849, 1
        %v851 = vmax.f32 %v849, %v850
        %v852 = vmax.f32 %v830, %v851
        %v853 = vsub.f32 %v830, %v852
        %v854 = vmul.f32 %v853, 1.442695
        %v855 = vpow.pop %v854
        %v856 = vld [vmem:[%s623] sm:$0xff]
        %v857 = vld [vmem:[%s623 + $0x8] sm:$0xff]
        %v858 = vld [vmem:[%s623 + $0x10] sm:$0xff]
        %v859 = vld [vmem:[%s623 + $0x18] sm:$0xff]
        %v860 = vld [vmem:[%s623 + $0x20] sm:$0xff]
        %v861 = vld [vmem:[%s623 + $0x28] sm:$0xff]
        %v862 = vld [vmem:[%s623 + $0x30] sm:$0xff]
        %v863 = vld [vmem:[%s623 + $0x38] sm:$0xff]
        %v864 = vld [vmem:[%s623 + $0x40] sm:$0xff]
        %v865 = vld [vmem:[%s623 + $0x48] sm:$0xff]
        %v866 = vld [vmem:[%s623 + $0x50] sm:$0xff]
        %v867 = vld [vmem:[%s623 + $0x58] sm:$0xff]
        %v868 = vld [vmem:[%s623 + $0x60] sm:$0xff]
        %v869 = vld [vmem:[%s623 + $0x68] sm:$0xff]
        %v870 = vld [vmem:[%s623 + $0x70] sm:$0xff]
        %v871 = vld [vmem:[%s623 + $0x78] sm:$0xff]
        %v872 = vld [vmem:[%s614] sm:$0x1]
        %874 = vset.pattern.permute.xlu0 0
        %875 = vperm.xlu0 %874, %v856
        %v876 = vpop.permute.xlu0 %875
        %879 = vset.pattern.permute.xlu0 0
        %880 = vperm.xlu0 %879, %v857
        %v881 = vpop.permute.xlu0 %880
        %884 = vset.pattern.permute.xlu0 0
        %885 = vperm.xlu0 %884, %v858
        %v886 = vpop.permute.xlu0 %885
        %889 = vset.pattern.permute.xlu0 0
        %890 = vperm.xlu0 %889, %v859
        %v891 = vpop.permute.xlu0 %890
        %894 = vset.pattern.permute.xlu0 0
        %895 = vperm.xlu0 %894, %v860
        %v896 = vpop.permute.xlu0 %895
        %899 = vset.pattern.permute.xlu0 0
        %900 = vperm.xlu0 %899, %v861
        %v901 = vpop.permute.xlu0 %900
        %904 = vset.pattern.permute.xlu0 0
        %905 = vperm.xlu0 %904, %v862
        %v906 = vpop.permute.xlu0 %905
        %909 = vset.pattern.permute.xlu0 0
        %910 = vperm.xlu0 %909, %v863
        %v911 = vpop.permute.xlu0 %910
        %914 = vset.pattern.permute.xlu0 0
        %915 = vperm.xlu0 %914, %v864
        %v916 = vpop.permute.xlu0 %915
        %919 = vset.pattern.permute.xlu0 0
        %920 = vperm.xlu0 %919, %v865
        %v921 = vpop.permute.xlu0 %920
        %924 = vset.pattern.permute.xlu0 0
        %925 = vperm.xlu0 %924, %v866
        %v926 = vpop.permute.xlu0 %925
        %929 = vset.pattern.permute.xlu0 0
        %930 = vperm.xlu0 %929, %v867
        %v931 = vpop.permute.xlu0 %930
        %934 = vset.pattern.permute.xlu0 0
        %935 = vperm.xlu0 %934, %v868
        %v936 = vpop.permute.xlu0 %935
        %939 = vset.pattern.permute.xlu0 0
        %940 = vperm.xlu0 %939, %v869
        %v941 = vpop.permute.xlu0 %940
        %944 = vset.pattern.permute.xlu0 0
        %945 = vperm.xlu0 %944, %v870
        %v946 = vpop.permute.xlu0 %945
        %949 = vset.pattern.permute.xlu0 0
        %950 = vperm.xlu0 %949, %v871
        %v951 = vpop.permute.xlu0 %950
        %v954 = vlaneseq
        %v955 = vshrl.u32 %v954, 7
        %v956 = vsub.s32 0, %v955
        %v957 = vrot.slane %v872, %v956
        %vm959 = vcmp.eq.f32.partialorder %v876, %v957
        %vm960 = vcmp.eq.f32.partialorder %v881, %v957
        %vm961 = vcmp.eq.f32.partialorder %v886, %v957
        %vm962 = vcmp.eq.f32.partialorder %v891, %v957
        %vm963 = vcmp.eq.f32.partialorder %v896, %v957
        %vm964 = vcmp.eq.f32.partialorder %v901, %v957
        %vm965 = vcmp.eq.f32.partialorder %v906, %v957
        %vm966 = vcmp.eq.f32.partialorder %v911, %v957
        %vm967 = vcmp.eq.f32.partialorder %v916, %v957
        %vm968 = vcmp.eq.f32.partialorder %v921, %v957
        %vm969 = vcmp.eq.f32.partialorder %v926, %v957
        %vm970 = vcmp.eq.f32.partialorder %v931, %v957
        %vm971 = vcmp.eq.f32.partialorder %v936, %v957
        %vm972 = vcmp.eq.f32.partialorder %v941, %v957
        %vm973 = vcmp.eq.f32.partialorder %v946, %v957
        %vm974 = vcmp.eq.f32.partialorder %v951, %v957
        %v976 = vlaneseq
        %v977 = vshrl.u32 %v976, 7
        %v978 = vsub.s32 0, %v977
        %v979 = vrot.slane %v852, %v978
        %v981 = vsub.f32 %v768, %v979
        %v982 = vsub.f32 %v771, %v979
        %v983 = vsub.f32 %v776, %v979
        %v984 = vsub.f32 %v779, %v979
        %v985 = vsub.f32 %v784, %v979
        %v986 = vsub.f32 %v787, %v979
        %v987 = vsub.f32 %v792, %v979
        %v988 = vsub.f32 %v795, %v979
        %v989 = vsub.f32 %v800, %v979
        %v990 = vsub.f32 %v803, %v979
        %v991 = vsub.f32 %v808, %v979
        %v992 = vsub.f32 %v811, %v979
        %v993 = vsub.f32 %v816, %v979
        %v994 = vsub.f32 %v819, %v979
        %v995 = vsub.f32 %v824, %v979
        %v996 = vsub.f32 %v827, %v979
        %v997 = vmul.f32 %v981, 1.442695
        %v998 = vpow.pop %v997
        %v999 = vmul.f32 %v982, 1.442695
        %v1000 = vpow.pop %v999
        %v1001 = vmul.f32 %v983, 1.442695
        %v1002 = vpow.pop %v1001
        %v1003 = vmul.f32 %v984, 1.442695
        %v1004 = vpow.pop %v1003
        %v1005 = vmul.f32 %v985, 1.442695
        %v1006 = vpow.pop %v1005
        %v1007 = vmul.f32 %v986, 1.442695
        %v1008 = vpow.pop %v1007
        %v1009 = vmul.f32 %v987, 1.442695
        %v1010 = vpow.pop %v1009
        %v1011 = vmul.f32 %v988, 1.442695
        %v1012 = vpow.pop %v1011
        %v1013 = vmul.f32 %v989, 1.442695
        %v1014 = vpow.pop %v1013
        %v1015 = vmul.f32 %v990, 1.442695
        %v1016 = vpow.pop %v1015
        %v1017 = vmul.f32 %v991, 1.442695
        %v1018 = vpow.pop %v1017
        %v1019 = vmul.f32 %v992, 1.442695
        %v1020 = vpow.pop %v1019
        %v1021 = vmul.f32 %v993, 1.442695
        %v1022 = vpow.pop %v1021
        %v1023 = vmul.f32 %v994, 1.442695
        %v1024 = vpow.pop %v1023
        %v1025 = vmul.f32 %v995, 1.442695
        %v1026 = vpow.pop %v1025
        %v1027 = vmul.f32 %v996, 1.442695
        %v1028 = vpow.pop %v1027
        %v1029 = vsel %vm959, %v998, 0.0
        %v1030 = vsel %vm960, %v1000, 0.0
        %v1031 = vsel %vm961, %v1002, 0.0
        %v1032 = vsel %vm962, %v1004, 0.0
        %v1033 = vsel %vm963, %v1006, 0.0
        %v1034 = vsel %vm964, %v1008, 0.0
        %v1035 = vsel %vm965, %v1010, 0.0
        %v1036 = vsel %vm966, %v1012, 0.0
        %v1037 = vsel %vm967, %v1014, 0.0
        %v1038 = vsel %vm968, %v1016, 0.0
        %v1039 = vsel %vm969, %v1018, 0.0
        %v1040 = vsel %vm970, %v1020, 0.0
        %v1041 = vsel %vm971, %v1022, 0.0
        %v1042 = vsel %vm972, %v1024, 0.0
        %v1043 = vsel %vm973, %v1026, 0.0
        %v1044 = vsel %vm974, %v1028, 0.0
        %v1045 = vld [vmem:[#allocation3] sm:$0x1]
        %v1046 = vmul.f32 %v855, %v1045
        %v1047 = vadd.f32 %v1029, %v1030
        %v1048 = vadd.f32 %v1047, %v1031
        %v1049 = vadd.f32 %v1048, %v1032
        %v1050 = vadd.f32 %v1049, %v1033
        %v1051 = vadd.f32 %v1050, %v1034
        %v1052 = vadd.f32 %v1051, %v1035
        %v1053 = vadd.f32 %v1052, %v1036
        %v1054 = vadd.f32 %v1053, %v1037
        %v1055 = vadd.f32 %v1054, %v1038
        %v1056 = vadd.f32 %v1055, %v1039
        %v1057 = vadd.f32 %v1056, %v1040
        %v1058 = vadd.f32 %v1057, %v1041
        %v1059 = vadd.f32 %v1058, %v1042
        %v1060 = vadd.f32 %v1059, %v1043
        %v1061 = vadd.f32 %v1060, %v1044
        %v1062 = vrot.slane %v1061, 4
        %v1063 = vadd.f32 %v1061, %v1062
        %v1064 = vrot.slane %v1063, 2
        %v1065 = vadd.f32 %v1063, %v1064
        %v1066 = vrot.slane %v1065, 1
        %v1067 = vadd.f32 %v1065, %v1066
        %v1068 = vadd.f32 %v1046, %v1067
        %1069 = vst [vmem:[#allocation3] sm:$0x1] %v1068
        %v1070 = vld [vmem:[#allocation4] sm:$0xff]
        %v1071 = vld [vmem:[#allocation4 + $0x8] sm:$0xff]
        %v1072 = vld [vmem:[#allocation4 + $0x10] sm:$0xff]
        %v1073 = vld [vmem:[#allocation4 + $0x18] sm:$0xff]
        %v1075 = vlaneseq
        %v1076 = vshrl.u32 %v1075, 7
        %v1077 = vsub.s32 0, %v1076
        %v1078 = vrot.slane %v855, %v1077
        %v1080 = vmul.f32 %v1078, %v1070
        %v1081 = vmul.f32 %v1078, %v1071
        %v1082 = vmul.f32 %v1078, %v1072
        %v1083 = vmul.f32 %v1078, %v1073
        %v1084 = vld [vmem:[%s528] sm:$0xf]
        %v1085 = vld [vmem:[%s528 + $0x4] sm:$0xf]
        %v1086 = vld [vmem:[%s528 + $0x8] sm:$0xf]
        %v1087 = vld [vmem:[%s528 + $0xc] sm:$0xf]
        %v1088 = vpack.c.bf16 %v1030, %v1029
        %v1089 = vpack.c.bf16 %v1032, %v1031
        %v1090 = vpack.c.bf16 %v1034, %v1033
        %v1091 = vpack.c.bf16 %v1036, %v1035
        %v1092 = vpack.c.bf16 %v1038, %v1037
        %v1093 = vpack.c.bf16 %v1040, %v1039
        %v1094 = vpack.c.bf16 %v1042, %v1041
        %v1095 = vpack.c.bf16 %v1044, %v1043
        %v1100 = vunpack.c.l.b16 %v1084
        %v1101 = vunpack.c.l.b16 %v1085
        %v1102 = vunpack.c.l.b16 %v1086
        %v1103 = vunpack.c.l.b16 %v1087
        %v1104 = vpack.c.b16 %v1101, %v1100
        %v1105 = vpack.c.b16 %v1103, %v1102
        %1108 = vmatprep.subr.bf16.mxu0 0
        %1109 = vmatpush1.bf16.msra.mxu0 %v1088
        %1110 = vmatprep.subr.bf16.mxu0 0
        %1111 = vmatpush1.bf16.msra.mxu0 %v1089
        %1112 = vmatprep.subr.bf16.mxu0 0
        %1113 = vmatpush1.bf16.msra.mxu0 %v1090
        %1114 = vmatprep.subr.bf16.mxu0 0
        %1115 = vmatpush1.bf16.msra.mxu0 %v1091
        %1116 = vmatprep.subr.bf16.mxu0 0
        %1117 = vmatpush1.bf16.msra.mxu0 %v1092
        %1118 = vmatprep.subr.bf16.mxu0 0
        %1119 = vmatpush1.bf16.msra.mxu0 %v1093
        %1120 = vmatprep.subr.bf16.mxu0 0
        %1121 = vmatpush1.bf16.msra.mxu0 %v1094
        %1122 = vmatprep.subr.bf16.mxu0 0
        %1123 = vmatpush1.bf16.msra.mxu0 %v1095
        %1124 = vmatprep.subr.bf16.mxu0 0
        %1125 = vmatpush1.bf16.msra.mxu0 0
        %1126 = vmatprep.subr.bf16.mxu0 0
        %1127 = vmatpush1.bf16.msra.mxu0 0
        %1128 = vmatprep.subr.bf16.mxu0 0
        %1129 = vmatpush1.bf16.msra.mxu0 0
        %1130 = vmatprep.subr.bf16.mxu0 0
        %1131 = vmatpush1.bf16.msra.mxu0 0
        %1132 = vmatprep.subr.bf16.mxu0 0
        %1133 = vmatpush1.bf16.msra.mxu0 0
        %1134 = vmatprep.subr.bf16.mxu0 0
        %1135 = vmatpush1.bf16.msra.mxu0 0
        %1136 = vmatprep.subr.bf16.mxu0 0
        %1137 = vmatpush1.bf16.msra.mxu0 0
        %1138 = vmatprep.subr.bf16.mxu0 0
        %1139 = vmatpush1.bf16.msra.mxu0 0
        %1140 = vmatprep.mubr.bf16.mxu0 0
        %1141 = vmatmul.mubr.bf16.gmra.mrb[0].mxu0 %v1104
        %v1142 = vpop.f32.mrb[0].mxu0
        %v1143 = vadd.f32 0.0, %v1142
        %v1144 = vpop.f32.mrb[0].mxu0
        %v1145 = vpop.f32.mrb[0].mxu0
        %v1146 = vadd.f32 0.0, %v1145
        %v1147 = vpop.f32.mrb[0].mxu0
        %1148 = vmatprep.mubr.bf16.mxu0 0
        %1149 = vmatmul.mubr.bf16.gmra.mrb[0].mxu0 %v1105
        %v1150 = vpop.f32.mrb[0].mxu0
        %v1151 = vadd.f32 0.0, %v1150
        %v1152 = vpop.f32.mrb[0].mxu0
        %v1153 = vpop.f32.mrb[0].mxu0
        %v1154 = vadd.f32 0.0, %v1153
        %v1155 = vpop.f32.mrb[0].mxu0
        %1156 = vdwg.mxu0
        %v1157 = vadd.f32 %v1080, %v1143
        %v1158 = vadd.f32 %v1081, %v1146
        %v1159 = vadd.f32 %v1082, %v1151
        %v1160 = vadd.f32 %v1083, %v1154
        %1161 = vst [vmem:[#allocation4] sm:$0xff] %v1157
        %1162 = vst [vmem:[#allocation4 + $0x8] sm:$0xff] %v1158
        %1163 = vst [vmem:[#allocation4 + $0x10] sm:$0xff] %v1159
        %1164 = vst [vmem:[#allocation4 + $0x18] sm:$0xff] %v1160
        %1165 = vst [vmem:[#allocation2] sm:$0x1] %v852
        %p1166 = scmp.eq.s32.totalorder %s26, 1
        // Predicated region
        $region177: #{savanet_forward.3} parent=159 // pred_check
          %p1167 = pneg %p1166
        $region178: #{savanet_forward.3} parent=159 // pred_check_branch
          %1169 = sbr.rel (%p1167) target = $region180
        $region179: #{savanet_forward.3} parent=159 // pred_region
          %v1170 = vld [vmem:[#allocation3] sm:$0x1]
          %v1171 = vmax.f32 %v1170, 1e-12
          %v1172 = vrcp.pop %v1171
          %v1173 = vld [vmem:[#allocation4] sm:$0xff]
          %v1174 = vld [vmem:[#allocation4 + $0x8] sm:$0xff]
          %v1175 = vld [vmem:[#allocation4 + $0x10] sm:$0xff]
          %v1176 = vld [vmem:[#allocation4 + $0x18] sm:$0xff]
          %v1178 = vlaneseq
          %v1179 = vshrl.u32 %v1178, 7
          %v1180 = vsub.s32 0, %v1179
          %v1181 = vrot.slane %v1172, %v1180
          %v1183 = vmul.f32 %v1173, %v1181
          %v1184 = vmul.f32 %v1174, %v1181
          %v1185 = vmul.f32 %v1175, %v1181
          %v1186 = vmul.f32 %v1176, %v1181
          %v1187 = vpack.c.bf16 %v1184, %v1183
          %v1188 = vpack.c.bf16 %v1186, %v1185
          %v1189 = vld [vmem:[%s535] sm:$0xff]
          %v1190 = vld [vmem:[%s535 + $0x8] sm:$0xff]
          %v1191 = vld [vmem:[%s535 + $0x10] sm:$0xff]
          %v1192 = vld [vmem:[%s535 + $0x18] sm:$0xff]
          %v1193 = vld [vmem:[%s6] sm:$0xf]
          %v1194 = vld [vmem:[%s6 + $0x4] sm:$0xf]
          %v1195 = vld [vmem:[%s6 + $0x8] sm:$0xf]
          %v1196 = vld [vmem:[%s6 + $0xc] sm:$0xf]
          %v1201 = vunpack.c.l.b16 %v1193
          %v1202 = vunpack.c.l.b16 %v1194
          %v1203 = vunpack.c.l.b16 %v1195
          %v1204 = vunpack.c.l.b16 %v1196
          %v1205 = vpack.c.b16 %v1202, %v1201
          %v1206 = vpack.c.b16 %v1204, %v1203
          %v1208 = vsel %vm708, %v1205, 0
          %v1211 = vsel %vm708, %v1206, 0
          %1213 = vmatprep.subr.bf16.mxu0 0
          %1214 = vmatpush1.bf16.msra.mxu0 %v1187
          %1215 = vmatprep.subr.bf16.mxu0 0
          %1216 = vmatpush1.bf16.msra.mxu0 %v1188
          %1217 = vmatprep.subr.bf16.mxu0 0
          %1218 = vmatpush1.bf16.msra.mxu0 0
          %1219 = vmatprep.subr.bf16.mxu0 0
          %1220 = vmatpush1.bf16.msra.mxu0 0
          %1221 = vmatprep.subr.bf16.mxu0 0
          %1222 = vmatpush1.bf16.msra.mxu0 0
          %1223 = vmatprep.subr.bf16.mxu0 0
          %1224 = vmatpush1.bf16.msra.mxu0 0
          %1225 = vmatprep.subr.bf16.mxu0 0
          %1226 = vmatpush1.bf16.msra.mxu0 0
          %1227 = vmatprep.subr.bf16.mxu0 0
          %1228 = vmatpush1.bf16.msra.mxu0 0
          %1229 = vmatprep.subr.bf16.mxu0 0
          %1230 = vmatpush1.bf16.msra.mxu0 0
          %1231 = vmatprep.subr.bf16.mxu0 0
          %1232 = vmatpush1.bf16.msra.mxu0 0
          %1233 = vmatprep.subr.bf16.mxu0 0
          %1234 = vmatpush1.bf16.msra.mxu0 0
          %1235 = vmatprep.subr.bf16.mxu0 0
          %1236 = vmatpush1.bf16.msra.mxu0 0
          %1237 = vmatprep.subr.bf16.mxu0 0
          %1238 = vmatpush1.bf16.msra.mxu0 0
          %1239 = vmatprep.subr.bf16.mxu0 0
          %1240 = vmatpush1.bf16.msra.mxu0 0
          %1241 = vmatprep.subr.bf16.mxu0 0
          %1242 = vmatpush1.bf16.msra.mxu0 0
          %1243 = vmatprep.subr.bf16.mxu0 0
          %1244 = vmatpush1.bf16.msra.mxu0 0
          %1245 = vmatprep.mubr.bf16.mxu0 0
          %1246 = vmatmul.mubr.bf16.gmra.mrb[0].mxu0 %v1208
          %v1247 = vpop.f32.mrb[0].mxu0
          %v1248 = vadd.f32 0.0, %v1247
          %v1249 = vpop.f32.mrb[0].mxu0
          %v1250 = vpop.f32.mrb[0].mxu0
          %v1251 = vadd.f32 0.0, %v1250
          %v1252 = vpop.f32.mrb[0].mxu0
          %1253 = vmatprep.mubr.bf16.mxu0 0
          %1254 = vmatmul.mubr.bf16.gmra.mrb[0].mxu0 %v1211
          %v1255 = vpop.f32.mrb[0].mxu0
          %v1256 = vadd.f32 0.0, %v1255
          %v1257 = vpop.f32.mrb[0].mxu0
          %v1258 = vpop.f32.mrb[0].mxu0
          %v1259 = vadd.f32 0.0, %v1258
          %v1260 = vpop.f32.mrb[0].mxu0
          %1261 = vdwg.mxu0
          %v1262 = vadd.f32 %v1189, %v1248
          %v1263 = vadd.f32 %v1190, %v1251
          %v1264 = vadd.f32 %v1191, %v1256
          %v1265 = vadd.f32 %v1192, %v1259
          %v1266 = vld [vmem:[%s7] sm:$0xff]
          %v1267 = vld [vmem:[%s7 + $0x8] sm:$0xff]
          %v1268 = vld [vmem:[%s7 + $0x10] sm:$0xff]
          %v1269 = vld [vmem:[%s7 + $0x18] sm:$0xff]
          %1271 = vset.pattern.permute.xlu0 0
          %1272 = vperm.xlu0 %1271, %v1266
          %v1273 = vpop.permute.xlu0 %1272
          %1276 = vset.pattern.permute.xlu0 0
          %1277 = vperm.xlu0 %1276, %v1267
          %v1278 = vpop.permute.xlu0 %1277
          %1281 = vset.pattern.permute.xlu0 0
          %1282 = vperm.xlu0 %1281, %v1268
          %v1283 = vpop.permute.xlu0 %1282
          %1286 = vset.pattern.permute.xlu0 0
          %1287 = vperm.xlu0 %1286, %v1269
          %v1288 = vpop.permute.xlu0 %1287
          %v1290 = vadd.f32 %v1262, %v1273
          %v1291 = vadd.f32 %v1263, %v1278
          %v1292 = vadd.f32 %v1264, %v1283
          %v1293 = vadd.f32 %v1265, %v1288
          %1294 = vst [vmem:[%s597] sm:$0xff] %v1290
          %1295 = vst [vmem:[%s597 + $0x8] sm:$0xff] %v1291
          %1296 = vst [vmem:[%s597 + $0x10] sm:$0xff] %v1292
          %1297 = vst [vmem:[%s597 + $0x18] sm:$0xff] %v1293
        $region180: #{savanet_forward.3} parent=159 // pred_fallthru
          _
        %s1298 = sand.u32 %s258, 1
        %s1299 = sand.u32 %s258, 1
        %s1300 = smul.addr %s1299, 32
        %s1301 = scalar_lea.vmem [#allocation8], %s1300
        // Predicated region
        $region181: #{savanet_forward.3} parent=159 // pred_check
          %p1302 = pneg %p268
        $region182: #{savanet_forward.3} parent=159 // pred_check_branch
          %1304 = sbr.rel (%p1302) target = $region184
        $region183: #{savanet_forward.3} parent=159 // pred_region
          %s1305 = smul.addr %s24, 8
          %s1306 = sadd.s32 %s25, %s1305
          %s1307 = smul.addr %s1306, 8
          %s1308 = scalar_lea.vmem %s8, %s1307
          // Predicated region
          $region185: #{savanet_forward.3} parent=183 // pred_check
            _
          $region186: #{savanet_forward.3} parent=183 // pred_check_branch
            %1310 = sbr.rel (0) target = $region188
          $region187: #{savanet_forward.3} parent=183 // pred_region
            // Predicated region
            $region189: #{savanet_forward.3} parent=187 // pred_check
              _
            $region190: #{savanet_forward.3} parent=187 // pred_check_branch
              %1312 = sbr.rel (0) target = $region192
            $region191: #{savanet_forward.3} parent=187 // pred_region
              // Predicated region
              $region204: #{savanet_forward.3} parent=191 // pred_check
                _
              $region205: #{savanet_forward.3} parent=191 // pred_check_branch
                %1333 = sbr.rel (0) target = $region207
              $region206: #{savanet_forward.3} parent=191 // pred_region
                loop: start=0, step=1, limit=1
                $region208: #{savanet_forward.3} parent=206 // loop_pre_header
                  _
                $region209: #{savanet_forward.3} parent=206 // loop_header
                  %s1335 = sphi 0, %s1339
                  %p1336 = scmp.ge.s32.totalorder %s1335, 1
                  %s1340 = sphi %s1301, %s1301
                  %s1341 = sphi %s1308, %s1308
                $region210: #{savanet_forward.3} parent=206 // loop_header_branch
                  %1338 = sbr.rel (%p1336) target = $region214
                $region211: #{savanet_forward.3} parent=206 // loop_body
                  %v1342 = vld [vmem:[%s1340] sm:$0xff]
                  %1343 = vst [vmem:[%s1341] sm:$0xff] %v1342
                  %v1344 = vld [vmem:[%s1340 + $0x8] sm:$0xff]
                  %1345 = vst [vmem:[%s1341 + $0x10] sm:$0xff] %v1344
                  %v1346 = vld [vmem:[%s1340 + $0x10] sm:$0xff]
                  %1347 = vst [vmem:[%s1341 + $0x20] sm:$0xff] %v1346
                  %v1348 = vld [vmem:[%s1340 + $0x18] sm:$0xff]
                  %1349 = vst [vmem:[%s1341 + $0x30] sm:$0xff] %v1348
                $region212: #{savanet_forward.3} parent=206 // loop_footer
                  %s1339 = sadd.s32 1, %s1335
                $region213: #{savanet_forward.3} parent=206 // loop_footer_branch
                  %1334 = sbr.rel target = $region209
                $region214: #{savanet_forward.3} parent=206 // loop_exit
                  _
              $region207: #{savanet_forward.3} parent=191 // pred_fallthru
                _
              // Predicated region
              $region215: #{savanet_forward.3} parent=191 // pred_check
                _
              $region216: #{savanet_forward.3} parent=191 // pred_check_branch
                %1351 = sbr.rel target = $region218
              $region217: #{savanet_forward.3} parent=191 // pred_region
                _
              $region218: #{savanet_forward.3} parent=191 // pred_fallthru
                _
            $region192: #{savanet_forward.3} parent=187 // pred_fallthru
              _
            // Predicated region
            $region193: #{savanet_forward.3} parent=187 // pred_check
              _
            $region194: #{savanet_forward.3} parent=187 // pred_check_branch
              %1314 = sbr.rel target = $region196
            $region195: #{savanet_forward.3} parent=187 // pred_region
              loop: start=0, step=1, limit=1
              $region197: #{savanet_forward.3} parent=195 // loop_pre_header
                _
              $region198: #{savanet_forward.3} parent=195 // loop_header
                %s1317 = sphi 0, %s1321
                %p1318 = scmp.ge.s32.totalorder %s1317, 1
                %s1322 = sphi %s1301, %s1301
                %s1323 = sphi %s1308, %s1308
              $region199: #{savanet_forward.3} parent=195 // loop_header_branch
                %1320 = sbr.rel (%p1318) target = $region203
              $region200: #{savanet_forward.3} parent=195 // loop_body
                %v1324 = vld [vmem:[%s1322] sm:$0xff]
                %1325 = vst [vmem:[%s1323] sm:$0xff] %v1324
                %v1326 = vld [vmem:[%s1322 + $0x8] sm:$0xff]
                %1327 = vst [vmem:[%s1323 + $0x10] sm:$0xff] %v1326
                %v1328 = vld [vmem:[%s1322 + $0x10] sm:$0xff]
                %1329 = vst [vmem:[%s1323 + $0x20] sm:$0xff] %v1328
                %v1330 = vld [vmem:[%s1322 + $0x18] sm:$0xff]
                %1331 = vst [vmem:[%s1323 + $0x30] sm:$0xff] %v1330
              $region201: #{savanet_forward.3} parent=195 // loop_footer
                %s1321 = sadd.s32 1, %s1317
              $region202: #{savanet_forward.3} parent=195 // loop_footer_branch
                %1316 = sbr.rel target = $region198
              $region203: #{savanet_forward.3} parent=195 // loop_exit
                _
            $region196: #{savanet_forward.3} parent=187 // pred_fallthru
              _
          $region188: #{savanet_forward.3} parent=183 // pred_fallthru
            _
          %1352 = vnop
        $region184: #{savanet_forward.3} parent=159 // pred_fallthru
          _
      $region160: #{savanet_forward.3} parent=5 // pred_fallthru
        _
      %p1353 = scmp.le.s32.totalorder 2, %s14
      // Predicated region
      $region219: #{savanet_forward.3} parent=5 // pred_check
        %p1354 = pneg %p1353
      $region220: #{savanet_forward.3} parent=5 // pred_check_branch
        %1356 = sbr.rel (%p1354) target = $region222
      $region221: #{savanet_forward.3} parent=5 // pred_region
        %s1357 = ssub.s32 %s14, 2
        // Predicated region
        $region223: #{savanet_forward.3} parent=221 // pred_check
          %p1358 = pneg %p274
        $region224: #{savanet_forward.3} parent=221 // pred_check_branch
          %1360 = sbr.rel (%p1358) target = $region226
        $region225: #{savanet_forward.3} parent=221 // pred_region
          %s1361 = sand.u32 %s259, 1
          %s1362 = sand.u32 %s259, 1
          %s1363 = smul.addr %s1362, 32
          %s1364 = scalar_lea.vmem [#allocation8], %s1363
        $region226: #{savanet_forward.3} parent=221 // pred_fallthru
          _
      $region222: #{savanet_forward.3} parent=5 // pred_fallthru
        _
    $region6: #{savanet_forward.3} parent=1 // loop_footer
      %s18 = sadd.s32 1, %s14
    $region7: #{savanet_forward.3} parent=1 // loop_footer_branch
      %13 = sbr.rel target = $region3
    $region8: #{savanet_forward.3} parent=1 // loop_exit
      _

</llo_original>
